<compile_context>
chip_gen: v6e
topology: v6e:2x2x1
jax: 0.10.0
libtpu: 0.0.40
codegen_flags: <defaults>
</compile_context>

<pallas_src>
import functools

import jax
import jax.numpy as jnp
import numpy as np
from jax.experimental import pallas as pl
from jax.experimental.pallas import tpu as pltpu

LANE = 128


# ----------------------------------------------------------------------------
# Helpers
# ----------------------------------------------------------------------------
def _round_up(v, m):
    return (v + m - 1) // m * m


@functools.lru_cache(maxsize=None)
def _single_buffering_supported():
    """Probe (once) whether pipeline_mode=pl.Buffered(1) is accepted by this JAX/Mosaic."""
    try:
        def _copy(x_ref, o_ref):
            o_ref[...] = x_ref[...]

        probe = pl.pallas_call(
            _copy,
            out_shape=jax.ShapeDtypeStruct((8, LANE), jnp.float32),
            grid=(1,),
            in_specs=[pl.BlockSpec((8, LANE), lambda i: (0, 0),
                                   pipeline_mode=pl.Buffered(1))],
            out_specs=pl.BlockSpec((8, LANE), lambda i: (0, 0)),
        )
        jax.jit(probe).lower(jnp.zeros((8, LANE), jnp.float32)).compile()
        return True
    except Exception:
        return False


def _vmem_budget_bytes():
    """~75% of physical per-core VMEM (generation-aware) with a conservative fallback."""
    try:
        cap = int(getattr(pltpu.get_tpu_info(), "vmem_capacity_bytes", 64 * 1024 * 1024))
    except Exception:
        cap = 64 * 1024 * 1024
    return (cap * 3) // 4


def _pick_row_tile(H, W, cout_p, acc_budget_bytes):
    """Largest divisor of H whose f32 accumulator tile fits the budget (prefer %8 == 0)."""
    bytes_per_row = W * cout_p * 4
    max_rows = max(1, acc_budget_bytes // bytes_per_row)
    divisors = [d for d in range(1, H + 1) if H % d == 0 and d <= max_rows]  # d=1 always in
    mult8 = [d for d in divisors if d % 8 == 0]
    return max(mult8) if mult8 else max(divisors)


# ----------------------------------------------------------------------------
# Kernel: one (batch, row-tile) per grid step.
#   x_ref : (H+2, W+2, Cin_p)     padded NHWC image of the current batch element
#   w_ref : (3, 3, Cin_p, Cout_p) fused 3x3 weight (HWIO, channel padded, bf16)
#   b_ref : (1, Cout_p)           fused bias (f32)
#   o_ref : (TH, W, Cout_p)       output row tile (compute dtype)
# ----------------------------------------------------------------------------
def repvgg_fused_kernel(x_ref, w_ref, b_ref, o_ref):
    TH, W, Cout = o_ref.shape
    Cin = x_ref.shape[-1]
    row0 = pl.multiple_of(pl.program_id(1) * TH, TH)

    # Accumulator initialized with the fused bias (single broadcast, hoisted).
    acc = jnp.broadcast_to(b_ref[...].astype(jnp.float32), (TH * W, Cout))

    # 3x3 conv as 9 K=Cin matmuls: no im2col concatenate / wide-K slab materialization.
    # ky slicing is on the untiled leading axis (cheap); only the kx=1,2 shifts pay a
    # sublane-offset relayout.
    for ky in range(3):
        rows = x_ref[pl.ds(row0 + ky, TH), :, :]                  # (TH, W+2, Cin)
        for kx in range(3):
            patch = rows[:, kx:kx + W, :].reshape(TH * W, Cin)    # (TH*W, Cin)
            acc = acc + jnp.dot(patch, w_ref[ky, kx, :, :],
                                preferred_element_type=jnp.float32)

    o_ref[...] = jnp.maximum(acc, 0.0).astype(o_ref.dtype).reshape(TH, W, Cout)


# ----------------------------------------------------------------------------
# Wrapper: NCHW in / NCHW out (PyTorch layout); all folding done in JAX glue.
# ----------------------------------------------------------------------------
def repvgg_block_pallas(x_nchw, params, *, compute_dtype=jnp.bfloat16):
    N, C, H, W = x_nchw.shape
    Cout = params["w3"].shape[0]
    assert params["w3"].shape[1] == C, "groups != 1 not supported"
    eps = 1e-5

    def bn_fold(g, b, m, v):
        scale = g / jnp.sqrt(v + eps)
        return scale, b - m * scale

    s3, b3 = bn_fold(*params["bn3"])
    s1, b1 = bn_fold(*params["bn1"])

    # --- RepVGG re-parameterization into a single 3x3 conv + bias (f32) ---
    w3s = params["w3"].astype(jnp.float32) * s3[:, None, None, None]      # (Cout,Cin,3,3)
    w11 = params["w1"].astype(jnp.float32)[:, :, 0, 0] * s1[:, None]      # (Cout,Cin)
    center = w11
    b_fused = b3 + b1
    if Cout == C and "bnid" in params:      # identity branch exists iff Cout==Cin, stride==1
        si, bi = bn_fold(*params["bnid"])
        center = center + jnp.eye(C, dtype=jnp.float32) * si[:, None]
        b_fused = b_fused + bi
    w_fused = w3s.at[:, :, 1, 1].add(center)                              # OIHW
    b_fused = b_fused.astype(jnp.float32)

    # --- channel padding to a multiple of 128 (lane-dense stores, full MXU K/N) ---
    Cin_p = _round_up(C, LANE)
    Cout_p = _round_up(Cout, LANE)

    # fused weight: OIHW -> HWIO -> pad channels, bf16
    w_hwio = jnp.transpose(w_fused, (2, 3, 1, 0))                         # (3,3,Cin,Cout)
    w_k = jnp.pad(w_hwio, ((0, 0), (0, 0), (0, Cin_p - C),
                           (0, Cout_p - Cout))).astype(compute_dtype)
    b_k = jnp.pad(b_fused, (0, Cout_p - Cout)).reshape(1, Cout_p)

    # input: NCHW -> NHWC, one combined pad (1px spatial halo + channel lanes), bf16
    x_nhwc = jnp.transpose(x_nchw, (0, 2, 3, 1))
    x_pad = jnp.pad(x_nhwc, ((0, 0), (1, 1), (1, 1), (0, Cin_p - C))).astype(compute_dtype)

    itemsize = jnp.dtype(compute_dtype).itemsize
    vmem_budget = _vmem_budget_bytes()

    # Row tile: largest divisor of H whose f32 accumulator stays within ~1/12 of VMEM
    # (>= 2 MiB), so 128-MiB parts get 8 MiB tiles and v7x gets ~4 MiB tiles.
    TH = _pick_row_tile(H, W, Cout_p, max(2 * 1024 * 1024, vmem_budget // 12))
    nH = H // TH

    # --- VMEM accounting (generation-aware) + buffering choices ---
    single_buf = _single_buffering_supported()
    in_img_bytes = (H + 2) * (W + 2) * Cin_p * itemsize
    w_bytes = 9 * Cin_p * Cout_p * itemsize
    b_bytes = Cout_p * 4
    out_tile_bytes = TH * W * Cout_p * itemsize
    # single-buffer the whole-image input only when double-buffering it would be expensive
    single_buf_image = single_buf and (2 * in_img_bytes > vmem_budget // 4)

    n_img_buf = 1 if single_buf_image else 2
    n_wb_buf = 1 if single_buf else 2
    live_bytes = (2 * TH * W * Cout_p * 4            # acc + relu temporary (f32)
                  + TH * (W + 2) * Cin_p * itemsize  # rows slab
                  + 2 * TH * W * Cin_p * itemsize)   # patch temporaries
    per_step_bytes = (n_img_buf * in_img_bytes + n_wb_buf * (w_bytes + b_bytes)
                      + 2 * out_tile_bytes + live_bytes)
    if per_step_bytes > vmem_budget:
        raise NotImplementedError(
            f"RepVGG Pallas kernel needs ~{per_step_bytes >> 20} MiB VMEM per grid step but "
            f"only ~{vmem_budget >> 20} MiB is available on this TPU; this layer size needs "
            f"the halo-DMA / Cout-tiling path (see TODO(synk) at top of file).")
    vmem_limit = int(min(vmem_budget,
                         max(32 * 1024 * 1024, per_step_bytes + per_step_bytes // 2)))

    def spec(block_shape, index_map, single):
        if single:
            return pl.BlockSpec(block_shape, index_map, pipeline_mode=pl.Buffered(1))
        return pl.BlockSpec(block_shape, index_map)

    flops = 2 * N * H * W * 9 * Cin_p * Cout_p
    bytes_accessed = (N * in_img_bytes + w_bytes + b_bytes
                      + N * H * W * Cout_p * itemsize)
    cost = pl.CostEstimate(flops=flops, transcendentals=0, bytes_accessed=bytes_accessed)

    out_nhwc = pl.pallas_call(
        repvgg_fused_kernel,
        out_shape=jax.ShapeDtypeStruct((N, H, W, Cout_p), compute_dtype),   # bf16 writeback
        grid=(N, nH),
        in_specs=[
            # whole padded image of batch n; block index independent of j -> DMA'd once per image
            spec((None, H + 2, W + 2, Cin_p), lambda n, j: (n, 0, 0, 0), single_buf_image),
            spec((3, 3, Cin_p, Cout_p), lambda n, j: (0, 0, 0, 0), single_buf),
            spec((1, Cout_p), lambda n, j: (0, 0), single_buf),
        ],
        out_specs=pl.BlockSpec((None, TH, W, Cout_p), lambda n, j: (n, j, 0, 0)),
        compiler_params=pltpu.CompilerParams(
            dimension_semantics=("parallel", "parallel"),
            vmem_limit_bytes=vmem_limit,
        ),
        cost_estimate=cost,
    )(x_pad, w_k, b_k)

    # drop channel padding, back to NCHW, restore caller dtype
    return jnp.transpose(out_nhwc[..., :Cout], (0, 3, 1, 2)).astype(x_nchw.dtype)


# ----------------------------------------------------------------------------
# Pure-JAX reference (mirrors the PyTorch forward, BN in eval mode, full f32).
# ----------------------------------------------------------------------------
def repvgg_block_ref(x, params):
    eps = 1e-5

    def conv(x, w, pad):
        return jax.lax.conv_general_dilated(
            x, w, window_strides=(1, 1), padding=[(pad, pad), (pad, pad)],
            dimension_numbers=("NCHW", "OIHW", "NCHW"))

    def bn(x, g, b, m, v):
        scale = g / jnp.sqrt(v + eps)
        bias = b - m * scale
        return x * scale[None, :, None, None] + bias[None, :, None, None]

    dense = bn(conv(x, params["w3"], 1), *params["bn3"])
    one = bn(conv(x, params["w1"], 0), *params["bn1"])
    ident = bn(x, *params["bnid"])
    return jax.nn.relu(dense + one + ident)


def make_params(key, cin, cout):
    ks = jax.random.split(key, 12)
    return {
        "w3": jax.random.normal(ks[0], (cout, cin, 3, 3), jnp.float32) * 0.1,
        "w1": jax.random.normal(ks[1], (cout, cin, 1, 1), jnp.float32) * 0.1,
        "bn3": (
            1.0 + 0.1 * jax.random.normal(ks[2], (cout,), jnp.float32),
            0.1 * jax.random.normal(ks[3], (cout,), jnp.float32),
            0.1 * jax.random.normal(ks[4], (cout,), jnp.float32),
            0.5 + jnp.abs(jax.random.normal(ks[5], (cout,), jnp.float32)),
        ),
        "bn1": (
            1.0 + 0.1 * jax.random.normal(ks[6], (cout,), jnp.float32),
            0.1 * jax.random.normal(ks[7], (cout,), jnp.float32),
            0.1 * jax.random.normal(ks[8], (cout,), jnp.float32),
            0.5 + jnp.abs(jax.random.normal(ks[9], (cout,), jnp.float32)),
        ),
        "bnid": (
            1.0 + 0.1 * jax.random.normal(ks[10], (cin,), jnp.float32),
            0.1 * jax.random.normal(ks[11], (cin,), jnp.float32),
            0.05 * jnp.ones((cin,), jnp.float32),
            0.8 * jnp.ones((cin,), jnp.float32),
        ),
    }


if __name__ == "__main__":
    key = jax.random.PRNGKey(0)
    kx, kp = jax.random.split(key)

    N, C, H, W = 2, 4, 16, 16        # in_channels == out_channels, stride=1, pad=1
    x = jax.random.normal(kx, (N, C, H, W), jnp.float32)
    params = make_params(kp, C, C)

    out = jax.block_until_ready(repvgg_block_pallas(x, params))
    ref = jax.block_until_ready(repvgg_block_ref(x, params))

    # bf16 matmul inputs + bf16 output store vs full-f32 reference -> relaxed tolerance.
    np.testing.assert_allclose(np.asarray(out), np.asarray(ref), rtol=5e-2, atol=5e-2)
    print("KERNEL_OK")
</pallas_src>

<mosaic_0001>
module attributes {stable_mosaic.version = 11 : i64} {
  func.func @repvgg_fused_kernel(%arg0: i32, %arg1: i32, %arg2: memref<1x18x18x128xbf16, #tpu.memory_space<vmem>>, %arg3: memref<3x3x128x128xbf16, #tpu.memory_space<vmem>>, %arg4: memref<1x128xf32, #tpu.memory_space<vmem>>, %arg5: memref<1x16x16x128xbf16, #tpu.memory_space<vmem>>) attributes {dimension_semantics = [#tpu.dimension_semantics<parallel>, #tpu.dimension_semantics<parallel>], iteration_bounds = array<i64: 2, 1>, scalar_prefetch = 0 : i64, scratch_operands = 0 : i64, tpu.core_type = #tpu.core_type<tc>, window_params = [{transform_indices = @transform_0, window_bounds = array<i64: 1, 18, 18, 128>}, {pipeline_mode = #tpu.pipeline_mode<synchronous>, transform_indices = @transform_1, window_bounds = array<i64: 3, 3, 128, 128>}, {pipeline_mode = #tpu.pipeline_mode<synchronous>, transform_indices = @transform_2, window_bounds = array<i64: 1, 128>}, {transform_indices = @transform_3, window_bounds = array<i64: 1, 16, 16, 128>}]} {
    %c16_i32 = arith.constant 16 : i32
    %0 = arith.muli %arg1, %c16_i32 : i32
    %1 = tpu.assume_multiple %0, 16 : i32
    %c0 = arith.constant 0 : index
    %c0_0 = arith.constant 0 : index
    %2 = vector.load %arg4[%c0, %c0_0] : memref<1x128xf32, #tpu.memory_space<vmem>>, vector<1x128xf32>
    %3 = vector.shape_cast %2 : vector<1x128xf32> to vector<1x128xf32>
    %4 = vector.broadcast %3 : vector<1x128xf32> to vector<256x128xf32>
    %c0_i32 = arith.constant 0 : i32
    %5 = arith.addi %1, %c0_i32 : i32
    %c0_1 = arith.constant 0 : index
    %6 = arith.index_cast %5 : i32 to index
    %c0_2 = arith.constant 0 : index
    %c0_3 = arith.constant 0 : index
    %7 = vector.load %arg2[%c0_1, %6, %c0_2, %c0_3] : memref<1x18x18x128xbf16, #tpu.memory_space<vmem>>, vector<1x16x18x128xbf16>
    %8 = vector.shape_cast %7 : vector<1x16x18x128xbf16> to vector<16x18x128xbf16>
    %9 = vector.extract_strided_slice %8 {offsets = [0, 0, 0], sizes = [16, 16, 128], strides = [1, 1, 1]} : vector<16x18x128xbf16> to vector<16x16x128xbf16>
    %10 = vector.shape_cast %9 : vector<16x16x128xbf16> to vector<256x128xbf16>
    %c0_4 = arith.constant 0 : index
    %c0_5 = arith.constant 0 : index
    %c0_6 = arith.constant 0 : index
    %c0_7 = arith.constant 0 : index
    %11 = vector.load %arg3[%c0_4, %c0_5, %c0_6, %c0_7] : memref<3x3x128x128xbf16, #tpu.memory_space<vmem>>, vector<1x1x128x128xbf16>
    %12 = vector.shape_cast %11 : vector<1x1x128x128xbf16> to vector<128x128xbf16>
    %cst = arith.constant dense<0.000000e+00> : vector<256x128xf32>
    %13 = tpu.matmul %10, %12, %cst {dimension_numbers = #tpu.dot_dimension_numbers<[1], [0], [0], [1], [0, 0, 1, 1], [], []>} : vector<256x128xbf16>, vector<128x128xbf16>, vector<256x128xf32> -> vector<256x128xf32>
    %14 = arith.addf %4, %13 : vector<256x128xf32>
    %15 = vector.extract_strided_slice %8 {offsets = [0, 1, 0], sizes = [16, 16, 128], strides = [1, 1, 1]} : vector<16x18x128xbf16> to vector<16x16x128xbf16>
    %16 = vector.shape_cast %15 : vector<16x16x128xbf16> to vector<256x128xbf16>
    %c0_8 = arith.constant 0 : index
    %c1 = arith.constant 1 : index
    %c0_9 = arith.constant 0 : index
    %c0_10 = arith.constant 0 : index
    %17 = vector.load %arg3[%c0_8, %c1, %c0_9, %c0_10] : memref<3x3x128x128xbf16, #tpu.memory_space<vmem>>, vector<1x1x128x128xbf16>
    %18 = vector.shape_cast %17 : vector<1x1x128x128xbf16> to vector<128x128xbf16>
    %cst_11 = arith.constant dense<0.000000e+00> : vector<256x128xf32>
    %19 = tpu.matmul %16, %18, %cst_11 {dimension_numbers = #tpu.dot_dimension_numbers<[1], [0], [0], [1], [0, 0, 1, 1], [], []>} : vector<256x128xbf16>, vector<128x128xbf16>, vector<256x128xf32> -> vector<256x128xf32>
    %20 = arith.addf %14, %19 : vector<256x128xf32>
    %21 = vector.extract_strided_slice %8 {offsets = [0, 2, 0], sizes = [16, 16, 128], strides = [1, 1, 1]} : vector<16x18x128xbf16> to vector<16x16x128xbf16>
    %22 = vector.shape_cast %21 : vector<16x16x128xbf16> to vector<256x128xbf16>
    %c0_12 = arith.constant 0 : index
    %c2 = arith.constant 2 : index
    %c0_13 = arith.constant 0 : index
    %c0_14 = arith.constant 0 : index
    %23 = vector.load %arg3[%c0_12, %c2, %c0_13, %c0_14] : memref<3x3x128x128xbf16, #tpu.memory_space<vmem>>, vector<1x1x128x128xbf16>
    %24 = vector.shape_cast %23 : vector<1x1x128x128xbf16> to vector<128x128xbf16>
    %cst_15 = arith.constant dense<0.000000e+00> : vector<256x128xf32>
    %25 = tpu.matmul %22, %24, %cst_15 {dimension_numbers = #tpu.dot_dimension_numbers<[1], [0], [0], [1], [0, 0, 1, 1], [], []>} : vector<256x128xbf16>, vector<128x128xbf16>, vector<256x128xf32> -> vector<256x128xf32>
    %26 = arith.addf %20, %25 : vector<256x128xf32>
    %c1_i32 = arith.constant 1 : i32
    %27 = arith.addi %1, %c1_i32 : i32
    %c0_16 = arith.constant 0 : index
    %28 = arith.index_cast %27 : i32 to index
    %c0_17 = arith.constant 0 : index
    %c0_18 = arith.constant 0 : index
    %29 = vector.load %arg2[%c0_16, %28, %c0_17, %c0_18] : memref<1x18x18x128xbf16, #tpu.memory_space<vmem>>, vector<1x16x18x128xbf16>
    %30 = vector.shape_cast %29 : vector<1x16x18x128xbf16> to vector<16x18x128xbf16>
    %31 = vector.extract_strided_slice %30 {offsets = [0, 0, 0], sizes = [16, 16, 128], strides = [1, 1, 1]} : vector<16x18x128xbf16> to vector<16x16x128xbf16>
    %32 = vector.shape_cast %31 : vector<16x16x128xbf16> to vector<256x128xbf16>
    %c1_19 = arith.constant 1 : index
    %c0_20 = arith.constant 0 : index
    %c0_21 = arith.constant 0 : index
    %c0_22 = arith.constant 0 : index
    %33 = vector.load %arg3[%c1_19, %c0_20, %c0_21, %c0_22] : memref<3x3x128x128xbf16, #tpu.memory_space<vmem>>, vector<1x1x128x128xbf16>
    %34 = vector.shape_cast %33 : vector<1x1x128x128xbf16> to vector<128x128xbf16>
    %cst_23 = arith.constant dense<0.000000e+00> : vector<256x128xf32>
    %35 = tpu.matmul %32, %34, %cst_23 {dimension_numbers = #tpu.dot_dimension_numbers<[1], [0], [0], [1], [0, 0, 1, 1], [], []>} : vector<256x128xbf16>, vector<128x128xbf16>, vector<256x128xf32> -> vector<256x128xf32>
    %36 = arith.addf %26, %35 : vector<256x128xf32>
    %37 = vector.extract_strided_slice %30 {offsets = [0, 1, 0], sizes = [16, 16, 128], strides = [1, 1, 1]} : vector<16x18x128xbf16> to vector<16x16x128xbf16>
    %38 = vector.shape_cast %37 : vector<16x16x128xbf16> to vector<256x128xbf16>
    %c1_24 = arith.constant 1 : index
    %c1_25 = arith.constant 1 : index
    %c0_26 = arith.constant 0 : index
    %c0_27 = arith.constant 0 : index
    %39 = vector.load %arg3[%c1_24, %c1_25, %c0_26, %c0_27] : memref<3x3x128x128xbf16, #tpu.memory_space<vmem>>, vector<1x1x128x128xbf16>
    %40 = vector.shape_cast %39 : vector<1x1x128x128xbf16> to vector<128x128xbf16>
    %cst_28 = arith.constant dense<0.000000e+00> : vector<256x128xf32>
    %41 = tpu.matmul %38, %40, %cst_28 {dimension_numbers = #tpu.dot_dimension_numbers<[1], [0], [0], [1], [0, 0, 1, 1], [], []>} : vector<256x128xbf16>, vector<128x128xbf16>, vector<256x128xf32> -> vector<256x128xf32>
    %42 = arith.addf %36, %41 : vector<256x128xf32>
    %43 = vector.extract_strided_slice %30 {offsets = [0, 2, 0], sizes = [16, 16, 128], strides = [1, 1, 1]} : vector<16x18x128xbf16> to vector<16x16x128xbf16>
    %44 = vector.shape_cast %43 : vector<16x16x128xbf16> to vector<256x128xbf16>
    %c1_29 = arith.constant 1 : index
    %c2_30 = arith.constant 2 : index
    %c0_31 = arith.constant 0 : index
    %c0_32 = arith.constant 0 : index
    %45 = vector.load %arg3[%c1_29, %c2_30, %c0_31, %c0_32] : memref<3x3x128x128xbf16, #tpu.memory_space<vmem>>, vector<1x1x128x128xbf16>
    %46 = vector.shape_cast %45 : vector<1x1x128x128xbf16> to vector<128x128xbf16>
    %cst_33 = arith.constant dense<0.000000e+00> : vector<256x128xf32>
    %47 = tpu.matmul %44, %46, %cst_33 {dimension_numbers = #tpu.dot_dimension_numbers<[1], [0], [0], [1], [0, 0, 1, 1], [], []>} : vector<256x128xbf16>, vector<128x128xbf16>, vector<256x128xf32> -> vector<256x128xf32>
    %48 = arith.addf %42, %47 : vector<256x128xf32>
    %c2_i32 = arith.constant 2 : i32
    %49 = arith.addi %1, %c2_i32 : i32
    %c0_34 = arith.constant 0 : index
    %50 = arith.index_cast %49 : i32 to index
    %c0_35 = arith.constant 0 : index
    %c0_36 = arith.constant 0 : index
    %51 = vector.load %arg2[%c0_34, %50, %c0_35, %c0_36] : memref<1x18x18x128xbf16, #tpu.memory_space<vmem>>, vector<1x16x18x128xbf16>
    %52 = vector.shape_cast %51 : vector<1x16x18x128xbf16> to vector<16x18x128xbf16>
    %53 = vector.extract_strided_slice %52 {offsets = [0, 0, 0], sizes = [16, 16, 128], strides = [1, 1, 1]} : vector<16x18x128xbf16> to vector<16x16x128xbf16>
    %54 = vector.shape_cast %53 : vector<16x16x128xbf16> to vector<256x128xbf16>
    %c2_37 = arith.constant 2 : index
    %c0_38 = arith.constant 0 : index
    %c0_39 = arith.constant 0 : index
    %c0_40 = arith.constant 0 : index
    %55 = vector.load %arg3[%c2_37, %c0_38, %c0_39, %c0_40] : memref<3x3x128x128xbf16, #tpu.memory_space<vmem>>, vector<1x1x128x128xbf16>
    %56 = vector.shape_cast %55 : vector<1x1x128x128xbf16> to vector<128x128xbf16>
    %cst_41 = arith.constant dense<0.000000e+00> : vector<256x128xf32>
    %57 = tpu.matmul %54, %56, %cst_41 {dimension_numbers = #tpu.dot_dimension_numbers<[1], [0], [0], [1], [0, 0, 1, 1], [], []>} : vector<256x128xbf16>, vector<128x128xbf16>, vector<256x128xf32> -> vector<256x128xf32>
    %58 = arith.addf %48, %57 : vector<256x128xf32>
    %59 = vector.extract_strided_slice %52 {offsets = [0, 1, 0], sizes = [16, 16, 128], strides = [1, 1, 1]} : vector<16x18x128xbf16> to vector<16x16x128xbf16>
    %60 = vector.shape_cast %59 : vector<16x16x128xbf16> to vector<256x128xbf16>
    %c2_42 = arith.constant 2 : index
    %c1_43 = arith.constant 1 : index
    %c0_44 = arith.constant 0 : index
    %c0_45 = arith.constant 0 : index
    %61 = vector.load %arg3[%c2_42, %c1_43, %c0_44, %c0_45] : memref<3x3x128x128xbf16, #tpu.memory_space<vmem>>, vector<1x1x128x128xbf16>
    %62 = vector.shape_cast %61 : vector<1x1x128x128xbf16> to vector<128x128xbf16>
    %cst_46 = arith.constant dense<0.000000e+00> : vector<256x128xf32>
    %63 = tpu.matmul %60, %62, %cst_46 {dimension_numbers = #tpu.dot_dimension_numbers<[1], [0], [0], [1], [0, 0, 1, 1], [], []>} : vector<256x128xbf16>, vector<128x128xbf16>, vector<256x128xf32> -> vector<256x128xf32>
    %64 = arith.addf %58, %63 : vector<256x128xf32>
    %65 = vector.extract_strided_slice %52 {offsets = [0, 2, 0], sizes = [16, 16, 128], strides = [1, 1, 1]} : vector<16x18x128xbf16> to vector<16x16x128xbf16>
    %66 = vector.shape_cast %65 : vector<16x16x128xbf16> to vector<256x128xbf16>
    %c2_47 = arith.constant 2 : index
    %c2_48 = arith.constant 2 : index
    %c0_49 = arith.constant 0 : index
    %c0_50 = arith.constant 0 : index
    %67 = vector.load %arg3[%c2_47, %c2_48, %c0_49, %c0_50] : memref<3x3x128x128xbf16, #tpu.memory_space<vmem>>, vector<1x1x128x128xbf16>
    %68 = vector.shape_cast %67 : vector<1x1x128x128xbf16> to vector<128x128xbf16>
    %cst_51 = arith.constant dense<0.000000e+00> : vector<256x128xf32>
    %69 = tpu.matmul %66, %68, %cst_51 {dimension_numbers = #tpu.dot_dimension_numbers<[1], [0], [0], [1], [0, 0, 1, 1], [], []>} : vector<256x128xbf16>, vector<128x128xbf16>, vector<256x128xf32> -> vector<256x128xf32>
    %70 = arith.addf %64, %69 : vector<256x128xf32>
    %cst_52 = arith.constant 0.000000e+00 : f32
    %71 = vector.broadcast %cst_52 : f32 to vector<256x128xf32>
    %72 = arith.maximumf %70, %71 : vector<256x128xf32>
    %73 = arith.truncf %72 : vector<256x128xf32> to vector<256x128xbf16>
    %74 = vector.shape_cast %73 : vector<256x128xbf16> to vector<16x16x128xbf16>
    %c0_53 = arith.constant 0 : index
    %c0_54 = arith.constant 0 : index
    %c0_55 = arith.constant 0 : index
    %c0_56 = arith.constant 0 : index
    %75 = vector.load %arg5[%c0_53, %c0_54, %c0_55, %c0_56] : memref<1x16x16x128xbf16, #tpu.memory_space<vmem>>, vector<1x16x16x128xbf16>
    %76 = vector.shape_cast %75 : vector<1x16x16x128xbf16> to vector<16x16x128xbf16>
    %77 = vector.shape_cast %74 : vector<16x16x128xbf16> to vector<1x16x16x128xbf16>
    tpu.vector_store %arg5[%c0_53, %c0_54, %c0_55, %c0_56], %77 {strides = array<i32>} : memref<1x16x16x128xbf16, #tpu.memory_space<vmem>>, vector<1x16x16x128xbf16>,
    return
  }
  func.func @transform_0(%arg0: i32, %arg1: i32) -> (i32, i32, i32, i32) {
    %c0_i32 = arith.constant 0 : i32
    %c0_i32_0 = arith.constant 0 : i32
    %c0_i32_1 = arith.constant 0 : i32
    %c0_i32_2 = arith.constant 0 : i32
    return %arg0, %c0_i32, %c0_i32_0, %c0_i32_1 : i32, i32, i32, i32
  }
  func.func @transform_1(%arg0: i32, %arg1: i32) -> (i32, i32, i32, i32) {
    %c0_i32 = arith.constant 0 : i32
    %c0_i32_0 = arith.constant 0 : i32
    %c0_i32_1 = arith.constant 0 : i32
    %c0_i32_2 = arith.constant 0 : i32
    %c0_i32_3 = arith.constant 0 : i32
    return %c0_i32, %c0_i32_0, %c0_i32_1, %c0_i32_2 : i32, i32, i32, i32
  }
  func.func @transform_2(%arg0: i32, %arg1: i32) -> (i32, i32) {
    %c0_i32 = arith.constant 0 : i32
    %c0_i32_0 = arith.constant 0 : i32
    %c0_i32_1 = arith.constant 0 : i32
    return %c0_i32, %c0_i32_0 : i32, i32
  }
  func.func @transform_3(%arg0: i32, %arg1: i32) -> (i32, i32, i32, i32) {
    %c0_i32 = arith.constant 0 : i32
    %c0_i32_0 = arith.constant 0 : i32
    %c0_i32_1 = arith.constant 0 : i32
    return %arg0, %arg1, %c0_i32, %c0_i32_0 : i32, i32, i32, i32
  }
}

</mosaic_0001>

<llo_original>
// kernel: tpu_custom_call.1
$region0: #{tpu_custom_call.1}
  #allocation0 [shape = 'u32[]', space=smem, size = 0x4, offset = 0x4, fixed_abs, tag = 'smem constant byte address 0x4 - core index']
  #allocation1 [shape = 'u32[144,128]{1,0:T(1,128)}', space=vmem, size = 0x12000, scoped, tag = 'internal scratch']
  %s0 = inlined_call_operand.vmem [shape: bf16[2,18,18,128], index: 0, kind: input, shape index: {}]
  %s1 = inlined_call_operand.vmem [shape: bf16[3,3,128,128], index: 1, kind: input, shape index: {}]
  %s2 = inlined_call_operand.vmem [shape: f32[1,128], index: 2, kind: input, shape index: {}]
  %s3 = inlined_call_operand.hbm [shape: bf16[2,16,16,128], index: 3, kind: output, shape index: {}]
  %s4 = sld [smem:[#allocation0]]
  $region45: #{tpu_custom_call.1} parent=0
    _
  %s6 = ssub.s32 1, %s4
  %s7 = scalar_select 0, %s6, %s4
  $region1: #{tpu_custom_call.1} parent=0
    #allocation2 [shape = 'u8[131072]{0}', space=vmem, size = 0x20000, scoped, tag = 'output window, operand 0']
    #allocation3 [shape = 's32[2]{0}', space=sflag, size = 0x8, scoped, tag = 'scoped memory for tpu_custom_call.1']
    %8 = vsyncpa [#allocation3], 0
    %s9 = scalar_lea.sflag [#allocation3], 1
    %10 = vsyncpa %s9, 0
    loop: start=0, step=1, limit=4
    $region2: #{tpu_custom_call.1} parent=1 // loop_pre_header
      _
    $region3: #{tpu_custom_call.1} parent=1 // loop_header
      %s12 = sphi 0, %s16
      %p13 = scmp.ge.s32.totalorder %s12, 4
      %s19 = sphi 0, %s31
      %s20 = sphi 0, %s27
      %s21 = sphi 0, %s19
      %s22 = sphi 0, %s20
      %s23 = sphi 0, %s21
      %s24 = sphi 0, %s22
      %s34 = sphi 0, %s36
      %s37 = sphi 0, %s34
      %s38 = sphi 0, %s37
      %s54 = sphi 0, %s38
      %s58 = sphi 0, %s58
      %s60 = sphi 0, %s58
      %s61 = sphi 0, %s60
      %s75 = sphi 0, %s61
      %s79 = sphi 0, %s79
      %s81 = sphi 0, %s79
      %s82 = sphi 0, %s81
      %s96 = sphi 0, %s82
      %s104 = sphi 0, %s106
      %s107 = sphi 0, %s104
      %s108 = sphi 0, %s107
      %s124 = sphi 0, %s108
    $region4: #{tpu_custom_call.1} parent=1 // loop_header_branch
      %15 = sbr.rel (%p13) target = $region8
    $region5: #{tpu_custom_call.1} parent=1 // loop_body
      %s17 = ssub.s32 %s12, 1
      %s18 = ssub.s32 %s12, 2
      %s25 = sadd.s32 1, %s20
      %p26 = scmp.ge.s32.totalorder %s25, 1
      %s27 = scalar_select %p26, 0, %s25
      %s28 = sadd.s32 1, %s19
      %s29 = scalar_select %p26, %s28, %s19
      %p30 = scmp.ge.s32.totalorder %s29, 2
      %s31 = scalar_select %p30, 0, %s29
      %s32 = ssub.s32 %s19, %s31
      %p33 = scmp.eq.s32.totalorder %s32, 0
      %s35 = sadd.s32 %s34, 1
      %s36 = scalar_select %p33, %s34, %s35
      %p39 = pneg %p33
      %p40 = scmp.eq.s32.totalorder %s12, 1
      %p41 = por %p39, %p40
      %p42 = scmp.ne.s32.totalorder %s34, %s37
      %p43 = scmp.eq.s32.totalorder %s12, 0
      %p44 = por %p42, %p43
      %p45 = scmp.ne.s32.totalorder %s34, %s37
      %p46 = scmp.eq.s32.totalorder %s17, 1
      %p47 = por %p45, %p46
      %p48 = scmp.ne.s32.totalorder %s37, %s38
      %p49 = scmp.eq.s32.totalorder %s17, 0
      %p50 = por %p48, %p49
      %p51 = scmp.ne.s32.totalorder %s37, %s38
      %p52 = scmp.eq.s32.totalorder %s18, 1
      %p53 = por %p51, %p52
      %p55 = scmp.ne.s32.totalorder %s38, %s54
      %p56 = scmp.eq.s32.totalorder %s18, 0
      %p57 = por %p55, %p56
      %s59 = sadd.s32 %s58, 1
      %p62 = scmp.eq.s32.totalorder %s12, 1
      %p63 = scmp.ne.s32.totalorder %s58, %s60
      %p64 = scmp.eq.s32.totalorder %s12, 0
      %p65 = por %p63, %p64
      %p66 = scmp.ne.s32.totalorder %s58, %s60
      %p67 = scmp.eq.s32.totalorder %s17, 1
      %p68 = por %p66, %p67
      %p69 = scmp.ne.s32.totalorder %s60, %s61
      %p70 = scmp.eq.s32.totalorder %s17, 0
      %p71 = por %p69, %p70
      %p72 = scmp.ne.s32.totalorder %s60, %s61
      %p73 = scmp.eq.s32.totalorder %s18, 1
      %p74 = por %p72, %p73
      %p76 = scmp.ne.s32.totalorder %s61, %s75
      %p77 = scmp.eq.s32.totalorder %s18, 0
      %p78 = por %p76, %p77
      %s80 = sadd.s32 %s79, 1
      %p83 = scmp.eq.s32.totalorder %s12, 1
      %p84 = scmp.ne.s32.totalorder %s79, %s81
      %p85 = scmp.eq.s32.totalorder %s12, 0
      %p86 = por %p84, %p85
      %p87 = scmp.ne.s32.totalorder %s79, %s81
      %p88 = scmp.eq.s32.totalorder %s17, 1
      %p89 = por %p87, %p88
      %p90 = scmp.ne.s32.totalorder %s81, %s82
      %p91 = scmp.eq.s32.totalorder %s17, 0
      %p92 = por %p90, %p91
      %p93 = scmp.ne.s32.totalorder %s81, %s82
      %p94 = scmp.eq.s32.totalorder %s18, 1
      %p95 = por %p93, %p94
      %p97 = scmp.ne.s32.totalorder %s82, %s96
      %p98 = scmp.eq.s32.totalorder %s18, 0
      %p99 = por %p97, %p98
      %s100 = ssub.s32 %s19, %s31
      %s101 = ssub.s32 %s20, %s27
      %s102 = sor.u32 %s100, %s101
      %p103 = scmp.eq.s32.totalorder %s102, 0
      %s105 = sadd.s32 %s104, 1
      %s106 = scalar_select %p103, %s104, %s105
      %p109 = pneg %p103
      %p110 = scmp.eq.s32.totalorder %s12, 1
      %p111 = por %p109, %p110
      %p112 = scmp.ne.s32.totalorder %s104, %s107
      %p113 = scmp.eq.s32.totalorder %s12, 0
      %p114 = por %p112, %p113
      %p115 = scmp.ne.s32.totalorder %s104, %s107
      %p116 = scmp.eq.s32.totalorder %s17, 1
      %p117 = por %p115, %p116
      %p118 = scmp.ne.s32.totalorder %s107, %s108
      %p119 = scmp.eq.s32.totalorder %s17, 0
      %p120 = por %p118, %p119
      %p121 = scmp.ne.s32.totalorder %s107, %s108
      %p122 = scmp.eq.s32.totalorder %s18, 1
      %p123 = por %p121, %p122
      %p125 = scmp.ne.s32.totalorder %s108, %s124
      %p126 = scmp.eq.s32.totalorder %s18, 0
      %p127 = por %p125, %p126
      %p128 = scmp.le.s32.totalorder 1, %s12
      %p129 = scmp.lt.s32.totalorder %s12, 3
      %p130 = pnand %p128, %p129
      %p131 = pneg %p130
      // Predicated region
      $region9: #{tpu_custom_call.1} parent=5 // pred_check
        _
      $region10: #{tpu_custom_call.1} parent=5 // pred_check_branch
        %133 = sbr.rel (%p130) target = $region12
      $region11: #{tpu_custom_call.1} parent=5 // pred_region
        %s134 = ssub.s32 %s12, 1
        // Predicated region
        $region13: #{tpu_custom_call.1} parent=11 // pred_check
          %p135 = pneg %p71
        $region14: #{tpu_custom_call.1} parent=11 // pred_check_branch
          %137 = sbr.rel (%p135) target = $region16
        $region15: #{tpu_custom_call.1} parent=11 // pred_region
          _
        $region16: #{tpu_custom_call.1} parent=11 // pred_fallthru
          _
        // Predicated region
        $region17: #{tpu_custom_call.1} parent=11 // pred_check
          %p138 = pneg %p92
        $region18: #{tpu_custom_call.1} parent=11 // pred_check_branch
          %140 = sbr.rel (%p138) target = $region20
        $region19: #{tpu_custom_call.1} parent=11 // pred_region
          _
        $region20: #{tpu_custom_call.1} parent=11 // pred_fallthru
          _
      $region12: #{tpu_custom_call.1} parent=5 // pred_fallthru
        _
      %p141 = scmp.lt.s32.totalorder %s12, 2
      // Predicated region
      $region21: #{tpu_custom_call.1} parent=5 // pred_check
        %p142 = pneg %p141
      $region22: #{tpu_custom_call.1} parent=5 // pred_check_branch
        %144 = sbr.rel (%p142) target = $region24
      $region23: #{tpu_custom_call.1} parent=5 // pred_region
        // Predicated region
        $region25: #{tpu_custom_call.1} parent=23 // pred_check
          %p145 = pneg %p44
        $region26: #{tpu_custom_call.1} parent=23 // pred_check_branch
          %147 = sbr.rel (%p145) target = $region28
        $region27: #{tpu_custom_call.1} parent=23 // pred_region
          %p148 = scmp.lt.s32.totalorder %s19, 1
          %s149 = scalar_select %p148, %s19, 1
          %s150 = smul.addr %s149, 54
          %s151 = smul.addr %s150, 4
          %s152 = scalar_lea.vmem %s0, %s151
        $region28: #{tpu_custom_call.1} parent=23 // pred_fallthru
          _
      $region24: #{tpu_custom_call.1} parent=5 // pred_fallthru
        _
      %p153 = scmp.le.s32.totalorder 1, %s12
      %p154 = scmp.lt.s32.totalorder %s12, 3
      %p155 = pnand %p153, %p154
      %p156 = pneg %p155
      // Predicated region
      $region29: #{tpu_custom_call.1} parent=5 // pred_check
        _
      $region30: #{tpu_custom_call.1} parent=5 // pred_check_branch
        %158 = sbr.rel (%p155) target = $region32
      $region31: #{tpu_custom_call.1} parent=5 // pred_region
        %s159 = ssub.s32 %s12, 1
        %p160 = scmp.lt.s32.totalorder %s21, 1
        %s161 = scalar_select %p160, %s21, 1
        %s162 = smul.addr %s161, 54
        %s163 = smul.addr %s162, 4
        %s164 = scalar_lea.vmem %s0, %s163
        %p165 = pneg %p50
        %p166 = pneg %p47
        %p167 = pneg %p71
        %p168 = pneg %p68
        %p169 = pneg %p92
        %p170 = pneg %p89
        %p171 = pneg %p120
        %p172 = pneg %p117
        %s173 = sand.u32 %s107, 1
        %s174 = scalar_lea.sflag [#allocation3], %s173
        %s175 = sand.u32 %s107, 1
        %s176 = smul.addr %s175, 128
        %s177 = scalar_lea.vmem [#allocation2], %s176
        %p178 = scmp.lt.s32.totalorder %s21, 1
        %s179 = scalar_select %p178, %s21, 1
        %s180 = smul.addr %s179, 54
        %s181 = smul.addr %s180, 4
        %s182 = scalar_lea.vmem %s0, %s181
        %s183 = smul.u32 16, %s22
        %s185 = smul.u32 %s22, 16
        %v186 = vld [vmem:[%s2] sm:$0x1]
        %v188 = vlaneseq
        %v189 = vshrl.u32 %v188, 7
        %v190 = vsub.s32 0, %v189
        %v191 = vrot.slane %v186, %v190
        %s193 = smul.u32 %s185, 3
        %s194 = smul.addr %s193, 4
        %s195 = scalar_lea.vmem %s182, %s194
        %v196 = vld [vmem:[%s195] sm:$0xf]
        %v197 = vld [vmem:[%s195 + $0x4] sm:$0xf]
        %v198 = vld [vmem:[%s195 + $0x8] sm:$0x1]
        %v199 = vld [vmem:[%s195 + $0xc] sm:$0xf]
        %v200 = vld [vmem:[%s195 + $0x10] sm:$0xf]
        %v201 = vld [vmem:[%s195 + $0x14] sm:$0x1]
        %v202 = vld [vmem:[%s195 + $0x18] sm:$0xf]
        %v203 = vld [vmem:[%s195 + $0x1c] sm:$0xf]
        %v204 = vld [vmem:[%s195 + $0x20] sm:$0x1]
        %v205 = vld [vmem:[%s195 + $0x24] sm:$0xf]
        %v206 = vld [vmem:[%s195 + $0x28] sm:$0xf]
        %v207 = vld [vmem:[%s195 + $0x2c] sm:$0x1]
        %v208 = vld [vmem:[%s195 + $0x30] sm:$0xf]
        %v209 = vld [vmem:[%s195 + $0x34] sm:$0xf]
        %v210 = vld [vmem:[%s195 + $0x38] sm:$0x1]
        %v211 = vld [vmem:[%s195 + $0x3c] sm:$0xf]
        %v212 = vld [vmem:[%s195 + $0x40] sm:$0xf]
        %v213 = vld [vmem:[%s195 + $0x44] sm:$0x1]
        %v214 = vld [vmem:[%s195 + $0x48] sm:$0xf]
        %v215 = vld [vmem:[%s195 + $0x4c] sm:$0xf]
        %v216 = vld [vmem:[%s195 + $0x50] sm:$0x1]
        %v217 = vld [vmem:[%s195 + $0x54] sm:$0xf]
        %v218 = vld [vmem:[%s195 + $0x58] sm:$0xf]
        %v219 = vld [vmem:[%s195 + $0x5c] sm:$0x1]
        %v220 = vld [vmem:[%s195 + $0x60] sm:$0xf]
        %v221 = vld [vmem:[%s195 + $0x64] sm:$0xf]
        %v222 = vld [vmem:[%s195 + $0x68] sm:$0x1]
        %v223 = vld [vmem:[%s195 + $0x6c] sm:$0xf]
        %v224 = vld [vmem:[%s195 + $0x70] sm:$0xf]
        %v225 = vld [vmem:[%s195 + $0x74] sm:$0x1]
        %v226 = vld [vmem:[%s195 + $0x78] sm:$0xf]
        %v227 = vld [vmem:[%s195 + $0x7c] sm:$0xf]
        %v228 = vld [vmem:[%s195 + $0x80] sm:$0x1]
        %v229 = vld [vmem:[%s195 + $0x84] sm:$0xf]
        %v230 = vld [vmem:[%s195 + $0x88] sm:$0xf]
        %v231 = vld [vmem:[%s195 + $0x8c] sm:$0x1]
        %v232 = vld [vmem:[%s195 + $0x90] sm:$0xf]
        %v233 = vld [vmem:[%s195 + $0x94] sm:$0xf]
        %v234 = vld [vmem:[%s195 + $0x98] sm:$0x1]
        %v235 = vld [vmem:[%s195 + $0x9c] sm:$0xf]
        %v236 = vld [vmem:[%s195 + $0xa0] sm:$0xf]
        %v237 = vld [vmem:[%s195 + $0xa4] sm:$0x1]
        %v238 = vld [vmem:[%s195 + $0xa8] sm:$0xf]
        %v239 = vld [vmem:[%s195 + $0xac] sm:$0xf]
        %v240 = vld [vmem:[%s195 + $0xb0] sm:$0x1]
        %v241 = vld [vmem:[%s195 + $0xb4] sm:$0xf]
        %v242 = vld [vmem:[%s195 + $0xb8] sm:$0xf]
        %v243 = vld [vmem:[%s195 + $0xbc] sm:$0x1]
        %v244 = vld [vmem:[%s1] sm:$0xf]
        %v245 = vld [vmem:[%s1 + $0x4] sm:$0xf]
        %v246 = vld [vmem:[%s1 + $0x8] sm:$0xf]
        %v247 = vld [vmem:[%s1 + $0xc] sm:$0xf]
        %v248 = vld [vmem:[%s1 + $0x10] sm:$0xf]
        %v249 = vld [vmem:[%s1 + $0x14] sm:$0xf]
        %v250 = vld [vmem:[%s1 + $0x18] sm:$0xf]
        %v251 = vld [vmem:[%s1 + $0x1c] sm:$0xf]
        %v252 = vld [vmem:[%s1 + $0x20] sm:$0xf]
        %v253 = vld [vmem:[%s1 + $0x24] sm:$0xf]
        %v254 = vld [vmem:[%s1 + $0x28] sm:$0xf]
        %v255 = vld [vmem:[%s1 + $0x2c] sm:$0xf]
        %v256 = vld [vmem:[%s1 + $0x30] sm:$0xf]
        %v257 = vld [vmem:[%s1 + $0x34] sm:$0xf]
        %v258 = vld [vmem:[%s1 + $0x38] sm:$0xf]
        %v259 = vld [vmem:[%s1 + $0x3c] sm:$0xf]
        %v292 = vunpack.c.l.b16 %v196
        %v293 = vunpack.c.l.b16 %v197
        %v294 = vunpack.c.l.b16 %v199
        %v295 = vunpack.c.l.b16 %v200
        %v296 = vunpack.c.l.b16 %v202
        %v297 = vunpack.c.l.b16 %v203
        %v298 = vunpack.c.l.b16 %v205
        %v299 = vunpack.c.l.b16 %v206
        %v300 = vunpack.c.l.b16 %v208
        %v301 = vunpack.c.l.b16 %v209
        %v302 = vunpack.c.l.b16 %v211
        %v303 = vunpack.c.l.b16 %v212
        %v304 = vunpack.c.l.b16 %v214
        %v305 = vunpack.c.l.b16 %v215
        %v306 = vunpack.c.l.b16 %v217
        %v307 = vunpack.c.l.b16 %v218
        %v308 = vunpack.c.l.b16 %v220
        %v309 = vunpack.c.l.b16 %v221
        %v310 = vunpack.c.l.b16 %v223
        %v311 = vunpack.c.l.b16 %v224
        %v312 = vunpack.c.l.b16 %v226
        %v313 = vunpack.c.l.b16 %v227
        %v314 = vunpack.c.l.b16 %v229
        %v315 = vunpack.c.l.b16 %v230
        %v316 = vunpack.c.l.b16 %v232
        %v317 = vunpack.c.l.b16 %v233
        %v318 = vunpack.c.l.b16 %v235
        %v319 = vunpack.c.l.b16 %v236
        %v320 = vunpack.c.l.b16 %v238
        %v321 = vunpack.c.l.b16 %v239
        %v322 = vunpack.c.l.b16 %v241
        %v323 = vunpack.c.l.b16 %v242
        %v324 = vpack.c.b16 %v293, %v292
        %v325 = vpack.c.b16 %v295, %v294
        %v326 = vpack.c.b16 %v297, %v296
        %v327 = vpack.c.b16 %v299, %v298
        %v328 = vpack.c.b16 %v301, %v300
        %v329 = vpack.c.b16 %v303, %v302
        %v330 = vpack.c.b16 %v305, %v304
        %v331 = vpack.c.b16 %v307, %v306
        %v332 = vpack.c.b16 %v309, %v308
        %v333 = vpack.c.b16 %v311, %v310
        %v334 = vpack.c.b16 %v313, %v312
        %v335 = vpack.c.b16 %v315, %v314
        %v336 = vpack.c.b16 %v317, %v316
        %v337 = vpack.c.b16 %v319, %v318
        %v338 = vpack.c.b16 %v321, %v320
        %v339 = vpack.c.b16 %v323, %v322
        %v372 = vunpack.c.l.b16 %v244
        %v373 = vunpack.c.l.b16 %v245
        %v374 = vunpack.c.l.b16 %v246
        %v375 = vunpack.c.l.b16 %v247
        %v376 = vunpack.c.l.b16 %v248
        %v377 = vunpack.c.l.b16 %v249
        %v378 = vunpack.c.l.b16 %v250
        %v379 = vunpack.c.l.b16 %v251
        %v380 = vunpack.c.l.b16 %v252
        %v381 = vunpack.c.l.b16 %v253
        %v382 = vunpack.c.l.b16 %v254
        %v383 = vunpack.c.l.b16 %v255
        %v384 = vunpack.c.l.b16 %v256
        %v385 = vunpack.c.l.b16 %v257
        %v386 = vunpack.c.l.b16 %v258
        %v387 = vunpack.c.l.b16 %v259
        %v388 = vpack.c.b16 %v373, %v372
        %v389 = vpack.c.b16 %v375, %v374
        %v390 = vpack.c.b16 %v377, %v376
        %v391 = vpack.c.b16 %v379, %v378
        %v392 = vpack.c.b16 %v381, %v380
        %v393 = vpack.c.b16 %v383, %v382
        %v394 = vpack.c.b16 %v385, %v384
        %v395 = vpack.c.b16 %v387, %v386
        %404 = vmatprep.subr.bf16.mxu0 0
        %405 = vmatpush1.bf16.msra.mxu0 %v395
        %406 = vmatprep.subr.bf16.mxu0 0
        %407 = vmatpush1.bf16.msra.mxu0 %v394
        %408 = vmatprep.subr.bf16.mxu0 0
        %409 = vmatpush1.bf16.msra.mxu0 %v393
        %410 = vmatprep.subr.bf16.mxu0 0
        %411 = vmatpush1.bf16.msra.mxu0 %v392
        %412 = vmatprep.subr.bf16.mxu0 0
        %413 = vmatpush1.bf16.msra.mxu0 %v391
        %414 = vmatprep.subr.bf16.mxu0 0
        %415 = vmatpush1.bf16.msra.mxu0 %v390
        %416 = vmatprep.subr.bf16.mxu0 0
        %417 = vmatpush1.bf16.msra.mxu0 %v389
        %418 = vmatprep.subr.bf16.mxu0 0
        %419 = vmatpush1.bf16.msra.mxu0 %v388
        %420 = vmatprep.subr.bf16.mxu0 0
        %421 = vmatpush2.bf16.msra.mxu0 0
        %422 = vmatprep.subr.bf16.mxu0 0
        %423 = vmatpush2.bf16.msra.mxu0 0
        %424 = vmatprep.subr.bf16.mxu0 0
        %425 = vmatpush2.bf16.msra.mxu0 0
        %426 = vmatprep.subr.bf16.mxu0 0
        %427 = vmatpush2.bf16.msra.mxu0 0
        %428 = vmatprep.subr.bf16.mxu0 0
        %429 = vmatpush2.bf16.msra.mxu0 0
        %430 = vmatprep.subr.bf16.mxu0 0
        %431 = vmatpush2.bf16.msra.mxu0 0
        %432 = vmatprep.subr.bf16.mxu0 0
        %433 = vmatpush2.bf16.msra.mxu0 0
        %434 = vmatprep.subr.bf16.mxu0 0
        %435 = vmatpush2.bf16.msra.mxu0 0
        %436 = vmatprep.mubr.bf16.mxu0 0
        %437 = vmatmul.mubr.bf16.gmra.mxu0 %v324
        %v438 = vpop.f32.mrf.mxu0
        %v439 = vadd.f32 0.0, %v438
        %v440 = vpop.f32.mrf.mxu0
        %v441 = vpop.f32.mrf.mxu0
        %v442 = vadd.f32 0.0, %v441
        %v443 = vpop.f32.mrf.mxu0
        %444 = vmatprep.mubr.bf16.mxu0 0
        %445 = vmatmul.mubr.bf16.gmra.mxu0 %v325
        %v446 = vpop.f32.mrf.mxu0
        %v447 = vadd.f32 0.0, %v446
        %v448 = vpop.f32.mrf.mxu0
        %v449 = vpop.f32.mrf.mxu0
        %v450 = vadd.f32 0.0, %v449
        %v451 = vpop.f32.mrf.mxu0
        %452 = vmatprep.mubr.bf16.mxu0 0
        %453 = vmatmul.mubr.bf16.gmra.mxu0 %v326
        %v454 = vpop.f32.mrf.mxu0
        %v455 = vadd.f32 0.0, %v454
        %v456 = vpop.f32.mrf.mxu0
        %v457 = vpop.f32.mrf.mxu0
        %v458 = vadd.f32 0.0, %v457
        %v459 = vpop.f32.mrf.mxu0
        %460 = vmatprep.mubr.bf16.mxu0 0
        %461 = vmatmul.mubr.bf16.gmra.mxu0 %v327
        %v462 = vpop.f32.mrf.mxu0
        %v463 = vadd.f32 0.0, %v462
        %v464 = vpop.f32.mrf.mxu0
        %v465 = vpop.f32.mrf.mxu0
        %v466 = vadd.f32 0.0, %v465
        %v467 = vpop.f32.mrf.mxu0
        %468 = vmatprep.mubr.bf16.mxu0 0
        %469 = vmatmul.mubr.bf16.gmra.mxu0 %v328
        %v470 = vpop.f32.mrf.mxu0
        %v471 = vadd.f32 0.0, %v470
        %v472 = vpop.f32.mrf.mxu0
        %v473 = vpop.f32.mrf.mxu0
        %v474 = vadd.f32 0.0, %v473
        %v475 = vpop.f32.mrf.mxu0
        %476 = vmatprep.mubr.bf16.mxu0 0
        %477 = vmatmul.mubr.bf16.gmra.mxu0 %v329
        %v478 = vpop.f32.mrf.mxu0
        %v479 = vadd.f32 0.0, %v478
        %v480 = vpop.f32.mrf.mxu0
        %v481 = vpop.f32.mrf.mxu0
        %v482 = vadd.f32 0.0, %v481
        %v483 = vpop.f32.mrf.mxu0
        %484 = vmatprep.mubr.bf16.mxu0 0
        %485 = vmatmul.mubr.bf16.gmra.mxu0 %v330
        %v486 = vpop.f32.mrf.mxu0
        %v487 = vadd.f32 0.0, %v486
        %v488 = vpop.f32.mrf.mxu0
        %v489 = vpop.f32.mrf.mxu0
        %v490 = vadd.f32 0.0, %v489
        %v491 = vpop.f32.mrf.mxu0
        %492 = vmatprep.mubr.bf16.mxu0 0
        %493 = vmatmul.mubr.bf16.gmra.mxu0 %v331
        %v494 = vpop.f32.mrf.mxu0
        %v495 = vadd.f32 0.0, %v494
        %v496 = vpop.f32.mrf.mxu0
        %v497 = vpop.f32.mrf.mxu0
        %v498 = vadd.f32 0.0, %v497
        %v499 = vpop.f32.mrf.mxu0
        %500 = vmatprep.mubr.bf16.mxu0 0
        %501 = vmatmul.mubr.bf16.gmra.mxu0 %v332
        %v502 = vpop.f32.mrf.mxu0
        %v503 = vadd.f32 0.0, %v502
        %v504 = vpop.f32.mrf.mxu0
        %v505 = vpop.f32.mrf.mxu0
        %v506 = vadd.f32 0.0, %v505
        %v507 = vpop.f32.mrf.mxu0
        %508 = vmatprep.mubr.bf16.mxu0 0
        %509 = vmatmul.mubr.bf16.gmra.mxu0 %v333
        %v510 = vpop.f32.mrf.mxu0
        %v511 = vadd.f32 0.0, %v510
        %v512 = vpop.f32.mrf.mxu0
        %v513 = vpop.f32.mrf.mxu0
        %v514 = vadd.f32 0.0, %v513
        %v515 = vpop.f32.mrf.mxu0
        %516 = vmatprep.mubr.bf16.mxu0 0
        %517 = vmatmul.mubr.bf16.gmra.mxu0 %v334
        %v518 = vpop.f32.mrf.mxu0
        %v519 = vadd.f32 0.0, %v518
        %v520 = vpop.f32.mrf.mxu0
        %v521 = vpop.f32.mrf.mxu0
        %v522 = vadd.f32 0.0, %v521
        %v523 = vpop.f32.mrf.mxu0
        %524 = vmatprep.mubr.bf16.mxu0 0
        %525 = vmatmul.mubr.bf16.gmra.mxu0 %v335
        %v526 = vpop.f32.mrf.mxu0
        %v527 = vadd.f32 0.0, %v526
        %v528 = vpop.f32.mrf.mxu0
        %v529 = vpop.f32.mrf.mxu0
        %v530 = vadd.f32 0.0, %v529
        %v531 = vpop.f32.mrf.mxu0
        %532 = vmatprep.mubr.bf16.mxu0 0
        %533 = vmatmul.mubr.bf16.gmra.mxu0 %v336
        %v534 = vpop.f32.mrf.mxu0
        %v535 = vadd.f32 0.0, %v534
        %v536 = vpop.f32.mrf.mxu0
        %v537 = vpop.f32.mrf.mxu0
        %v538 = vadd.f32 0.0, %v537
        %v539 = vpop.f32.mrf.mxu0
        %540 = vmatprep.mubr.bf16.mxu0 0
        %541 = vmatmul.mubr.bf16.gmra.mxu0 %v337
        %v542 = vpop.f32.mrf.mxu0
        %v543 = vadd.f32 0.0, %v542
        %v544 = vpop.f32.mrf.mxu0
        %v545 = vpop.f32.mrf.mxu0
        %v546 = vadd.f32 0.0, %v545
        %v547 = vpop.f32.mrf.mxu0
        %548 = vmatprep.mubr.bf16.mxu0 0
        %549 = vmatmul.mubr.bf16.gmra.mxu0 %v338
        %v550 = vpop.f32.mrf.mxu0
        %v551 = vadd.f32 0.0, %v550
        %v552 = vpop.f32.mrf.mxu0
        %v553 = vpop.f32.mrf.mxu0
        %v554 = vadd.f32 0.0, %v553
        %v555 = vpop.f32.mrf.mxu0
        %556 = vmatprep.mubr.bf16.mxu0 0
        %557 = vmatmul.mubr.bf16.gmra.mxu0 %v339
        %v558 = vpop.f32.mrf.mxu0
        %v559 = vadd.f32 0.0, %v558
        %v560 = vpop.f32.mrf.mxu0
        %v561 = vpop.f32.mrf.mxu0
        %v562 = vadd.f32 0.0, %v561
        %v563 = vpop.f32.mrf.mxu0
        %564 = vdwg.mxu0
        %v565 = vadd.f32 %v191, %v439
        %v566 = vadd.f32 %v191, %v442
        %v567 = vadd.f32 %v191, %v447
        %v568 = vadd.f32 %v191, %v450
        %v569 = vadd.f32 %v191, %v455
        %v570 = vadd.f32 %v191, %v458
        %v571 = vadd.f32 %v191, %v463
        %v572 = vadd.f32 %v191, %v466
        %v573 = vadd.f32 %v191, %v471
        %v574 = vadd.f32 %v191, %v474
        %v575 = vadd.f32 %v191, %v479
        %v576 = vadd.f32 %v191, %v482
        %v577 = vadd.f32 %v191, %v487
        %v578 = vadd.f32 %v191, %v490
        %v579 = vadd.f32 %v191, %v495
        %v580 = vadd.f32 %v191, %v498
        %v581 = vadd.f32 %v191, %v503
        %v582 = vadd.f32 %v191, %v506
        %v583 = vadd.f32 %v191, %v511
        %v584 = vadd.f32 %v191, %v514
        %v585 = vadd.f32 %v191, %v519
        %v586 = vadd.f32 %v191, %v522
        %v587 = vadd.f32 %v191, %v527
        %v588 = vadd.f32 %v191, %v530
        %v589 = vadd.f32 %v191, %v535
        %v590 = vadd.f32 %v191, %v538
        %v591 = vadd.f32 %v191, %v543
        %v592 = vadd.f32 %v191, %v546
        %v593 = vadd.f32 %v191, %v551
        %v594 = vadd.f32 %v191, %v554
        %v595 = vadd.f32 %v191, %v559
        %v596 = vadd.f32 %v191, %v562
        %vm597 = vsmask.f32 3328
        %vm598 = vsmask.f32 7440
        %vm599 = vmor %vm597, %vm598
        %v601 = vshrl.u32 %v196, 16
        %v603 = vrot.slane %v601, 4
        %v604 = vshll.u32 %v196, 16
        %v606 = vrot.slane %v604, 5
        %v607 = vor.u32 %v603, %v606
        %v608 = vrot.slane %v607, 4
        %v610 = vshll.u32 %v197, 16
        %v612 = vrot.slane %v610, 5
        %v613 = vsel %vm599, %v608, %v612
        %v614 = vshrl.u32 %v197, 16
        %v616 = vrot.slane %v614, 4
        %v617 = vor.u32 %v616, %v612
        %v618 = vrot.slane %v617, 4
        %v620 = vshll.u32 %v198, 16
        %v622 = vrot.slane %v620, 5
        %v623 = vsel %vm599, %v618, %v622
        %v625 = vshrl.u32 %v199, 16
        %v627 = vrot.slane %v625, 4
        %v628 = vshll.u32 %v199, 16
        %v630 = vrot.slane %v628, 5
        %v631 = vor.u32 %v627, %v630
        %v632 = vrot.slane %v631, 4
        %v634 = vshll.u32 %v200, 16
        %v636 = vrot.slane %v634, 5
        %v637 = vsel %vm599, %v632, %v636
        %v638 = vshrl.u32 %v200, 16
        %v640 = vrot.slane %v638, 4
        %v641 = vor.u32 %v640, %v636
        %v642 = vrot.slane %v641, 4
        %v644 = vshll.u32 %v201, 16
        %v646 = vrot.slane %v644, 5
        %v647 = vsel %vm599, %v642, %v646
        %v649 = vshrl.u32 %v202, 16
        %v651 = vrot.slane %v649, 4
        %v652 = vshll.u32 %v202, 16
        %v654 = vrot.slane %v652, 5
        %v655 = vor.u32 %v651, %v654
        %v656 = vrot.slane %v655, 4
        %v658 = vshll.u32 %v203, 16
        %v660 = vrot.slane %v658, 5
        %v661 = vsel %vm599, %v656, %v660
        %v662 = vshrl.u32 %v203, 16
        %v664 = vrot.slane %v662, 4
        %v665 = vor.u32 %v664, %v660
        %v666 = vrot.slane %v665, 4
        %v668 = vshll.u32 %v204, 16
        %v670 = vrot.slane %v668, 5
        %v671 = vsel %vm599, %v666, %v670
        %v673 = vshrl.u32 %v205, 16
        %v675 = vrot.slane %v673, 4
        %v676 = vshll.u32 %v205, 16
        %v678 = vrot.slane %v676, 5
        %v679 = vor.u32 %v675, %v678
        %v680 = vrot.slane %v679, 4
        %v682 = vshll.u32 %v206, 16
        %v684 = vrot.slane %v682, 5
        %v685 = vsel %vm599, %v680, %v684
        %v686 = vshrl.u32 %v206, 16
        %v688 = vrot.slane %v686, 4
        %v689 = vor.u32 %v688, %v684
        %v690 = vrot.slane %v689, 4
        %v692 = vshll.u32 %v207, 16
        %v694 = vrot.slane %v692, 5
        %v695 = vsel %vm599, %v690, %v694
        %v697 = vshrl.u32 %v208, 16
        %v699 = vrot.slane %v697, 4
        %v700 = vshll.u32 %v208, 16
        %v702 = vrot.slane %v700, 5
        %v703 = vor.u32 %v699, %v702
        %v704 = vrot.slane %v703, 4
        %v706 = vshll.u32 %v209, 16
        %v708 = vrot.slane %v706, 5
        %v709 = vsel %vm599, %v704, %v708
        %v710 = vshrl.u32 %v209, 16
        %v712 = vrot.slane %v710, 4
        %v713 = vor.u32 %v712, %v708
        %v714 = vrot.slane %v713, 4
        %v716 = vshll.u32 %v210, 16
        %v718 = vrot.slane %v716, 5
        %v719 = vsel %vm599, %v714, %v718
        %v721 = vshrl.u32 %v211, 16
        %v723 = vrot.slane %v721, 4
        %v724 = vshll.u32 %v211, 16
        %v726 = vrot.slane %v724, 5
        %v727 = vor.u32 %v723, %v726
        %v728 = vrot.slane %v727, 4
        %v730 = vshll.u32 %v212, 16
        %v732 = vrot.slane %v730, 5
        %v733 = vsel %vm599, %v728, %v732
        %v734 = vshrl.u32 %v212, 16
        %v736 = vrot.slane %v734, 4
        %v737 = vor.u32 %v736, %v732
        %v738 = vrot.slane %v737, 4
        %v740 = vshll.u32 %v213, 16
        %v742 = vrot.slane %v740, 5
        %v743 = vsel %vm599, %v738, %v742
        %v745 = vshrl.u32 %v214, 16
        %v747 = vrot.slane %v745, 4
        %v748 = vshll.u32 %v214, 16
        %v750 = vrot.slane %v748, 5
        %v751 = vor.u32 %v747, %v750
        %v752 = vrot.slane %v751, 4
        %v754 = vshll.u32 %v215, 16
        %v756 = vrot.slane %v754, 5
        %v757 = vsel %vm599, %v752, %v756
        %v758 = vshrl.u32 %v215, 16
        %v760 = vrot.slane %v758, 4
        %v761 = vor.u32 %v760, %v756
        %v762 = vrot.slane %v761, 4
        %v764 = vshll.u32 %v216, 16
        %v766 = vrot.slane %v764, 5
        %v767 = vsel %vm599, %v762, %v766
        %v769 = vshrl.u32 %v217, 16
        %v771 = vrot.slane %v769, 4
        %v772 = vshll.u32 %v217, 16
        %v774 = vrot.slane %v772, 5
        %v775 = vor.u32 %v771, %v774
        %v776 = vrot.slane %v775, 4
        %v778 = vshll.u32 %v218, 16
        %v780 = vrot.slane %v778, 5
        %v781 = vsel %vm599, %v776, %v780
        %v782 = vshrl.u32 %v218, 16
        %v784 = vrot.slane %v782, 4
        %v785 = vor.u32 %v784, %v780
        %v786 = vrot.slane %v785, 4
        %v788 = vshll.u32 %v219, 16
        %v790 = vrot.slane %v788, 5
        %v791 = vsel %vm599, %v786, %v790
        %v793 = vshrl.u32 %v220, 16
        %v795 = vrot.slane %v793, 4
        %v796 = vshll.u32 %v220, 16
        %v798 = vrot.slane %v796, 5
        %v799 = vor.u32 %v795, %v798
        %v800 = vrot.slane %v799, 4
        %v802 = vshll.u32 %v221, 16
        %v804 = vrot.slane %v802, 5
        %v805 = vsel %vm599, %v800, %v804
        %v806 = vshrl.u32 %v221, 16
        %v808 = vrot.slane %v806, 4
        %v809 = vor.u32 %v808, %v804
        %v810 = vrot.slane %v809, 4
        %v812 = vshll.u32 %v222, 16
        %v814 = vrot.slane %v812, 5
        %v815 = vsel %vm599, %v810, %v814
        %v817 = vshrl.u32 %v223, 16
        %v819 = vrot.slane %v817, 4
        %v820 = vshll.u32 %v223, 16
        %v822 = vrot.slane %v820, 5
        %v823 = vor.u32 %v819, %v822
        %v824 = vrot.slane %v823, 4
        %v826 = vshll.u32 %v224, 16
        %v828 = vrot.slane %v826, 5
        %v829 = vsel %vm599, %v824, %v828
        %v830 = vshrl.u32 %v224, 16
        %v832 = vrot.slane %v830, 4
        %v833 = vor.u32 %v832, %v828
        %v834 = vrot.slane %v833, 4
        %v836 = vshll.u32 %v225, 16
        %v838 = vrot.slane %v836, 5
        %v839 = vsel %vm599, %v834, %v838
        %v841 = vshrl.u32 %v226, 16
        %v843 = vrot.slane %v841, 4
        %v844 = vshll.u32 %v226, 16
        %v846 = vrot.slane %v844, 5
        %v847 = vor.u32 %v843, %v846
        %v848 = vrot.slane %v847, 4
        %v850 = vshll.u32 %v227, 16
        %v852 = vrot.slane %v850, 5
        %v853 = vsel %vm599, %v848, %v852
        %v854 = vshrl.u32 %v227, 16
        %v856 = vrot.slane %v854, 4
        %v857 = vor.u32 %v856, %v852
        %v858 = vrot.slane %v857, 4
        %v860 = vshll.u32 %v228, 16
        %v862 = vrot.slane %v860, 5
        %v863 = vsel %vm599, %v858, %v862
        %v865 = vshrl.u32 %v229, 16
        %v867 = vrot.slane %v865, 4
        %v868 = vshll.u32 %v229, 16
        %v870 = vrot.slane %v868, 5
        %v871 = vor.u32 %v867, %v870
        %v872 = vrot.slane %v871, 4
        %v874 = vshll.u32 %v230, 16
        %v876 = vrot.slane %v874, 5
        %v877 = vsel %vm599, %v872, %v876
        %v878 = vshrl.u32 %v230, 16
        %v880 = vrot.slane %v878, 4
        %v881 = vor.u32 %v880, %v876
        %v882 = vrot.slane %v881, 4
        %v884 = vshll.u32 %v231, 16
        %v886 = vrot.slane %v884, 5
        %v887 = vsel %vm599, %v882, %v886
        %v889 = vshrl.u32 %v232, 16
        %v891 = vrot.slane %v889, 4
        %v892 = vshll.u32 %v232, 16
        %v894 = vrot.slane %v892, 5
        %v895 = vor.u32 %v891, %v894
        %v896 = vrot.slane %v895, 4
        %v898 = vshll.u32 %v233, 16
        %v900 = vrot.slane %v898, 5
        %v901 = vsel %vm599, %v896, %v900
        %v902 = vshrl.u32 %v233, 16
        %v904 = vrot.slane %v902, 4
        %v905 = vor.u32 %v904, %v900
        %v906 = vrot.slane %v905, 4
        %v908 = vshll.u32 %v234, 16
        %v910 = vrot.slane %v908, 5
        %v911 = vsel %vm599, %v906, %v910
        %v913 = vshrl.u32 %v235, 16
        %v915 = vrot.slane %v913, 4
        %v916 = vshll.u32 %v235, 16
        %v918 = vrot.slane %v916, 5
        %v919 = vor.u32 %v915, %v918
        %v920 = vrot.slane %v919, 4
        %v922 = vshll.u32 %v236, 16
        %v924 = vrot.slane %v922, 5
        %v925 = vsel %vm599, %v920, %v924
        %v926 = vshrl.u32 %v236, 16
        %v928 = vrot.slane %v926, 4
        %v929 = vor.u32 %v928, %v924
        %v930 = vrot.slane %v929, 4
        %v932 = vshll.u32 %v237, 16
        %v934 = vrot.slane %v932, 5
        %v935 = vsel %vm599, %v930, %v934
        %v937 = vshrl.u32 %v238, 16
        %v939 = vrot.slane %v937, 4
        %v940 = vshll.u32 %v238, 16
        %v942 = vrot.slane %v940, 5
        %v943 = vor.u32 %v939, %v942
        %v944 = vrot.slane %v943, 4
        %v946 = vshll.u32 %v239, 16
        %v948 = vrot.slane %v946, 5
        %v949 = vsel %vm599, %v944, %v948
        %v950 = vshrl.u32 %v239, 16
        %v952 = vrot.slane %v950, 4
        %v953 = vor.u32 %v952, %v948
        %v954 = vrot.slane %v953, 4
        %v956 = vshll.u32 %v240, 16
        %v958 = vrot.slane %v956, 5
        %v959 = vsel %vm599, %v954, %v958
        %v961 = vshrl.u32 %v241, 16
        %v963 = vrot.slane %v961, 4
        %v964 = vshll.u32 %v241, 16
        %v966 = vrot.slane %v964, 5
        %v967 = vor.u32 %v963, %v966
        %v968 = vrot.slane %v967, 4
        %v970 = vshll.u32 %v242, 16
        %v972 = vrot.slane %v970, 5
        %v973 = vsel %vm599, %v968, %v972
        %v974 = vshrl.u32 %v242, 16
        %v976 = vrot.slane %v974, 4
        %v977 = vor.u32 %v976, %v972
        %v978 = vrot.slane %v977, 4
        %v980 = vshll.u32 %v243, 16
        %v982 = vrot.slane %v980, 5
        %v983 = vsel %vm599, %v978, %v982
        %s984 = scalar_lea.vmem %s1, 64
        %v985 = vld [vmem:[%s984] sm:$0xf]
        %v986 = vld [vmem:[%s984 + $0x4] sm:$0xf]
        %v987 = vld [vmem:[%s984 + $0x8] sm:$0xf]
        %v988 = vld [vmem:[%s984 + $0xc] sm:$0xf]
        %v989 = vld [vmem:[%s984 + $0x10] sm:$0xf]
        %v990 = vld [vmem:[%s984 + $0x14] sm:$0xf]
        %v991 = vld [vmem:[%s984 + $0x18] sm:$0xf]
        %v992 = vld [vmem:[%s984 + $0x1c] sm:$0xf]
        %v993 = vld [vmem:[%s984 + $0x20] sm:$0xf]
        %v994 = vld [vmem:[%s984 + $0x24] sm:$0xf]
        %v995 = vld [vmem:[%s984 + $0x28] sm:$0xf]
        %v996 = vld [vmem:[%s984 + $0x2c] sm:$0xf]
        %v997 = vld [vmem:[%s984 + $0x30] sm:$0xf]
        %v998 = vld [vmem:[%s984 + $0x34] sm:$0xf]
        %v999 = vld [vmem:[%s984 + $0x38] sm:$0xf]
        %v1000 = vld [vmem:[%s984 + $0x3c] sm:$0xf]
        %v1001 = vunpack.c.l.b16 %v613
        %v1002 = vunpack.c.l.b16 %v623
        %v1003 = vunpack.c.l.b16 %v637
        %v1004 = vunpack.c.l.b16 %v647
        %v1005 = vunpack.c.l.b16 %v661
        %v1006 = vunpack.c.l.b16 %v671
        %v1007 = vunpack.c.l.b16 %v685
        %v1008 = vunpack.c.l.b16 %v695
        %v1009 = vunpack.c.l.b16 %v709
        %v1010 = vunpack.c.l.b16 %v719
        %v1011 = vunpack.c.l.b16 %v733
        %v1012 = vunpack.c.l.b16 %v743
        %v1013 = vunpack.c.l.b16 %v757
        %v1014 = vunpack.c.l.b16 %v767
        %v1015 = vunpack.c.l.b16 %v781
        %v1016 = vunpack.c.l.b16 %v791
        %v1017 = vunpack.c.l.b16 %v805
        %v1018 = vunpack.c.l.b16 %v815
        %v1019 = vunpack.c.l.b16 %v829
        %v1020 = vunpack.c.l.b16 %v839
        %v1021 = vunpack.c.l.b16 %v853
        %v1022 = vunpack.c.l.b16 %v863
        %v1023 = vunpack.c.l.b16 %v877
        %v1024 = vunpack.c.l.b16 %v887
        %v1025 = vunpack.c.l.b16 %v901
        %v1026 = vunpack.c.l.b16 %v911
        %v1027 = vunpack.c.l.b16 %v925
        %v1028 = vunpack.c.l.b16 %v935
        %v1029 = vunpack.c.l.b16 %v949
        %v1030 = vunpack.c.l.b16 %v959
        %v1031 = vunpack.c.l.b16 %v973
        %v1032 = vunpack.c.l.b16 %v983
        %v1033 = vpack.c.b16 %v1002, %v1001
        %v1034 = vpack.c.b16 %v1004, %v1003
        %v1035 = vpack.c.b16 %v1006, %v1005
        %v1036 = vpack.c.b16 %v1008, %v1007
        %v1037 = vpack.c.b16 %v1010, %v1009
        %v1038 = vpack.c.b16 %v1012, %v1011
        %v1039 = vpack.c.b16 %v1014, %v1013
        %v1040 = vpack.c.b16 %v1016, %v1015
        %v1041 = vpack.c.b16 %v1018, %v1017
        %v1042 = vpack.c.b16 %v1020, %v1019
        %v1043 = vpack.c.b16 %v1022, %v1021
        %v1044 = vpack.c.b16 %v1024, %v1023
        %v1045 = vpack.c.b16 %v1026, %v1025
        %v1046 = vpack.c.b16 %v1028, %v1027
        %v1047 = vpack.c.b16 %v1030, %v1029
        %v1048 = vpack.c.b16 %v1032, %v1031
        %v1081 = vunpack.c.l.b16 %v985
        %v1082 = vunpack.c.l.b16 %v986
        %v1083 = vunpack.c.l.b16 %v987
        %v1084 = vunpack.c.l.b16 %v988
        %v1085 = vunpack.c.l.b16 %v989
        %v1086 = vunpack.c.l.b16 %v990
        %v1087 = vunpack.c.l.b16 %v991
        %v1088 = vunpack.c.l.b16 %v992
        %v1089 = vunpack.c.l.b16 %v993
        %v1090 = vunpack.c.l.b16 %v994
        %v1091 = vunpack.c.l.b16 %v995
        %v1092 = vunpack.c.l.b16 %v996
        %v1093 = vunpack.c.l.b16 %v997
        %v1094 = vunpack.c.l.b16 %v998
        %v1095 = vunpack.c.l.b16 %v999
        %v1096 = vunpack.c.l.b16 %v1000
        %v1097 = vpack.c.b16 %v1082, %v1081
        %v1098 = vpack.c.b16 %v1084, %v1083
        %v1099 = vpack.c.b16 %v1086, %v1085
        %v1100 = vpack.c.b16 %v1088, %v1087
        %v1101 = vpack.c.b16 %v1090, %v1089
        %v1102 = vpack.c.b16 %v1092, %v1091
        %v1103 = vpack.c.b16 %v1094, %v1093
        %v1104 = vpack.c.b16 %v1096, %v1095
        %1113 = vmatprep.subr.bf16.mxu0 0
        %1114 = vmatpush1.bf16.msra.mxu0 %v1104
        %1115 = vmatprep.subr.bf16.mxu0 0
        %1116 = vmatpush1.bf16.msra.mxu0 %v1103
        %1117 = vmatprep.subr.bf16.mxu0 0
        %1118 = vmatpush1.bf16.msra.mxu0 %v1102
        %1119 = vmatprep.subr.bf16.mxu0 0
        %1120 = vmatpush1.bf16.msra.mxu0 %v1101
        %1121 = vmatprep.subr.bf16.mxu0 0
        %1122 = vmatpush1.bf16.msra.mxu0 %v1100
        %1123 = vmatprep.subr.bf16.mxu0 0
        %1124 = vmatpush1.bf16.msra.mxu0 %v1099
        %1125 = vmatprep.subr.bf16.mxu0 0
        %1126 = vmatpush1.bf16.msra.mxu0 %v1098
        %1127 = vmatprep.subr.bf16.mxu0 0
        %1128 = vmatpush1.bf16.msra.mxu0 %v1097
        %1129 = vmatprep.subr.bf16.mxu0 0
        %1130 = vmatpush2.bf16.msra.mxu0 0
        %1131 = vmatprep.subr.bf16.mxu0 0
        %1132 = vmatpush2.bf16.msra.mxu0 0
        %1133 = vmatprep.subr.bf16.mxu0 0
        %1134 = vmatpush2.bf16.msra.mxu0 0
        %1135 = vmatprep.subr.bf16.mxu0 0
        %1136 = vmatpush2.bf16.msra.mxu0 0
        %1137 = vmatprep.subr.bf16.mxu0 0
        %1138 = vmatpush2.bf16.msra.mxu0 0
        %1139 = vmatprep.subr.bf16.mxu0 0
        %1140 = vmatpush2.bf16.msra.mxu0 0
        %1141 = vmatprep.subr.bf16.mxu0 0
        %1142 = vmatpush2.bf16.msra.mxu0 0
        %1143 = vmatprep.subr.bf16.mxu0 0
        %1144 = vmatpush2.bf16.msra.mxu0 0
        %1145 = vmatprep.mubr.bf16.mxu0 0
        %1146 = vmatmul.mubr.bf16.gmra.mxu0 %v1033
        %v1147 = vpop.f32.mrf.mxu0
        %v1148 = vadd.f32 0.0, %v1147
        %v1149 = vpop.f32.mrf.mxu0
        %v1150 = vpop.f32.mrf.mxu0
        %v1151 = vadd.f32 0.0, %v1150
        %v1152 = vpop.f32.mrf.mxu0
        %1153 = vmatprep.mubr.bf16.mxu0 0
        %1154 = vmatmul.mubr.bf16.gmra.mxu0 %v1034
        %v1155 = vpop.f32.mrf.mxu0
        %v1156 = vadd.f32 0.0, %v1155
        %v1157 = vpop.f32.mrf.mxu0
        %v1158 = vpop.f32.mrf.mxu0
        %v1159 = vadd.f32 0.0, %v1158
        %v1160 = vpop.f32.mrf.mxu0
        %1161 = vmatprep.mubr.bf16.mxu0 0
        %1162 = vmatmul.mubr.bf16.gmra.mxu0 %v1035
        %v1163 = vpop.f32.mrf.mxu0
        %v1164 = vadd.f32 0.0, %v1163
        %v1165 = vpop.f32.mrf.mxu0
        %v1166 = vpop.f32.mrf.mxu0
        %v1167 = vadd.f32 0.0, %v1166
        %v1168 = vpop.f32.mrf.mxu0
        %1169 = vmatprep.mubr.bf16.mxu0 0
        %1170 = vmatmul.mubr.bf16.gmra.mxu0 %v1036
        %v1171 = vpop.f32.mrf.mxu0
        %v1172 = vadd.f32 0.0, %v1171
        %v1173 = vpop.f32.mrf.mxu0
        %v1174 = vpop.f32.mrf.mxu0
        %v1175 = vadd.f32 0.0, %v1174
        %v1176 = vpop.f32.mrf.mxu0
        %1177 = vmatprep.mubr.bf16.mxu0 0
        %1178 = vmatmul.mubr.bf16.gmra.mxu0 %v1037
        %v1179 = vpop.f32.mrf.mxu0
        %v1180 = vadd.f32 0.0, %v1179
        %v1181 = vpop.f32.mrf.mxu0
        %v1182 = vpop.f32.mrf.mxu0
        %v1183 = vadd.f32 0.0, %v1182
        %v1184 = vpop.f32.mrf.mxu0
        %1185 = vmatprep.mubr.bf16.mxu0 0
        %1186 = vmatmul.mubr.bf16.gmra.mxu0 %v1038
        %v1187 = vpop.f32.mrf.mxu0
        %v1188 = vadd.f32 0.0, %v1187
        %v1189 = vpop.f32.mrf.mxu0
        %v1190 = vpop.f32.mrf.mxu0
        %v1191 = vadd.f32 0.0, %v1190
        %v1192 = vpop.f32.mrf.mxu0
        %1193 = vmatprep.mubr.bf16.mxu0 0
        %1194 = vmatmul.mubr.bf16.gmra.mxu0 %v1039
        %v1195 = vpop.f32.mrf.mxu0
        %v1196 = vadd.f32 0.0, %v1195
        %v1197 = vpop.f32.mrf.mxu0
        %v1198 = vpop.f32.mrf.mxu0
        %v1199 = vadd.f32 0.0, %v1198
        %v1200 = vpop.f32.mrf.mxu0
        %1201 = vmatprep.mubr.bf16.mxu0 0
        %1202 = vmatmul.mubr.bf16.gmra.mxu0 %v1040
        %v1203 = vpop.f32.mrf.mxu0
        %v1204 = vadd.f32 0.0, %v1203
        %v1205 = vpop.f32.mrf.mxu0
        %v1206 = vpop.f32.mrf.mxu0
        %v1207 = vadd.f32 0.0, %v1206
        %v1208 = vpop.f32.mrf.mxu0
        %1209 = vmatprep.mubr.bf16.mxu0 0
        %1210 = vmatmul.mubr.bf16.gmra.mxu0 %v1041
        %v1211 = vpop.f32.mrf.mxu0
        %v1212 = vadd.f32 0.0, %v1211
        %v1213 = vpop.f32.mrf.mxu0
        %v1214 = vpop.f32.mrf.mxu0
        %v1215 = vadd.f32 0.0, %v1214
        %v1216 = vpop.f32.mrf.mxu0
        %1217 = vmatprep.mubr.bf16.mxu0 0
        %1218 = vmatmul.mubr.bf16.gmra.mxu0 %v1042
        %v1219 = vpop.f32.mrf.mxu0
        %v1220 = vadd.f32 0.0, %v1219
        %v1221 = vpop.f32.mrf.mxu0
        %v1222 = vpop.f32.mrf.mxu0
        %v1223 = vadd.f32 0.0, %v1222
        %v1224 = vpop.f32.mrf.mxu0
        %1225 = vmatprep.mubr.bf16.mxu0 0
        %1226 = vmatmul.mubr.bf16.gmra.mxu0 %v1043
        %v1227 = vpop.f32.mrf.mxu0
        %v1228 = vadd.f32 0.0, %v1227
        %v1229 = vpop.f32.mrf.mxu0
        %v1230 = vpop.f32.mrf.mxu0
        %v1231 = vadd.f32 0.0, %v1230
        %v1232 = vpop.f32.mrf.mxu0
        %1233 = vmatprep.mubr.bf16.mxu0 0
        %1234 = vmatmul.mubr.bf16.gmra.mxu0 %v1044
        %v1235 = vpop.f32.mrf.mxu0
        %v1236 = vadd.f32 0.0, %v1235
        %v1237 = vpop.f32.mrf.mxu0
        %v1238 = vpop.f32.mrf.mxu0
        %v1239 = vadd.f32 0.0, %v1238
        %v1240 = vpop.f32.mrf.mxu0
        %1241 = vmatprep.mubr.bf16.mxu0 0
        %1242 = vmatmul.mubr.bf16.gmra.mxu0 %v1045
        %v1243 = vpop.f32.mrf.mxu0
        %v1244 = vadd.f32 0.0, %v1243
        %v1245 = vpop.f32.mrf.mxu0
        %v1246 = vpop.f32.mrf.mxu0
        %v1247 = vadd.f32 0.0, %v1246
        %v1248 = vpop.f32.mrf.mxu0
        %1249 = vmatprep.mubr.bf16.mxu0 0
        %1250 = vmatmul.mubr.bf16.gmra.mxu0 %v1046
        %v1251 = vpop.f32.mrf.mxu0
        %v1252 = vadd.f32 0.0, %v1251
        %v1253 = vpop.f32.mrf.mxu0
        %v1254 = vpop.f32.mrf.mxu0
        %v1255 = vadd.f32 0.0, %v1254
        %v1256 = vpop.f32.mrf.mxu0
        %1257 = vmatprep.mubr.bf16.mxu0 0
        %1258 = vmatmul.mubr.bf16.gmra.mxu0 %v1047
        %v1259 = vpop.f32.mrf.mxu0
        %v1260 = vadd.f32 0.0, %v1259
        %v1261 = vpop.f32.mrf.mxu0
        %v1262 = vpop.f32.mrf.mxu0
        %v1263 = vadd.f32 0.0, %v1262
        %v1264 = vpop.f32.mrf.mxu0
        %1265 = vmatprep.mubr.bf16.mxu0 0
        %1266 = vmatmul.mubr.bf16.gmra.mxu0 %v1048
        %v1267 = vpop.f32.mrf.mxu0
        %v1268 = vadd.f32 0.0, %v1267
        %v1269 = vpop.f32.mrf.mxu0
        %v1270 = vpop.f32.mrf.mxu0
        %v1271 = vadd.f32 0.0, %v1270
        %v1272 = vpop.f32.mrf.mxu0
        %1273 = vdwg.mxu0
        %v1274 = vadd.f32 %v565, %v1148
        %v1275 = vadd.f32 %v566, %v1151
        %v1276 = vadd.f32 %v567, %v1156
        %v1277 = vadd.f32 %v568, %v1159
        %v1278 = vadd.f32 %v569, %v1164
        %v1279 = vadd.f32 %v570, %v1167
        %v1280 = vadd.f32 %v571, %v1172
        %v1281 = vadd.f32 %v572, %v1175
        %v1282 = vadd.f32 %v573, %v1180
        %v1283 = vadd.f32 %v574, %v1183
        %v1284 = vadd.f32 %v575, %v1188
        %v1285 = vadd.f32 %v576, %v1191
        %v1286 = vadd.f32 %v577, %v1196
        %v1287 = vadd.f32 %v578, %v1199
        %v1288 = vadd.f32 %v579, %v1204
        %v1289 = vadd.f32 %v580, %v1207
        %v1290 = vadd.f32 %v581, %v1212
        %v1291 = vadd.f32 %v582, %v1215
        %v1292 = vadd.f32 %v583, %v1220
        %v1293 = vadd.f32 %v584, %v1223
        %v1294 = vadd.f32 %v585, %v1228
        %v1295 = vadd.f32 %v586, %v1231
        %v1296 = vadd.f32 %v587, %v1236
        %v1297 = vadd.f32 %v588, %v1239
        %v1298 = vadd.f32 %v589, %v1244
        %v1299 = vadd.f32 %v590, %v1247
        %v1300 = vadd.f32 %v591, %v1252
        %v1301 = vadd.f32 %v592, %v1255
        %v1302 = vadd.f32 %v593, %v1260
        %v1303 = vadd.f32 %v594, %v1263
        %v1304 = vadd.f32 %v595, %v1268
        %v1305 = vadd.f32 %v596, %v1271
        %vm1322 = vcmask 1042432
        %vm1323 = vcmask 1046532
        %vm1324 = vmor %vm1322, %vm1323
        %v1325 = vrot.slane %v196, 5
        %v1326 = vrot.slane %v1325, 4
        %v1327 = vrot.slane %v197, 5
        %v1328 = vsel %vm1324, %v1326, %v1327
        %v1329 = vrot.slane %v1327, 4
        %v1330 = vrot.slane %v198, 5
        %v1331 = vsel %vm1324, %v1329, %v1330
        %v1332 = vrot.slane %v199, 5
        %v1333 = vrot.slane %v1332, 4
        %v1334 = vrot.slane %v200, 5
        %v1335 = vsel %vm1324, %v1333, %v1334
        %v1336 = vrot.slane %v1334, 4
        %v1337 = vrot.slane %v201, 5
        %v1338 = vsel %vm1324, %v1336, %v1337
        %v1339 = vrot.slane %v202, 5
        %v1340 = vrot.slane %v1339, 4
        %v1341 = vrot.slane %v203, 5
        %v1342 = vsel %vm1324, %v1340, %v1341
        %v1343 = vrot.slane %v1341, 4
        %v1344 = vrot.slane %v204, 5
        %v1345 = vsel %vm1324, %v1343, %v1344
        %v1346 = vrot.slane %v205, 5
        %v1347 = vrot.slane %v1346, 4
        %v1348 = vrot.slane %v206, 5
        %v1349 = vsel %vm1324, %v1347, %v1348
        %v1350 = vrot.slane %v1348, 4
        %v1351 = vrot.slane %v207, 5
        %v1352 = vsel %vm1324, %v1350, %v1351
        %v1353 = vrot.slane %v208, 5
        %v1354 = vrot.slane %v1353, 4
        %v1355 = vrot.slane %v209, 5
        %v1356 = vsel %vm1324, %v1354, %v1355
        %v1357 = vrot.slane %v1355, 4
        %v1358 = vrot.slane %v210, 5
        %v1359 = vsel %vm1324, %v1357, %v1358
        %v1360 = vrot.slane %v211, 5
        %v1361 = vrot.slane %v1360, 4
        %v1362 = vrot.slane %v212, 5
        %v1363 = vsel %vm1324, %v1361, %v1362
        %v1364 = vrot.slane %v1362, 4
        %v1365 = vrot.slane %v213, 5
        %v1366 = vsel %vm1324, %v1364, %v1365
        %v1367 = vrot.slane %v214, 5
        %v1368 = vrot.slane %v1367, 4
        %v1369 = vrot.slane %v215, 5
        %v1370 = vsel %vm1324, %v1368, %v1369
        %v1371 = vrot.slane %v1369, 4
        %v1372 = vrot.slane %v216, 5
        %v1373 = vsel %vm1324, %v1371, %v1372
        %v1374 = vrot.slane %v217, 5
        %v1375 = vrot.slane %v1374, 4
        %v1376 = vrot.slane %v218, 5
        %v1377 = vsel %vm1324, %v1375, %v1376
        %v1378 = vrot.slane %v1376, 4
        %v1379 = vrot.slane %v219, 5
        %v1380 = vsel %vm1324, %v1378, %v1379
        %v1381 = vrot.slane %v220, 5
        %v1382 = vrot.slane %v1381, 4
        %v1383 = vrot.slane %v221, 5
        %v1384 = vsel %vm1324, %v1382, %v1383
        %v1385 = vrot.slane %v1383, 4
        %v1386 = vrot.slane %v222, 5
        %v1387 = vsel %vm1324, %v1385, %v1386
        %v1388 = vrot.slane %v223, 5
        %v1389 = vrot.slane %v1388, 4
        %v1390 = vrot.slane %v224, 5
        %v1391 = vsel %vm1324, %v1389, %v1390
        %v1392 = vrot.slane %v1390, 4
        %v1393 = vrot.slane %v225, 5
        %v1394 = vsel %vm1324, %v1392, %v1393
        %v1395 = vrot.slane %v226, 5
        %v1396 = vrot.slane %v1395, 4
        %v1397 = vrot.slane %v227, 5
        %v1398 = vsel %vm1324, %v1396, %v1397
        %v1399 = vrot.slane %v1397, 4
        %v1400 = vrot.slane %v228, 5
        %v1401 = vsel %vm1324, %v1399, %v1400
        %v1402 = vrot.slane %v229, 5
        %v1403 = vrot.slane %v1402, 4
        %v1404 = vrot.slane %v230, 5
        %v1405 = vsel %vm1324, %v1403, %v1404
        %v1406 = vrot.slane %v1404, 4
        %v1407 = vrot.slane %v231, 5
        %v1408 = vsel %vm1324, %v1406, %v1407
        %v1409 = vrot.slane %v232, 5
        %v1410 = vrot.slane %v1409, 4
        %v1411 = vrot.slane %v233, 5
        %v1412 = vsel %vm1324, %v1410, %v1411
        %v1413 = vrot.slane %v1411, 4
        %v1414 = vrot.slane %v234, 5
        %v1415 = vsel %vm1324, %v1413, %v1414
        %v1416 = vrot.slane %v235, 5
        %v1417 = vrot.slane %v1416, 4
        %v1418 = vrot.slane %v236, 5
        %v1419 = vsel %vm1324, %v1417, %v1418
        %v1420 = vrot.slane %v1418, 4
        %v1421 = vrot.slane %v237, 5
        %v1422 = vsel %vm1324, %v1420, %v1421
        %v1423 = vrot.slane %v238, 5
        %v1424 = vrot.slane %v1423, 4
        %v1425 = vrot.slane %v239, 5
        %v1426 = vsel %vm1324, %v1424, %v1425
        %v1427 = vrot.slane %v1425, 4
        %v1428 = vrot.slane %v240, 5
        %v1429 = vsel %vm1324, %v1427, %v1428
        %v1430 = vrot.slane %v241, 5
        %v1431 = vrot.slane %v1430, 4
        %v1432 = vrot.slane %v242, 5
        %v1433 = vsel %vm1324, %v1431, %v1432
        %v1434 = vrot.slane %v1432, 4
        %v1435 = vrot.slane %v243, 5
        %v1436 = vsel %vm1324, %v1434, %v1435
        %s1437 = scalar_lea.vmem %s1, 128
        %v1438 = vld [vmem:[%s1437] sm:$0xf]
        %v1439 = vld [vmem:[%s1437 + $0x4] sm:$0xf]
        %v1440 = vld [vmem:[%s1437 + $0x8] sm:$0xf]
        %v1441 = vld [vmem:[%s1437 + $0xc] sm:$0xf]
        %v1442 = vld [vmem:[%s1437 + $0x10] sm:$0xf]
        %v1443 = vld [vmem:[%s1437 + $0x14] sm:$0xf]
        %v1444 = vld [vmem:[%s1437 + $0x18] sm:$0xf]
        %v1445 = vld [vmem:[%s1437 + $0x1c] sm:$0xf]
        %v1446 = vld [vmem:[%s1437 + $0x20] sm:$0xf]
        %v1447 = vld [vmem:[%s1437 + $0x24] sm:$0xf]
        %v1448 = vld [vmem:[%s1437 + $0x28] sm:$0xf]
        %v1449 = vld [vmem:[%s1437 + $0x2c] sm:$0xf]
        %v1450 = vld [vmem:[%s1437 + $0x30] sm:$0xf]
        %v1451 = vld [vmem:[%s1437 + $0x34] sm:$0xf]
        %v1452 = vld [vmem:[%s1437 + $0x38] sm:$0xf]
        %v1453 = vld [vmem:[%s1437 + $0x3c] sm:$0xf]
        %v1454 = vunpack.c.l.b16 %v1328
        %v1455 = vunpack.c.l.b16 %v1331
        %v1456 = vunpack.c.l.b16 %v1335
        %v1457 = vunpack.c.l.b16 %v1338
        %v1458 = vunpack.c.l.b16 %v1342
        %v1459 = vunpack.c.l.b16 %v1345
        %v1460 = vunpack.c.l.b16 %v1349
        %v1461 = vunpack.c.l.b16 %v1352
        %v1462 = vunpack.c.l.b16 %v1356
        %v1463 = vunpack.c.l.b16 %v1359
        %v1464 = vunpack.c.l.b16 %v1363
        %v1465 = vunpack.c.l.b16 %v1366
        %v1466 = vunpack.c.l.b16 %v1370
        %v1467 = vunpack.c.l.b16 %v1373
        %v1468 = vunpack.c.l.b16 %v1377
        %v1469 = vunpack.c.l.b16 %v1380
        %v1470 = vunpack.c.l.b16 %v1384
        %v1471 = vunpack.c.l.b16 %v1387
        %v1472 = vunpack.c.l.b16 %v1391
        %v1473 = vunpack.c.l.b16 %v1394
        %v1474 = vunpack.c.l.b16 %v1398
        %v1475 = vunpack.c.l.b16 %v1401
        %v1476 = vunpack.c.l.b16 %v1405
        %v1477 = vunpack.c.l.b16 %v1408
        %v1478 = vunpack.c.l.b16 %v1412
        %v1479 = vunpack.c.l.b16 %v1415
        %v1480 = vunpack.c.l.b16 %v1419
        %v1481 = vunpack.c.l.b16 %v1422
        %v1482 = vunpack.c.l.b16 %v1426
        %v1483 = vunpack.c.l.b16 %v1429
        %v1484 = vunpack.c.l.b16 %v1433
        %v1485 = vunpack.c.l.b16 %v1436
        %v1486 = vpack.c.b16 %v1455, %v1454
        %v1487 = vpack.c.b16 %v1457, %v1456
        %v1488 = vpack.c.b16 %v1459, %v1458
        %v1489 = vpack.c.b16 %v1461, %v1460
        %v1490 = vpack.c.b16 %v1463, %v1462
        %v1491 = vpack.c.b16 %v1465, %v1464
        %v1492 = vpack.c.b16 %v1467, %v1466
        %v1493 = vpack.c.b16 %v1469, %v1468
        %v1494 = vpack.c.b16 %v1471, %v1470
        %v1495 = vpack.c.b16 %v1473, %v1472
        %v1496 = vpack.c.b16 %v1475, %v1474
        %v1497 = vpack.c.b16 %v1477, %v1476
        %v1498 = vpack.c.b16 %v1479, %v1478
        %v1499 = vpack.c.b16 %v1481, %v1480
        %v1500 = vpack.c.b16 %v1483, %v1482
        %v1501 = vpack.c.b16 %v1485, %v1484
        %v1534 = vunpack.c.l.b16 %v1438
        %v1535 = vunpack.c.l.b16 %v1439
        %v1536 = vunpack.c.l.b16 %v1440
        %v1537 = vunpack.c.l.b16 %v1441
        %v1538 = vunpack.c.l.b16 %v1442
        %v1539 = vunpack.c.l.b16 %v1443
        %v1540 = vunpack.c.l.b16 %v1444
        %v1541 = vunpack.c.l.b16 %v1445
        %v1542 = vunpack.c.l.b16 %v1446
        %v1543 = vunpack.c.l.b16 %v1447
        %v1544 = vunpack.c.l.b16 %v1448
        %v1545 = vunpack.c.l.b16 %v1449
        %v1546 = vunpack.c.l.b16 %v1450
        %v1547 = vunpack.c.l.b16 %v1451
        %v1548 = vunpack.c.l.b16 %v1452
        %v1549 = vunpack.c.l.b16 %v1453
        %v1550 = vpack.c.b16 %v1535, %v1534
        %v1551 = vpack.c.b16 %v1537, %v1536
        %v1552 = vpack.c.b16 %v1539, %v1538
        %v1553 = vpack.c.b16 %v1541, %v1540
        %v1554 = vpack.c.b16 %v1543, %v1542
        %v1555 = vpack.c.b16 %v1545, %v1544
        %v1556 = vpack.c.b16 %v1547, %v1546
        %v1557 = vpack.c.b16 %v1549, %v1548
        %1566 = vmatprep.subr.bf16.mxu0 0
        %1567 = vmatpush1.bf16.msra.mxu0 %v1557
        %1568 = vmatprep.subr.bf16.mxu0 0
        %1569 = vmatpush1.bf16.msra.mxu0 %v1556
        %1570 = vmatprep.subr.bf16.mxu0 0
        %1571 = vmatpush1.bf16.msra.mxu0 %v1555
        %1572 = vmatprep.subr.bf16.mxu0 0
        %1573 = vmatpush1.bf16.msra.mxu0 %v1554
        %1574 = vmatprep.subr.bf16.mxu0 0
        %1575 = vmatpush1.bf16.msra.mxu0 %v1553
        %1576 = vmatprep.subr.bf16.mxu0 0
        %1577 = vmatpush1.bf16.msra.mxu0 %v1552
        %1578 = vmatprep.subr.bf16.mxu0 0
        %1579 = vmatpush1.bf16.msra.mxu0 %v1551
        %1580 = vmatprep.subr.bf16.mxu0 0
        %1581 = vmatpush1.bf16.msra.mxu0 %v1550
        %1582 = vmatprep.subr.bf16.mxu0 0
        %1583 = vmatpush2.bf16.msra.mxu0 0
        %1584 = vmatprep.subr.bf16.mxu0 0
        %1585 = vmatpush2.bf16.msra.mxu0 0
        %1586 = vmatprep.subr.bf16.mxu0 0
        %1587 = vmatpush2.bf16.msra.mxu0 0
        %1588 = vmatprep.subr.bf16.mxu0 0
        %1589 = vmatpush2.bf16.msra.mxu0 0
        %1590 = vmatprep.subr.bf16.mxu0 0
        %1591 = vmatpush2.bf16.msra.mxu0 0
        %1592 = vmatprep.subr.bf16.mxu0 0
        %1593 = vmatpush2.bf16.msra.mxu0 0
        %1594 = vmatprep.subr.bf16.mxu0 0
        %1595 = vmatpush2.bf16.msra.mxu0 0
        %1596 = vmatprep.subr.bf16.mxu0 0
        %1597 = vmatpush2.bf16.msra.mxu0 0
        %1598 = vmatprep.mubr.bf16.mxu0 0
        %1599 = vmatmul.mubr.bf16.gmra.mxu0 %v1486
        %v1600 = vpop.f32.mrf.mxu0
        %v1601 = vadd.f32 0.0, %v1600
        %v1602 = vpop.f32.mrf.mxu0
        %v1603 = vpop.f32.mrf.mxu0
        %v1604 = vadd.f32 0.0, %v1603
        %v1605 = vpop.f32.mrf.mxu0
        %1606 = vmatprep.mubr.bf16.mxu0 0
        %1607 = vmatmul.mubr.bf16.gmra.mxu0 %v1487
        %v1608 = vpop.f32.mrf.mxu0
        %v1609 = vadd.f32 0.0, %v1608
        %v1610 = vpop.f32.mrf.mxu0
        %v1611 = vpop.f32.mrf.mxu0
        %v1612 = vadd.f32 0.0, %v1611
        %v1613 = vpop.f32.mrf.mxu0
        %1614 = vmatprep.mubr.bf16.mxu0 0
        %1615 = vmatmul.mubr.bf16.gmra.mxu0 %v1488
        %v1616 = vpop.f32.mrf.mxu0
        %v1617 = vadd.f32 0.0, %v1616
        %v1618 = vpop.f32.mrf.mxu0
        %v1619 = vpop.f32.mrf.mxu0
        %v1620 = vadd.f32 0.0, %v1619
        %v1621 = vpop.f32.mrf.mxu0
        %1622 = vmatprep.mubr.bf16.mxu0 0
        %1623 = vmatmul.mubr.bf16.gmra.mxu0 %v1489
        %v1624 = vpop.f32.mrf.mxu0
        %v1625 = vadd.f32 0.0, %v1624
        %v1626 = vpop.f32.mrf.mxu0
        %v1627 = vpop.f32.mrf.mxu0
        %v1628 = vadd.f32 0.0, %v1627
        %v1629 = vpop.f32.mrf.mxu0
        %1630 = vmatprep.mubr.bf16.mxu0 0
        %1631 = vmatmul.mubr.bf16.gmra.mxu0 %v1490
        %v1632 = vpop.f32.mrf.mxu0
        %v1633 = vadd.f32 0.0, %v1632
        %v1634 = vpop.f32.mrf.mxu0
        %v1635 = vpop.f32.mrf.mxu0
        %v1636 = vadd.f32 0.0, %v1635
        %v1637 = vpop.f32.mrf.mxu0
        %1638 = vmatprep.mubr.bf16.mxu0 0
        %1639 = vmatmul.mubr.bf16.gmra.mxu0 %v1491
        %v1640 = vpop.f32.mrf.mxu0
        %v1641 = vadd.f32 0.0, %v1640
        %v1642 = vpop.f32.mrf.mxu0
        %v1643 = vpop.f32.mrf.mxu0
        %v1644 = vadd.f32 0.0, %v1643
        %v1645 = vpop.f32.mrf.mxu0
        %1646 = vmatprep.mubr.bf16.mxu0 0
        %1647 = vmatmul.mubr.bf16.gmra.mxu0 %v1492
        %v1648 = vpop.f32.mrf.mxu0
        %v1649 = vadd.f32 0.0, %v1648
        %v1650 = vpop.f32.mrf.mxu0
        %v1651 = vpop.f32.mrf.mxu0
        %v1652 = vadd.f32 0.0, %v1651
        %v1653 = vpop.f32.mrf.mxu0
        %1654 = vmatprep.mubr.bf16.mxu0 0
        %1655 = vmatmul.mubr.bf16.gmra.mxu0 %v1493
        %v1656 = vpop.f32.mrf.mxu0
        %v1657 = vadd.f32 0.0, %v1656
        %v1658 = vpop.f32.mrf.mxu0
        %v1659 = vpop.f32.mrf.mxu0
        %v1660 = vadd.f32 0.0, %v1659
        %v1661 = vpop.f32.mrf.mxu0
        %1662 = vmatprep.mubr.bf16.mxu0 0
        %1663 = vmatmul.mubr.bf16.gmra.mxu0 %v1494
        %v1664 = vpop.f32.mrf.mxu0
        %v1665 = vadd.f32 0.0, %v1664
        %v1666 = vpop.f32.mrf.mxu0
        %v1667 = vpop.f32.mrf.mxu0
        %v1668 = vadd.f32 0.0, %v1667
        %v1669 = vpop.f32.mrf.mxu0
        %1670 = vmatprep.mubr.bf16.mxu0 0
        %1671 = vmatmul.mubr.bf16.gmra.mxu0 %v1495
        %v1672 = vpop.f32.mrf.mxu0
        %v1673 = vadd.f32 0.0, %v1672
        %v1674 = vpop.f32.mrf.mxu0
        %v1675 = vpop.f32.mrf.mxu0
        %v1676 = vadd.f32 0.0, %v1675
        %v1677 = vpop.f32.mrf.mxu0
        %1678 = vmatprep.mubr.bf16.mxu0 0
        %1679 = vmatmul.mubr.bf16.gmra.mxu0 %v1496
        %v1680 = vpop.f32.mrf.mxu0
        %v1681 = vadd.f32 0.0, %v1680
        %v1682 = vpop.f32.mrf.mxu0
        %v1683 = vpop.f32.mrf.mxu0
        %v1684 = vadd.f32 0.0, %v1683
        %v1685 = vpop.f32.mrf.mxu0
        %1686 = vmatprep.mubr.bf16.mxu0 0
        %1687 = vmatmul.mubr.bf16.gmra.mxu0 %v1497
        %v1688 = vpop.f32.mrf.mxu0
        %v1689 = vadd.f32 0.0, %v1688
        %v1690 = vpop.f32.mrf.mxu0
        %v1691 = vpop.f32.mrf.mxu0
        %v1692 = vadd.f32 0.0, %v1691
        %v1693 = vpop.f32.mrf.mxu0
        %1694 = vmatprep.mubr.bf16.mxu0 0
        %1695 = vmatmul.mubr.bf16.gmra.mxu0 %v1498
        %v1696 = vpop.f32.mrf.mxu0
        %v1697 = vadd.f32 0.0, %v1696
        %v1698 = vpop.f32.mrf.mxu0
        %v1699 = vpop.f32.mrf.mxu0
        %v1700 = vadd.f32 0.0, %v1699
        %v1701 = vpop.f32.mrf.mxu0
        %1702 = vmatprep.mubr.bf16.mxu0 0
        %1703 = vmatmul.mubr.bf16.gmra.mxu0 %v1499
        %v1704 = vpop.f32.mrf.mxu0
        %v1705 = vadd.f32 0.0, %v1704
        %v1706 = vpop.f32.mrf.mxu0
        %v1707 = vpop.f32.mrf.mxu0
        %v1708 = vadd.f32 0.0, %v1707
        %v1709 = vpop.f32.mrf.mxu0
        %1710 = vmatprep.mubr.bf16.mxu0 0
        %1711 = vmatmul.mubr.bf16.gmra.mxu0 %v1500
        %v1712 = vpop.f32.mrf.mxu0
        %v1713 = vadd.f32 0.0, %v1712
        %v1714 = vpop.f32.mrf.mxu0
        %v1715 = vpop.f32.mrf.mxu0
        %v1716 = vadd.f32 0.0, %v1715
        %v1717 = vpop.f32.mrf.mxu0
        %1718 = vmatprep.mubr.bf16.mxu0 0
        %1719 = vmatmul.mubr.bf16.gmra.mxu0 %v1501
        %v1720 = vpop.f32.mrf.mxu0
        %v1721 = vadd.f32 0.0, %v1720
        %v1722 = vpop.f32.mrf.mxu0
        %v1723 = vpop.f32.mrf.mxu0
        %v1724 = vadd.f32 0.0, %v1723
        %v1725 = vpop.f32.mrf.mxu0
        %1726 = vdwg.mxu0
        %v1727 = vadd.f32 %v1274, %v1601
        %v1728 = vadd.f32 %v1275, %v1604
        %v1729 = vadd.f32 %v1276, %v1609
        %v1730 = vadd.f32 %v1277, %v1612
        %v1731 = vadd.f32 %v1278, %v1617
        %v1732 = vadd.f32 %v1279, %v1620
        %v1733 = vadd.f32 %v1280, %v1625
        %v1734 = vadd.f32 %v1281, %v1628
        %v1735 = vadd.f32 %v1282, %v1633
        %v1736 = vadd.f32 %v1283, %v1636
        %v1737 = vadd.f32 %v1284, %v1641
        %v1738 = vadd.f32 %v1285, %v1644
        %v1739 = vadd.f32 %v1286, %v1649
        %v1740 = vadd.f32 %v1287, %v1652
        %v1741 = vadd.f32 %v1288, %v1657
        %v1742 = vadd.f32 %v1289, %v1660
        %v1743 = vadd.f32 %v1290, %v1665
        %v1744 = vadd.f32 %v1291, %v1668
        %v1745 = vadd.f32 %v1292, %v1673
        %v1746 = vadd.f32 %v1293, %v1676
        %v1747 = vadd.f32 %v1294, %v1681
        %v1748 = vadd.f32 %v1295, %v1684
        %v1749 = vadd.f32 %v1296, %v1689
        %v1750 = vadd.f32 %v1297, %v1692
        %v1751 = vadd.f32 %v1298, %v1697
        %v1752 = vadd.f32 %v1299, %v1700
        %v1753 = vadd.f32 %v1300, %v1705
        %v1754 = vadd.f32 %v1301, %v1708
        %v1755 = vadd.f32 %v1302, %v1713
        %v1756 = vadd.f32 %v1303, %v1716
        %v1757 = vadd.f32 %v1304, %v1721
        %v1758 = vadd.f32 %v1305, %v1724
        %s1759 = sadd.s32 %s185, 1
        %s1760 = smul.u32 %s1759, 3
        %s1761 = smul.addr %s1760, 4
        %s1762 = scalar_lea.vmem %s182, %s1761
        %v1763 = vld [vmem:[%s1762] sm:$0xf]
        %v1764 = vld [vmem:[%s1762 + $0x4] sm:$0xf]
        %v1765 = vld [vmem:[%s1762 + $0x8] sm:$0x1]
        %v1766 = vld [vmem:[%s1762 + $0xc] sm:$0xf]
        %v1767 = vld [vmem:[%s1762 + $0x10] sm:$0xf]
        %v1768 = vld [vmem:[%s1762 + $0x14] sm:$0x1]
        %v1769 = vld [vmem:[%s1762 + $0x18] sm:$0xf]
        %v1770 = vld [vmem:[%s1762 + $0x1c] sm:$0xf]
        %v1771 = vld [vmem:[%s1762 + $0x20] sm:$0x1]
        %v1772 = vld [vmem:[%s1762 + $0x24] sm:$0xf]
        %v1773 = vld [vmem:[%s1762 + $0x28] sm:$0xf]
        %v1774 = vld [vmem:[%s1762 + $0x2c] sm:$0x1]
        %v1775 = vld [vmem:[%s1762 + $0x30] sm:$0xf]
        %v1776 = vld [vmem:[%s1762 + $0x34] sm:$0xf]
        %v1777 = vld [vmem:[%s1762 + $0x38] sm:$0x1]
        %v1778 = vld [vmem:[%s1762 + $0x3c] sm:$0xf]
        %v1779 = vld [vmem:[%s1762 + $0x40] sm:$0xf]
        %v1780 = vld [vmem:[%s1762 + $0x44] sm:$0x1]
        %v1781 = vld [vmem:[%s1762 + $0x48] sm:$0xf]
        %v1782 = vld [vmem:[%s1762 + $0x4c] sm:$0xf]
        %v1783 = vld [vmem:[%s1762 + $0x50] sm:$0x1]
        %v1784 = vld [vmem:[%s1762 + $0x54] sm:$0xf]
        %v1785 = vld [vmem:[%s1762 + $0x58] sm:$0xf]
        %v1786 = vld [vmem:[%s1762 + $0x5c] sm:$0x1]
        %v1787 = vld [vmem:[%s1762 + $0x60] sm:$0xf]
        %v1788 = vld [vmem:[%s1762 + $0x64] sm:$0xf]
        %v1789 = vld [vmem:[%s1762 + $0x68] sm:$0x1]
        %v1790 = vld [vmem:[%s1762 + $0x6c] sm:$0xf]
        %v1791 = vld [vmem:[%s1762 + $0x70] sm:$0xf]
        %v1792 = vld [vmem:[%s1762 + $0x74] sm:$0x1]
        %v1793 = vld [vmem:[%s1762 + $0x78] sm:$0xf]
        %v1794 = vld [vmem:[%s1762 + $0x7c] sm:$0xf]
        %v1795 = vld [vmem:[%s1762 + $0x80] sm:$0x1]
        %v1796 = vld [vmem:[%s1762 + $0x84] sm:$0xf]
        %v1797 = vld [vmem:[%s1762 + $0x88] sm:$0xf]
        %v1798 = vld [vmem:[%s1762 + $0x8c] sm:$0x1]
        %v1799 = vld [vmem:[%s1762 + $0x90] sm:$0xf]
        %v1800 = vld [vmem:[%s1762 + $0x94] sm:$0xf]
        %v1801 = vld [vmem:[%s1762 + $0x98] sm:$0x1]
        %v1802 = vld [vmem:[%s1762 + $0x9c] sm:$0xf]
        %v1803 = vld [vmem:[%s1762 + $0xa0] sm:$0xf]
        %v1804 = vld [vmem:[%s1762 + $0xa4] sm:$0x1]
        %v1805 = vld [vmem:[%s1762 + $0xa8] sm:$0xf]
        %v1806 = vld [vmem:[%s1762 + $0xac] sm:$0xf]
        %v1807 = vld [vmem:[%s1762 + $0xb0] sm:$0x1]
        %v1808 = vld [vmem:[%s1762 + $0xb4] sm:$0xf]
        %v1809 = vld [vmem:[%s1762 + $0xb8] sm:$0xf]
        %v1810 = vld [vmem:[%s1762 + $0xbc] sm:$0x1]
        %s1811 = scalar_lea.vmem %s1, 192
        %v1812 = vld [vmem:[%s1811] sm:$0xf]
        %v1813 = vld [vmem:[%s1811 + $0x4] sm:$0xf]
        %v1814 = vld [vmem:[%s1811 + $0x8] sm:$0xf]
        %v1815 = vld [vmem:[%s1811 + $0xc] sm:$0xf]
        %v1816 = vld [vmem:[%s1811 + $0x10] sm:$0xf]
        %v1817 = vld [vmem:[%s1811 + $0x14] sm:$0xf]
        %v1818 = vld [vmem:[%s1811 + $0x18] sm:$0xf]
        %v1819 = vld [vmem:[%s1811 + $0x1c] sm:$0xf]
        %v1820 = vld [vmem:[%s1811 + $0x20] sm:$0xf]
        %v1821 = vld [vmem:[%s1811 + $0x24] sm:$0xf]
        %v1822 = vld [vmem:[%s1811 + $0x28] sm:$0xf]
        %v1823 = vld [vmem:[%s1811 + $0x2c] sm:$0xf]
        %v1824 = vld [vmem:[%s1811 + $0x30] sm:$0xf]
        %v1825 = vld [vmem:[%s1811 + $0x34] sm:$0xf]
        %v1826 = vld [vmem:[%s1811 + $0x38] sm:$0xf]
        %v1827 = vld [vmem:[%s1811 + $0x3c] sm:$0xf]
        %v1860 = vunpack.c.l.b16 %v1763
        %v1861 = vunpack.c.l.b16 %v1764
        %v1862 = vunpack.c.l.b16 %v1766
        %v1863 = vunpack.c.l.b16 %v1767
        %v1864 = vunpack.c.l.b16 %v1769
        %v1865 = vunpack.c.l.b16 %v1770
        %v1866 = vunpack.c.l.b16 %v1772
        %v1867 = vunpack.c.l.b16 %v1773
        %v1868 = vunpack.c.l.b16 %v1775
        %v1869 = vunpack.c.l.b16 %v1776
        %v1870 = vunpack.c.l.b16 %v1778
        %v1871 = vunpack.c.l.b16 %v1779
        %v1872 = vunpack.c.l.b16 %v1781
        %v1873 = vunpack.c.l.b16 %v1782
        %v1874 = vunpack.c.l.b16 %v1784
        %v1875 = vunpack.c.l.b16 %v1785
        %v1876 = vunpack.c.l.b16 %v1787
        %v1877 = vunpack.c.l.b16 %v1788
        %v1878 = vunpack.c.l.b16 %v1790
        %v1879 = vunpack.c.l.b16 %v1791
        %v1880 = vunpack.c.l.b16 %v1793
        %v1881 = vunpack.c.l.b16 %v1794
        %v1882 = vunpack.c.l.b16 %v1796
        %v1883 = vunpack.c.l.b16 %v1797
        %v1884 = vunpack.c.l.b16 %v1799
        %v1885 = vunpack.c.l.b16 %v1800
        %v1886 = vunpack.c.l.b16 %v1802
        %v1887 = vunpack.c.l.b16 %v1803
        %v1888 = vunpack.c.l.b16 %v1805
        %v1889 = vunpack.c.l.b16 %v1806
        %v1890 = vunpack.c.l.b16 %v1808
        %v1891 = vunpack.c.l.b16 %v1809
        %v1892 = vpack.c.b16 %v1861, %v1860
        %v1893 = vpack.c.b16 %v1863, %v1862
        %v1894 = vpack.c.b16 %v1865, %v1864
        %v1895 = vpack.c.b16 %v1867, %v1866
        %v1896 = vpack.c.b16 %v1869, %v1868
        %v1897 = vpack.c.b16 %v1871, %v1870
        %v1898 = vpack.c.b16 %v1873, %v1872
        %v1899 = vpack.c.b16 %v1875, %v1874
        %v1900 = vpack.c.b16 %v1877, %v1876
        %v1901 = vpack.c.b16 %v1879, %v1878
        %v1902 = vpack.c.b16 %v1881, %v1880
        %v1903 = vpack.c.b16 %v1883, %v1882
        %v1904 = vpack.c.b16 %v1885, %v1884
        %v1905 = vpack.c.b16 %v1887, %v1886
        %v1906 = vpack.c.b16 %v1889, %v1888
        %v1907 = vpack.c.b16 %v1891, %v1890
        %v1940 = vunpack.c.l.b16 %v1812
        %v1941 = vunpack.c.l.b16 %v1813
        %v1942 = vunpack.c.l.b16 %v1814
        %v1943 = vunpack.c.l.b16 %v1815
        %v1944 = vunpack.c.l.b16 %v1816
        %v1945 = vunpack.c.l.b16 %v1817
        %v1946 = vunpack.c.l.b16 %v1818
        %v1947 = vunpack.c.l.b16 %v1819
        %v1948 = vunpack.c.l.b16 %v1820
        %v1949 = vunpack.c.l.b16 %v1821
        %v1950 = vunpack.c.l.b16 %v1822
        %v1951 = vunpack.c.l.b16 %v1823
        %v1952 = vunpack.c.l.b16 %v1824
        %v1953 = vunpack.c.l.b16 %v1825
        %v1954 = vunpack.c.l.b16 %v1826
        %v1955 = vunpack.c.l.b16 %v1827
        %v1956 = vpack.c.b16 %v1941, %v1940
        %v1957 = vpack.c.b16 %v1943, %v1942
        %v1958 = vpack.c.b16 %v1945, %v1944
        %v1959 = vpack.c.b16 %v1947, %v1946
        %v1960 = vpack.c.b16 %v1949, %v1948
        %v1961 = vpack.c.b16 %v1951, %v1950
        %v1962 = vpack.c.b16 %v1953, %v1952
        %v1963 = vpack.c.b16 %v1955, %v1954
        %1972 = vmatprep.subr.bf16.mxu0 0
        %1973 = vmatpush1.bf16.msra.mxu0 %v1963
        %1974 = vmatprep.subr.bf16.mxu0 0
        %1975 = vmatpush1.bf16.msra.mxu0 %v1962
        %1976 = vmatprep.subr.bf16.mxu0 0
        %1977 = vmatpush1.bf16.msra.mxu0 %v1961
        %1978 = vmatprep.subr.bf16.mxu0 0
        %1979 = vmatpush1.bf16.msra.mxu0 %v1960
        %1980 = vmatprep.subr.bf16.mxu0 0
        %1981 = vmatpush1.bf16.msra.mxu0 %v1959
        %1982 = vmatprep.subr.bf16.mxu0 0
        %1983 = vmatpush1.bf16.msra.mxu0 %v1958
        %1984 = vmatprep.subr.bf16.mxu0 0
        %1985 = vmatpush1.bf16.msra.mxu0 %v1957
        %1986 = vmatprep.subr.bf16.mxu0 0
        %1987 = vmatpush1.bf16.msra.mxu0 %v1956
        %1988 = vmatprep.subr.bf16.mxu0 0
        %1989 = vmatpush2.bf16.msra.mxu0 0
        %1990 = vmatprep.subr.bf16.mxu0 0
        %1991 = vmatpush2.bf16.msra.mxu0 0
        %1992 = vmatprep.subr.bf16.mxu0 0
        %1993 = vmatpush2.bf16.msra.mxu0 0
        %1994 = vmatprep.subr.bf16.mxu0 0
        %1995 = vmatpush2.bf16.msra.mxu0 0
        %1996 = vmatprep.subr.bf16.mxu0 0
        %1997 = vmatpush2.bf16.msra.mxu0 0
        %1998 = vmatprep.subr.bf16.mxu0 0
        %1999 = vmatpush2.bf16.msra.mxu0 0
        %2000 = vmatprep.subr.bf16.mxu0 0
        %2001 = vmatpush2.bf16.msra.mxu0 0
        %2002 = vmatprep.subr.bf16.mxu0 0
        %2003 = vmatpush2.bf16.msra.mxu0 0
        %2004 = vmatprep.mubr.bf16.mxu0 0
        %2005 = vmatmul.mubr.bf16.gmra.mxu0 %v1892
        %v2006 = vpop.f32.mrf.mxu0
        %v2007 = vadd.f32 0.0, %v2006
        %v2008 = vpop.f32.mrf.mxu0
        %v2009 = vpop.f32.mrf.mxu0
        %v2010 = vadd.f32 0.0, %v2009
        %v2011 = vpop.f32.mrf.mxu0
        %2012 = vmatprep.mubr.bf16.mxu0 0
        %2013 = vmatmul.mubr.bf16.gmra.mxu0 %v1893
        %v2014 = vpop.f32.mrf.mxu0
        %v2015 = vadd.f32 0.0, %v2014
        %v2016 = vpop.f32.mrf.mxu0
        %v2017 = vpop.f32.mrf.mxu0
        %v2018 = vadd.f32 0.0, %v2017
        %v2019 = vpop.f32.mrf.mxu0
        %2020 = vmatprep.mubr.bf16.mxu0 0
        %2021 = vmatmul.mubr.bf16.gmra.mxu0 %v1894
        %v2022 = vpop.f32.mrf.mxu0
        %v2023 = vadd.f32 0.0, %v2022
        %v2024 = vpop.f32.mrf.mxu0
        %v2025 = vpop.f32.mrf.mxu0
        %v2026 = vadd.f32 0.0, %v2025
        %v2027 = vpop.f32.mrf.mxu0
        %2028 = vmatprep.mubr.bf16.mxu0 0
        %2029 = vmatmul.mubr.bf16.gmra.mxu0 %v1895
        %v2030 = vpop.f32.mrf.mxu0
        %v2031 = vadd.f32 0.0, %v2030
        %v2032 = vpop.f32.mrf.mxu0
        %v2033 = vpop.f32.mrf.mxu0
        %v2034 = vadd.f32 0.0, %v2033
        %v2035 = vpop.f32.mrf.mxu0
        %2036 = vmatprep.mubr.bf16.mxu0 0
        %2037 = vmatmul.mubr.bf16.gmra.mxu0 %v1896
        %v2038 = vpop.f32.mrf.mxu0
        %v2039 = vadd.f32 0.0, %v2038
        %v2040 = vpop.f32.mrf.mxu0
        %v2041 = vpop.f32.mrf.mxu0
        %v2042 = vadd.f32 0.0, %v2041
        %v2043 = vpop.f32.mrf.mxu0
        %2044 = vmatprep.mubr.bf16.mxu0 0
        %2045 = vmatmul.mubr.bf16.gmra.mxu0 %v1897
        %v2046 = vpop.f32.mrf.mxu0
        %v2047 = vadd.f32 0.0, %v2046
        %v2048 = vpop.f32.mrf.mxu0
        %v2049 = vpop.f32.mrf.mxu0
        %v2050 = vadd.f32 0.0, %v2049
        %v2051 = vpop.f32.mrf.mxu0
        %2052 = vmatprep.mubr.bf16.mxu0 0
        %2053 = vmatmul.mubr.bf16.gmra.mxu0 %v1898
        %v2054 = vpop.f32.mrf.mxu0
        %v2055 = vadd.f32 0.0, %v2054
        %v2056 = vpop.f32.mrf.mxu0
        %v2057 = vpop.f32.mrf.mxu0
        %v2058 = vadd.f32 0.0, %v2057
        %v2059 = vpop.f32.mrf.mxu0
        %2060 = vmatprep.mubr.bf16.mxu0 0
        %2061 = vmatmul.mubr.bf16.gmra.mxu0 %v1899
        %v2062 = vpop.f32.mrf.mxu0
        %v2063 = vadd.f32 0.0, %v2062
        %v2064 = vpop.f32.mrf.mxu0
        %v2065 = vpop.f32.mrf.mxu0
        %v2066 = vadd.f32 0.0, %v2065
        %v2067 = vpop.f32.mrf.mxu0
        %2068 = vmatprep.mubr.bf16.mxu0 0
        %2069 = vmatmul.mubr.bf16.gmra.mxu0 %v1900
        %v2070 = vpop.f32.mrf.mxu0
        %v2071 = vadd.f32 0.0, %v2070
        %v2072 = vpop.f32.mrf.mxu0
        %v2073 = vpop.f32.mrf.mxu0
        %v2074 = vadd.f32 0.0, %v2073
        %v2075 = vpop.f32.mrf.mxu0
        %2076 = vmatprep.mubr.bf16.mxu0 0
        %2077 = vmatmul.mubr.bf16.gmra.mxu0 %v1901
        %v2078 = vpop.f32.mrf.mxu0
        %v2079 = vadd.f32 0.0, %v2078
        %v2080 = vpop.f32.mrf.mxu0
        %v2081 = vpop.f32.mrf.mxu0
        %v2082 = vadd.f32 0.0, %v2081
        %v2083 = vpop.f32.mrf.mxu0
        %2084 = vmatprep.mubr.bf16.mxu0 0
        %2085 = vmatmul.mubr.bf16.gmra.mxu0 %v1902
        %v2086 = vpop.f32.mrf.mxu0
        %v2087 = vadd.f32 0.0, %v2086
        %v2088 = vpop.f32.mrf.mxu0
        %v2089 = vpop.f32.mrf.mxu0
        %v2090 = vadd.f32 0.0, %v2089
        %v2091 = vpop.f32.mrf.mxu0
        %2092 = vmatprep.mubr.bf16.mxu0 0
        %2093 = vmatmul.mubr.bf16.gmra.mxu0 %v1903
        %v2094 = vpop.f32.mrf.mxu0
        %v2095 = vadd.f32 0.0, %v2094
        %v2096 = vpop.f32.mrf.mxu0
        %v2097 = vpop.f32.mrf.mxu0
        %v2098 = vadd.f32 0.0, %v2097
        %v2099 = vpop.f32.mrf.mxu0
        %2100 = vmatprep.mubr.bf16.mxu0 0
        %2101 = vmatmul.mubr.bf16.gmra.mxu0 %v1904
        %v2102 = vpop.f32.mrf.mxu0
        %v2103 = vadd.f32 0.0, %v2102
        %v2104 = vpop.f32.mrf.mxu0
        %v2105 = vpop.f32.mrf.mxu0
        %v2106 = vadd.f32 0.0, %v2105
        %v2107 = vpop.f32.mrf.mxu0
        %2108 = vmatprep.mubr.bf16.mxu0 0
        %2109 = vmatmul.mubr.bf16.gmra.mxu0 %v1905
        %v2110 = vpop.f32.mrf.mxu0
        %v2111 = vadd.f32 0.0, %v2110
        %v2112 = vpop.f32.mrf.mxu0
        %v2113 = vpop.f32.mrf.mxu0
        %v2114 = vadd.f32 0.0, %v2113
        %v2115 = vpop.f32.mrf.mxu0
        %2116 = vmatprep.mubr.bf16.mxu0 0
        %2117 = vmatmul.mubr.bf16.gmra.mxu0 %v1906
        %v2118 = vpop.f32.mrf.mxu0
        %v2119 = vadd.f32 0.0, %v2118
        %v2120 = vpop.f32.mrf.mxu0
        %v2121 = vpop.f32.mrf.mxu0
        %v2122 = vadd.f32 0.0, %v2121
        %v2123 = vpop.f32.mrf.mxu0
        %2124 = vmatprep.mubr.bf16.mxu0 0
        %2125 = vmatmul.mubr.bf16.gmra.mxu0 %v1907
        %v2126 = vpop.f32.mrf.mxu0
        %v2127 = vadd.f32 0.0, %v2126
        %v2128 = vpop.f32.mrf.mxu0
        %v2129 = vpop.f32.mrf.mxu0
        %v2130 = vadd.f32 0.0, %v2129
        %v2131 = vpop.f32.mrf.mxu0
        %2132 = vdwg.mxu0
        %v2133 = vadd.f32 %v1727, %v2007
        %v2134 = vadd.f32 %v1728, %v2010
        %v2135 = vadd.f32 %v1729, %v2015
        %v2136 = vadd.f32 %v1730, %v2018
        %v2137 = vadd.f32 %v1731, %v2023
        %v2138 = vadd.f32 %v1732, %v2026
        %v2139 = vadd.f32 %v1733, %v2031
        %v2140 = vadd.f32 %v1734, %v2034
        %v2141 = vadd.f32 %v1735, %v2039
        %v2142 = vadd.f32 %v1736, %v2042
        %v2143 = vadd.f32 %v1737, %v2047
        %v2144 = vadd.f32 %v1738, %v2050
        %v2145 = vadd.f32 %v1739, %v2055
        %v2146 = vadd.f32 %v1740, %v2058
        %v2147 = vadd.f32 %v1741, %v2063
        %v2148 = vadd.f32 %v1742, %v2066
        %v2149 = vadd.f32 %v1743, %v2071
        %v2150 = vadd.f32 %v1744, %v2074
        %v2151 = vadd.f32 %v1745, %v2079
        %v2152 = vadd.f32 %v1746, %v2082
        %v2153 = vadd.f32 %v1747, %v2087
        %v2154 = vadd.f32 %v1748, %v2090
        %v2155 = vadd.f32 %v1749, %v2095
        %v2156 = vadd.f32 %v1750, %v2098
        %v2157 = vadd.f32 %v1751, %v2103
        %v2158 = vadd.f32 %v1752, %v2106
        %v2159 = vadd.f32 %v1753, %v2111
        %v2160 = vadd.f32 %v1754, %v2114
        %v2161 = vadd.f32 %v1755, %v2119
        %v2162 = vadd.f32 %v1756, %v2122
        %v2163 = vadd.f32 %v1757, %v2127
        %v2164 = vadd.f32 %v1758, %v2130
        %v2166 = vshrl.u32 %v1763, 16
        %v2168 = vrot.slane %v2166, 4
        %v2169 = vshll.u32 %v1763, 16
        %v2171 = vrot.slane %v2169, 5
        %v2172 = vor.u32 %v2168, %v2171
        %v2173 = vrot.slane %v2172, 4
        %v2175 = vshll.u32 %v1764, 16
        %v2177 = vrot.slane %v2175, 5
        %v2178 = vsel %vm599, %v2173, %v2177
        %v2179 = vshrl.u32 %v1764, 16
        %v2181 = vrot.slane %v2179, 4
        %v2182 = vor.u32 %v2181, %v2177
        %v2183 = vrot.slane %v2182, 4
        %v2185 = vshll.u32 %v1765, 16
        %v2187 = vrot.slane %v2185, 5
        %v2188 = vsel %vm599, %v2183, %v2187
        %v2190 = vshrl.u32 %v1766, 16
        %v2192 = vrot.slane %v2190, 4
        %v2193 = vshll.u32 %v1766, 16
        %v2195 = vrot.slane %v2193, 5
        %v2196 = vor.u32 %v2192, %v2195
        %v2197 = vrot.slane %v2196, 4
        %v2199 = vshll.u32 %v1767, 16
        %v2201 = vrot.slane %v2199, 5
        %v2202 = vsel %vm599, %v2197, %v2201
        %v2203 = vshrl.u32 %v1767, 16
        %v2205 = vrot.slane %v2203, 4
        %v2206 = vor.u32 %v2205, %v2201
        %v2207 = vrot.slane %v2206, 4
        %v2209 = vshll.u32 %v1768, 16
        %v2211 = vrot.slane %v2209, 5
        %v2212 = vsel %vm599, %v2207, %v2211
        %v2214 = vshrl.u32 %v1769, 16
        %v2216 = vrot.slane %v2214, 4
        %v2217 = vshll.u32 %v1769, 16
        %v2219 = vrot.slane %v2217, 5
        %v2220 = vor.u32 %v2216, %v2219
        %v2221 = vrot.slane %v2220, 4
        %v2223 = vshll.u32 %v1770, 16
        %v2225 = vrot.slane %v2223, 5
        %v2226 = vsel %vm599, %v2221, %v2225
        %v2227 = vshrl.u32 %v1770, 16
        %v2229 = vrot.slane %v2227, 4
        %v2230 = vor.u32 %v2229, %v2225
        %v2231 = vrot.slane %v2230, 4
        %v2233 = vshll.u32 %v1771, 16
        %v2235 = vrot.slane %v2233, 5
        %v2236 = vsel %vm599, %v2231, %v2235
        %v2238 = vshrl.u32 %v1772, 16
        %v2240 = vrot.slane %v2238, 4
        %v2241 = vshll.u32 %v1772, 16
        %v2243 = vrot.slane %v2241, 5
        %v2244 = vor.u32 %v2240, %v2243
        %v2245 = vrot.slane %v2244, 4
        %v2247 = vshll.u32 %v1773, 16
        %v2249 = vrot.slane %v2247, 5
        %v2250 = vsel %vm599, %v2245, %v2249
        %v2251 = vshrl.u32 %v1773, 16
        %v2253 = vrot.slane %v2251, 4
        %v2254 = vor.u32 %v2253, %v2249
        %v2255 = vrot.slane %v2254, 4
        %v2257 = vshll.u32 %v1774, 16
        %v2259 = vrot.slane %v2257, 5
        %v2260 = vsel %vm599, %v2255, %v2259
        %v2262 = vshrl.u32 %v1775, 16
        %v2264 = vrot.slane %v2262, 4
        %v2265 = vshll.u32 %v1775, 16
        %v2267 = vrot.slane %v2265, 5
        %v2268 = vor.u32 %v2264, %v2267
        %v2269 = vrot.slane %v2268, 4
        %v2271 = vshll.u32 %v1776, 16
        %v2273 = vrot.slane %v2271, 5
        %v2274 = vsel %vm599, %v2269, %v2273
        %v2275 = vshrl.u32 %v1776, 16
        %v2277 = vrot.slane %v2275, 4
        %v2278 = vor.u32 %v2277, %v2273
        %v2279 = vrot.slane %v2278, 4
        %v2281 = vshll.u32 %v1777, 16
        %v2283 = vrot.slane %v2281, 5
        %v2284 = vsel %vm599, %v2279, %v2283
        %v2286 = vshrl.u32 %v1778, 16
        %v2288 = vrot.slane %v2286, 4
        %v2289 = vshll.u32 %v1778, 16
        %v2291 = vrot.slane %v2289, 5
        %v2292 = vor.u32 %v2288, %v2291
        %v2293 = vrot.slane %v2292, 4
        %v2295 = vshll.u32 %v1779, 16
        %v2297 = vrot.slane %v2295, 5
        %v2298 = vsel %vm599, %v2293, %v2297
        %v2299 = vshrl.u32 %v1779, 16
        %v2301 = vrot.slane %v2299, 4
        %v2302 = vor.u32 %v2301, %v2297
        %v2303 = vrot.slane %v2302, 4
        %v2305 = vshll.u32 %v1780, 16
        %v2307 = vrot.slane %v2305, 5
        %v2308 = vsel %vm599, %v2303, %v2307
        %v2310 = vshrl.u32 %v1781, 16
        %v2312 = vrot.slane %v2310, 4
        %v2313 = vshll.u32 %v1781, 16
        %v2315 = vrot.slane %v2313, 5
        %v2316 = vor.u32 %v2312, %v2315
        %v2317 = vrot.slane %v2316, 4
        %v2319 = vshll.u32 %v1782, 16
        %v2321 = vrot.slane %v2319, 5
        %v2322 = vsel %vm599, %v2317, %v2321
        %v2323 = vshrl.u32 %v1782, 16
        %v2325 = vrot.slane %v2323, 4
        %v2326 = vor.u32 %v2325, %v2321
        %v2327 = vrot.slane %v2326, 4
        %v2329 = vshll.u32 %v1783, 16
        %v2331 = vrot.slane %v2329, 5
        %v2332 = vsel %vm599, %v2327, %v2331
        %v2334 = vshrl.u32 %v1784, 16
        %v2336 = vrot.slane %v2334, 4
        %v2337 = vshll.u32 %v1784, 16
        %v2339 = vrot.slane %v2337, 5
        %v2340 = vor.u32 %v2336, %v2339
        %v2341 = vrot.slane %v2340, 4
        %v2343 = vshll.u32 %v1785, 16
        %v2345 = vrot.slane %v2343, 5
        %v2346 = vsel %vm599, %v2341, %v2345
        %v2347 = vshrl.u32 %v1785, 16
        %v2349 = vrot.slane %v2347, 4
        %v2350 = vor.u32 %v2349, %v2345
        %v2351 = vrot.slane %v2350, 4
        %v2353 = vshll.u32 %v1786, 16
        %v2355 = vrot.slane %v2353, 5
        %v2356 = vsel %vm599, %v2351, %v2355
        %v2358 = vshrl.u32 %v1787, 16
        %v2360 = vrot.slane %v2358, 4
        %v2361 = vshll.u32 %v1787, 16
        %v2363 = vrot.slane %v2361, 5
        %v2364 = vor.u32 %v2360, %v2363
        %v2365 = vrot.slane %v2364, 4
        %v2367 = vshll.u32 %v1788, 16
        %v2369 = vrot.slane %v2367, 5
        %v2370 = vsel %vm599, %v2365, %v2369
        %v2371 = vshrl.u32 %v1788, 16
        %v2373 = vrot.slane %v2371, 4
        %v2374 = vor.u32 %v2373, %v2369
        %v2375 = vrot.slane %v2374, 4
        %v2377 = vshll.u32 %v1789, 16
        %v2379 = vrot.slane %v2377, 5
        %v2380 = vsel %vm599, %v2375, %v2379
        %v2382 = vshrl.u32 %v1790, 16
        %v2384 = vrot.slane %v2382, 4
        %v2385 = vshll.u32 %v1790, 16
        %v2387 = vrot.slane %v2385, 5
        %v2388 = vor.u32 %v2384, %v2387
        %v2389 = vrot.slane %v2388, 4
        %v2391 = vshll.u32 %v1791, 16
        %v2393 = vrot.slane %v2391, 5
        %v2394 = vsel %vm599, %v2389, %v2393
        %v2395 = vshrl.u32 %v1791, 16
        %v2397 = vrot.slane %v2395, 4
        %v2398 = vor.u32 %v2397, %v2393
        %v2399 = vrot.slane %v2398, 4
        %v2401 = vshll.u32 %v1792, 16
        %v2403 = vrot.slane %v2401, 5
        %v2404 = vsel %vm599, %v2399, %v2403
        %v2406 = vshrl.u32 %v1793, 16
        %v2408 = vrot.slane %v2406, 4
        %v2409 = vshll.u32 %v1793, 16
        %v2411 = vrot.slane %v2409, 5
        %v2412 = vor.u32 %v2408, %v2411
        %v2413 = vrot.slane %v2412, 4
        %v2415 = vshll.u32 %v1794, 16
        %v2417 = vrot.slane %v2415, 5
        %v2418 = vsel %vm599, %v2413, %v2417
        %v2419 = vshrl.u32 %v1794, 16
        %v2421 = vrot.slane %v2419, 4
        %v2422 = vor.u32 %v2421, %v2417
        %v2423 = vrot.slane %v2422, 4
        %v2425 = vshll.u32 %v1795, 16
        %v2427 = vrot.slane %v2425, 5
        %v2428 = vsel %vm599, %v2423, %v2427
        %v2430 = vshrl.u32 %v1796, 16
        %v2432 = vrot.slane %v2430, 4
        %v2433 = vshll.u32 %v1796, 16
        %v2435 = vrot.slane %v2433, 5
        %v2436 = vor.u32 %v2432, %v2435
        %v2437 = vrot.slane %v2436, 4
        %v2439 = vshll.u32 %v1797, 16
        %v2441 = vrot.slane %v2439, 5
        %v2442 = vsel %vm599, %v2437, %v2441
        %v2443 = vshrl.u32 %v1797, 16
        %v2445 = vrot.slane %v2443, 4
        %v2446 = vor.u32 %v2445, %v2441
        %v2447 = vrot.slane %v2446, 4
        %v2449 = vshll.u32 %v1798, 16
        %v2451 = vrot.slane %v2449, 5
        %v2452 = vsel %vm599, %v2447, %v2451
        %v2454 = vshrl.u32 %v1799, 16
        %v2456 = vrot.slane %v2454, 4
        %v2457 = vshll.u32 %v1799, 16
        %v2459 = vrot.slane %v2457, 5
        %v2460 = vor.u32 %v2456, %v2459
        %v2461 = vrot.slane %v2460, 4
        %v2463 = vshll.u32 %v1800, 16
        %v2465 = vrot.slane %v2463, 5
        %v2466 = vsel %vm599, %v2461, %v2465
        %v2467 = vshrl.u32 %v1800, 16
        %v2469 = vrot.slane %v2467, 4
        %v2470 = vor.u32 %v2469, %v2465
        %v2471 = vrot.slane %v2470, 4
        %v2473 = vshll.u32 %v1801, 16
        %v2475 = vrot.slane %v2473, 5
        %v2476 = vsel %vm599, %v2471, %v2475
        %v2478 = vshrl.u32 %v1802, 16
        %v2480 = vrot.slane %v2478, 4
        %v2481 = vshll.u32 %v1802, 16
        %v2483 = vrot.slane %v2481, 5
        %v2484 = vor.u32 %v2480, %v2483
        %v2485 = vrot.slane %v2484, 4
        %v2487 = vshll.u32 %v1803, 16
        %v2489 = vrot.slane %v2487, 5
        %v2490 = vsel %vm599, %v2485, %v2489
        %v2491 = vshrl.u32 %v1803, 16
        %v2493 = vrot.slane %v2491, 4
        %v2494 = vor.u32 %v2493, %v2489
        %v2495 = vrot.slane %v2494, 4
        %v2497 = vshll.u32 %v1804, 16
        %v2499 = vrot.slane %v2497, 5
        %v2500 = vsel %vm599, %v2495, %v2499
        %v2502 = vshrl.u32 %v1805, 16
        %v2504 = vrot.slane %v2502, 4
        %v2505 = vshll.u32 %v1805, 16
        %v2507 = vrot.slane %v2505, 5
        %v2508 = vor.u32 %v2504, %v2507
        %v2509 = vrot.slane %v2508, 4
        %v2511 = vshll.u32 %v1806, 16
        %v2513 = vrot.slane %v2511, 5
        %v2514 = vsel %vm599, %v2509, %v2513
        %v2515 = vshrl.u32 %v1806, 16
        %v2517 = vrot.slane %v2515, 4
        %v2518 = vor.u32 %v2517, %v2513
        %v2519 = vrot.slane %v2518, 4
        %v2521 = vshll.u32 %v1807, 16
        %v2523 = vrot.slane %v2521, 5
        %v2524 = vsel %vm599, %v2519, %v2523
        %v2526 = vshrl.u32 %v1808, 16
        %v2528 = vrot.slane %v2526, 4
        %v2529 = vshll.u32 %v1808, 16
        %v2531 = vrot.slane %v2529, 5
        %v2532 = vor.u32 %v2528, %v2531
        %v2533 = vrot.slane %v2532, 4
        %v2535 = vshll.u32 %v1809, 16
        %v2537 = vrot.slane %v2535, 5
        %v2538 = vsel %vm599, %v2533, %v2537
        %v2539 = vshrl.u32 %v1809, 16
        %v2541 = vrot.slane %v2539, 4
        %v2542 = vor.u32 %v2541, %v2537
        %v2543 = vrot.slane %v2542, 4
        %v2545 = vshll.u32 %v1810, 16
        %v2547 = vrot.slane %v2545, 5
        %v2548 = vsel %vm599, %v2543, %v2547
        %s2549 = scalar_lea.vmem %s1, 256
        %v2550 = vld [vmem:[%s2549] sm:$0xf]
        %v2551 = vld [vmem:[%s2549 + $0x4] sm:$0xf]
        %v2552 = vld [vmem:[%s2549 + $0x8] sm:$0xf]
        %v2553 = vld [vmem:[%s2549 + $0xc] sm:$0xf]
        %v2554 = vld [vmem:[%s2549 + $0x10] sm:$0xf]
        %v2555 = vld [vmem:[%s2549 + $0x14] sm:$0xf]
        %v2556 = vld [vmem:[%s2549 + $0x18] sm:$0xf]
        %v2557 = vld [vmem:[%s2549 + $0x1c] sm:$0xf]
        %v2558 = vld [vmem:[%s2549 + $0x20] sm:$0xf]
        %v2559 = vld [vmem:[%s2549 + $0x24] sm:$0xf]
        %v2560 = vld [vmem:[%s2549 + $0x28] sm:$0xf]
        %v2561 = vld [vmem:[%s2549 + $0x2c] sm:$0xf]
        %v2562 = vld [vmem:[%s2549 + $0x30] sm:$0xf]
        %v2563 = vld [vmem:[%s2549 + $0x34] sm:$0xf]
        %v2564 = vld [vmem:[%s2549 + $0x38] sm:$0xf]
        %v2565 = vld [vmem:[%s2549 + $0x3c] sm:$0xf]
        %v2566 = vunpack.c.l.b16 %v2178
        %v2567 = vunpack.c.l.b16 %v2188
        %v2568 = vunpack.c.l.b16 %v2202
        %v2569 = vunpack.c.l.b16 %v2212
        %v2570 = vunpack.c.l.b16 %v2226
        %v2571 = vunpack.c.l.b16 %v2236
        %v2572 = vunpack.c.l.b16 %v2250
        %v2573 = vunpack.c.l.b16 %v2260
        %v2574 = vunpack.c.l.b16 %v2274
        %v2575 = vunpack.c.l.b16 %v2284
        %v2576 = vunpack.c.l.b16 %v2298
        %v2577 = vunpack.c.l.b16 %v2308
        %v2578 = vunpack.c.l.b16 %v2322
        %v2579 = vunpack.c.l.b16 %v2332
        %v2580 = vunpack.c.l.b16 %v2346
        %v2581 = vunpack.c.l.b16 %v2356
        %v2582 = vunpack.c.l.b16 %v2370
        %v2583 = vunpack.c.l.b16 %v2380
        %v2584 = vunpack.c.l.b16 %v2394
        %v2585 = vunpack.c.l.b16 %v2404
        %v2586 = vunpack.c.l.b16 %v2418
        %v2587 = vunpack.c.l.b16 %v2428
        %v2588 = vunpack.c.l.b16 %v2442
        %v2589 = vunpack.c.l.b16 %v2452
        %v2590 = vunpack.c.l.b16 %v2466
        %v2591 = vunpack.c.l.b16 %v2476
        %v2592 = vunpack.c.l.b16 %v2490
        %v2593 = vunpack.c.l.b16 %v2500
        %v2594 = vunpack.c.l.b16 %v2514
        %v2595 = vunpack.c.l.b16 %v2524
        %v2596 = vunpack.c.l.b16 %v2538
        %v2597 = vunpack.c.l.b16 %v2548
        %v2598 = vpack.c.b16 %v2567, %v2566
        %v2599 = vpack.c.b16 %v2569, %v2568
        %v2600 = vpack.c.b16 %v2571, %v2570
        %v2601 = vpack.c.b16 %v2573, %v2572
        %v2602 = vpack.c.b16 %v2575, %v2574
        %v2603 = vpack.c.b16 %v2577, %v2576
        %v2604 = vpack.c.b16 %v2579, %v2578
        %v2605 = vpack.c.b16 %v2581, %v2580
        %v2606 = vpack.c.b16 %v2583, %v2582
        %v2607 = vpack.c.b16 %v2585, %v2584
        %v2608 = vpack.c.b16 %v2587, %v2586
        %v2609 = vpack.c.b16 %v2589, %v2588
        %v2610 = vpack.c.b16 %v2591, %v2590
        %v2611 = vpack.c.b16 %v2593, %v2592
        %v2612 = vpack.c.b16 %v2595, %v2594
        %v2613 = vpack.c.b16 %v2597, %v2596
        %v2646 = vunpack.c.l.b16 %v2550
        %v2647 = vunpack.c.l.b16 %v2551
        %v2648 = vunpack.c.l.b16 %v2552
        %v2649 = vunpack.c.l.b16 %v2553
        %v2650 = vunpack.c.l.b16 %v2554
        %v2651 = vunpack.c.l.b16 %v2555
        %v2652 = vunpack.c.l.b16 %v2556
        %v2653 = vunpack.c.l.b16 %v2557
        %v2654 = vunpack.c.l.b16 %v2558
        %v2655 = vunpack.c.l.b16 %v2559
        %v2656 = vunpack.c.l.b16 %v2560
        %v2657 = vunpack.c.l.b16 %v2561
        %v2658 = vunpack.c.l.b16 %v2562
        %v2659 = vunpack.c.l.b16 %v2563
        %v2660 = vunpack.c.l.b16 %v2564
        %v2661 = vunpack.c.l.b16 %v2565
        %v2662 = vpack.c.b16 %v2647, %v2646
        %v2663 = vpack.c.b16 %v2649, %v2648
        %v2664 = vpack.c.b16 %v2651, %v2650
        %v2665 = vpack.c.b16 %v2653, %v2652
        %v2666 = vpack.c.b16 %v2655, %v2654
        %v2667 = vpack.c.b16 %v2657, %v2656
        %v2668 = vpack.c.b16 %v2659, %v2658
        %v2669 = vpack.c.b16 %v2661, %v2660
        %2678 = vmatprep.subr.bf16.mxu0 0
        %2679 = vmatpush1.bf16.msra.mxu0 %v2669
        %2680 = vmatprep.subr.bf16.mxu0 0
        %2681 = vmatpush1.bf16.msra.mxu0 %v2668
        %2682 = vmatprep.subr.bf16.mxu0 0
        %2683 = vmatpush1.bf16.msra.mxu0 %v2667
        %2684 = vmatprep.subr.bf16.mxu0 0
        %2685 = vmatpush1.bf16.msra.mxu0 %v2666
        %2686 = vmatprep.subr.bf16.mxu0 0
        %2687 = vmatpush1.bf16.msra.mxu0 %v2665
        %2688 = vmatprep.subr.bf16.mxu0 0
        %2689 = vmatpush1.bf16.msra.mxu0 %v2664
        %2690 = vmatprep.subr.bf16.mxu0 0
        %2691 = vmatpush1.bf16.msra.mxu0 %v2663
        %2692 = vmatprep.subr.bf16.mxu0 0
        %2693 = vmatpush1.bf16.msra.mxu0 %v2662
        %2694 = vmatprep.subr.bf16.mxu0 0
        %2695 = vmatpush2.bf16.msra.mxu0 0
        %2696 = vmatprep.subr.bf16.mxu0 0
        %2697 = vmatpush2.bf16.msra.mxu0 0
        %2698 = vmatprep.subr.bf16.mxu0 0
        %2699 = vmatpush2.bf16.msra.mxu0 0
        %2700 = vmatprep.subr.bf16.mxu0 0
        %2701 = vmatpush2.bf16.msra.mxu0 0
        %2702 = vmatprep.subr.bf16.mxu0 0
        %2703 = vmatpush2.bf16.msra.mxu0 0
        %2704 = vmatprep.subr.bf16.mxu0 0
        %2705 = vmatpush2.bf16.msra.mxu0 0
        %2706 = vmatprep.subr.bf16.mxu0 0
        %2707 = vmatpush2.bf16.msra.mxu0 0
        %2708 = vmatprep.subr.bf16.mxu0 0
        %2709 = vmatpush2.bf16.msra.mxu0 0
        %2710 = vmatprep.mubr.bf16.mxu0 0
        %2711 = vmatmul.mubr.bf16.gmra.mxu0 %v2598
        %v2712 = vpop.f32.mrf.mxu0
        %v2713 = vadd.f32 0.0, %v2712
        %v2714 = vpop.f32.mrf.mxu0
        %v2715 = vpop.f32.mrf.mxu0
        %v2716 = vadd.f32 0.0, %v2715
        %v2717 = vpop.f32.mrf.mxu0
        %2718 = vmatprep.mubr.bf16.mxu0 0
        %2719 = vmatmul.mubr.bf16.gmra.mxu0 %v2599
        %v2720 = vpop.f32.mrf.mxu0
        %v2721 = vadd.f32 0.0, %v2720
        %v2722 = vpop.f32.mrf.mxu0
        %v2723 = vpop.f32.mrf.mxu0
        %v2724 = vadd.f32 0.0, %v2723
        %v2725 = vpop.f32.mrf.mxu0
        %2726 = vmatprep.mubr.bf16.mxu0 0
        %2727 = vmatmul.mubr.bf16.gmra.mxu0 %v2600
        %v2728 = vpop.f32.mrf.mxu0
        %v2729 = vadd.f32 0.0, %v2728
        %v2730 = vpop.f32.mrf.mxu0
        %v2731 = vpop.f32.mrf.mxu0
        %v2732 = vadd.f32 0.0, %v2731
        %v2733 = vpop.f32.mrf.mxu0
        %2734 = vmatprep.mubr.bf16.mxu0 0
        %2735 = vmatmul.mubr.bf16.gmra.mxu0 %v2601
        %v2736 = vpop.f32.mrf.mxu0
        %v2737 = vadd.f32 0.0, %v2736
        %v2738 = vpop.f32.mrf.mxu0
        %v2739 = vpop.f32.mrf.mxu0
        %v2740 = vadd.f32 0.0, %v2739
        %v2741 = vpop.f32.mrf.mxu0
        %2742 = vmatprep.mubr.bf16.mxu0 0
        %2743 = vmatmul.mubr.bf16.gmra.mxu0 %v2602
        %v2744 = vpop.f32.mrf.mxu0
        %v2745 = vadd.f32 0.0, %v2744
        %v2746 = vpop.f32.mrf.mxu0
        %v2747 = vpop.f32.mrf.mxu0
        %v2748 = vadd.f32 0.0, %v2747
        %v2749 = vpop.f32.mrf.mxu0
        %2750 = vmatprep.mubr.bf16.mxu0 0
        %2751 = vmatmul.mubr.bf16.gmra.mxu0 %v2603
        %v2752 = vpop.f32.mrf.mxu0
        %v2753 = vadd.f32 0.0, %v2752
        %v2754 = vpop.f32.mrf.mxu0
        %v2755 = vpop.f32.mrf.mxu0
        %v2756 = vadd.f32 0.0, %v2755
        %v2757 = vpop.f32.mrf.mxu0
        %2758 = vmatprep.mubr.bf16.mxu0 0
        %2759 = vmatmul.mubr.bf16.gmra.mxu0 %v2604
        %v2760 = vpop.f32.mrf.mxu0
        %v2761 = vadd.f32 0.0, %v2760
        %v2762 = vpop.f32.mrf.mxu0
        %v2763 = vpop.f32.mrf.mxu0
        %v2764 = vadd.f32 0.0, %v2763
        %v2765 = vpop.f32.mrf.mxu0
        %2766 = vmatprep.mubr.bf16.mxu0 0
        %2767 = vmatmul.mubr.bf16.gmra.mxu0 %v2605
        %v2768 = vpop.f32.mrf.mxu0
        %v2769 = vadd.f32 0.0, %v2768
        %v2770 = vpop.f32.mrf.mxu0
        %v2771 = vpop.f32.mrf.mxu0
        %v2772 = vadd.f32 0.0, %v2771
        %v2773 = vpop.f32.mrf.mxu0
        %2774 = vmatprep.mubr.bf16.mxu0 0
        %2775 = vmatmul.mubr.bf16.gmra.mxu0 %v2606
        %v2776 = vpop.f32.mrf.mxu0
        %v2777 = vadd.f32 0.0, %v2776
        %v2778 = vpop.f32.mrf.mxu0
        %v2779 = vpop.f32.mrf.mxu0
        %v2780 = vadd.f32 0.0, %v2779
        %v2781 = vpop.f32.mrf.mxu0
        %2782 = vmatprep.mubr.bf16.mxu0 0
        %2783 = vmatmul.mubr.bf16.gmra.mxu0 %v2607
        %v2784 = vpop.f32.mrf.mxu0
        %v2785 = vadd.f32 0.0, %v2784
        %v2786 = vpop.f32.mrf.mxu0
        %v2787 = vpop.f32.mrf.mxu0
        %v2788 = vadd.f32 0.0, %v2787
        %v2789 = vpop.f32.mrf.mxu0
        %2790 = vmatprep.mubr.bf16.mxu0 0
        %2791 = vmatmul.mubr.bf16.gmra.mxu0 %v2608
        %v2792 = vpop.f32.mrf.mxu0
        %v2793 = vadd.f32 0.0, %v2792
        %v2794 = vpop.f32.mrf.mxu0
        %v2795 = vpop.f32.mrf.mxu0
        %v2796 = vadd.f32 0.0, %v2795
        %v2797 = vpop.f32.mrf.mxu0
        %2798 = vmatprep.mubr.bf16.mxu0 0
        %2799 = vmatmul.mubr.bf16.gmra.mxu0 %v2609
        %v2800 = vpop.f32.mrf.mxu0
        %v2801 = vadd.f32 0.0, %v2800
        %v2802 = vpop.f32.mrf.mxu0
        %v2803 = vpop.f32.mrf.mxu0
        %v2804 = vadd.f32 0.0, %v2803
        %v2805 = vpop.f32.mrf.mxu0
        %2806 = vmatprep.mubr.bf16.mxu0 0
        %2807 = vmatmul.mubr.bf16.gmra.mxu0 %v2610
        %v2808 = vpop.f32.mrf.mxu0
        %v2809 = vadd.f32 0.0, %v2808
        %v2810 = vpop.f32.mrf.mxu0
        %v2811 = vpop.f32.mrf.mxu0
        %v2812 = vadd.f32 0.0, %v2811
        %v2813 = vpop.f32.mrf.mxu0
        %2814 = vmatprep.mubr.bf16.mxu0 0
        %2815 = vmatmul.mubr.bf16.gmra.mxu0 %v2611
        %v2816 = vpop.f32.mrf.mxu0
        %v2817 = vadd.f32 0.0, %v2816
        %v2818 = vpop.f32.mrf.mxu0
        %v2819 = vpop.f32.mrf.mxu0
        %v2820 = vadd.f32 0.0, %v2819
        %v2821 = vpop.f32.mrf.mxu0
        %2822 = vmatprep.mubr.bf16.mxu0 0
        %2823 = vmatmul.mubr.bf16.gmra.mxu0 %v2612
        %v2824 = vpop.f32.mrf.mxu0
        %v2825 = vadd.f32 0.0, %v2824
        %v2826 = vpop.f32.mrf.mxu0
        %v2827 = vpop.f32.mrf.mxu0
        %v2828 = vadd.f32 0.0, %v2827
        %v2829 = vpop.f32.mrf.mxu0
        %2830 = vmatprep.mubr.bf16.mxu0 0
        %2831 = vmatmul.mubr.bf16.gmra.mxu0 %v2613
        %v2832 = vpop.f32.mrf.mxu0
        %v2833 = vadd.f32 0.0, %v2832
        %v2834 = vpop.f32.mrf.mxu0
        %v2835 = vpop.f32.mrf.mxu0
        %v2836 = vadd.f32 0.0, %v2835
        %v2837 = vpop.f32.mrf.mxu0
        %2838 = vdwg.mxu0
        %v2839 = vadd.f32 %v2133, %v2713
        %v2840 = vadd.f32 %v2134, %v2716
        %v2841 = vadd.f32 %v2135, %v2721
        %v2842 = vadd.f32 %v2136, %v2724
        %v2843 = vadd.f32 %v2137, %v2729
        %v2844 = vadd.f32 %v2138, %v2732
        %v2845 = vadd.f32 %v2139, %v2737
        %v2846 = vadd.f32 %v2140, %v2740
        %v2847 = vadd.f32 %v2141, %v2745
        %v2848 = vadd.f32 %v2142, %v2748
        %v2849 = vadd.f32 %v2143, %v2753
        %v2850 = vadd.f32 %v2144, %v2756
        %v2851 = vadd.f32 %v2145, %v2761
        %v2852 = vadd.f32 %v2146, %v2764
        %v2853 = vadd.f32 %v2147, %v2769
        %v2854 = vadd.f32 %v2148, %v2772
        %v2855 = vadd.f32 %v2149, %v2777
        %v2856 = vadd.f32 %v2150, %v2780
        %v2857 = vadd.f32 %v2151, %v2785
        %v2858 = vadd.f32 %v2152, %v2788
        %v2859 = vadd.f32 %v2153, %v2793
        %v2860 = vadd.f32 %v2154, %v2796
        %v2861 = vadd.f32 %v2155, %v2801
        %v2862 = vadd.f32 %v2156, %v2804
        %v2863 = vadd.f32 %v2157, %v2809
        %v2864 = vadd.f32 %v2158, %v2812
        %v2865 = vadd.f32 %v2159, %v2817
        %v2866 = vadd.f32 %v2160, %v2820
        %v2867 = vadd.f32 %v2161, %v2825
        %v2868 = vadd.f32 %v2162, %v2828
        %v2869 = vadd.f32 %v2163, %v2833
        %v2870 = vadd.f32 %v2164, %v2836
        %v2887 = vrot.slane %v1763, 5
        %v2888 = vrot.slane %v2887, 4
        %v2889 = vrot.slane %v1764, 5
        %v2890 = vsel %vm1324, %v2888, %v2889
        %v2891 = vrot.slane %v2889, 4
        %v2892 = vrot.slane %v1765, 5
        %v2893 = vsel %vm1324, %v2891, %v2892
        %v2894 = vrot.slane %v1766, 5
        %v2895 = vrot.slane %v2894, 4
        %v2896 = vrot.slane %v1767, 5
        %v2897 = vsel %vm1324, %v2895, %v2896
        %v2898 = vrot.slane %v2896, 4
        %v2899 = vrot.slane %v1768, 5
        %v2900 = vsel %vm1324, %v2898, %v2899
        %v2901 = vrot.slane %v1769, 5
        %v2902 = vrot.slane %v2901, 4
        %v2903 = vrot.slane %v1770, 5
        %v2904 = vsel %vm1324, %v2902, %v2903
        %v2905 = vrot.slane %v2903, 4
        %v2906 = vrot.slane %v1771, 5
        %v2907 = vsel %vm1324, %v2905, %v2906
        %v2908 = vrot.slane %v1772, 5
        %v2909 = vrot.slane %v2908, 4
        %v2910 = vrot.slane %v1773, 5
        %v2911 = vsel %vm1324, %v2909, %v2910
        %v2912 = vrot.slane %v2910, 4
        %v2913 = vrot.slane %v1774, 5
        %v2914 = vsel %vm1324, %v2912, %v2913
        %v2915 = vrot.slane %v1775, 5
        %v2916 = vrot.slane %v2915, 4
        %v2917 = vrot.slane %v1776, 5
        %v2918 = vsel %vm1324, %v2916, %v2917
        %v2919 = vrot.slane %v2917, 4
        %v2920 = vrot.slane %v1777, 5
        %v2921 = vsel %vm1324, %v2919, %v2920
        %v2922 = vrot.slane %v1778, 5
        %v2923 = vrot.slane %v2922, 4
        %v2924 = vrot.slane %v1779, 5
        %v2925 = vsel %vm1324, %v2923, %v2924
        %v2926 = vrot.slane %v2924, 4
        %v2927 = vrot.slane %v1780, 5
        %v2928 = vsel %vm1324, %v2926, %v2927
        %v2929 = vrot.slane %v1781, 5
        %v2930 = vrot.slane %v2929, 4
        %v2931 = vrot.slane %v1782, 5
        %v2932 = vsel %vm1324, %v2930, %v2931
        %v2933 = vrot.slane %v2931, 4
        %v2934 = vrot.slane %v1783, 5
        %v2935 = vsel %vm1324, %v2933, %v2934
        %v2936 = vrot.slane %v1784, 5
        %v2937 = vrot.slane %v2936, 4
        %v2938 = vrot.slane %v1785, 5
        %v2939 = vsel %vm1324, %v2937, %v2938
        %v2940 = vrot.slane %v2938, 4
        %v2941 = vrot.slane %v1786, 5
        %v2942 = vsel %vm1324, %v2940, %v2941
        %v2943 = vrot.slane %v1787, 5
        %v2944 = vrot.slane %v2943, 4
        %v2945 = vrot.slane %v1788, 5
        %v2946 = vsel %vm1324, %v2944, %v2945
        %v2947 = vrot.slane %v2945, 4
        %v2948 = vrot.slane %v1789, 5
        %v2949 = vsel %vm1324, %v2947, %v2948
        %v2950 = vrot.slane %v1790, 5
        %v2951 = vrot.slane %v2950, 4
        %v2952 = vrot.slane %v1791, 5
        %v2953 = vsel %vm1324, %v2951, %v2952
        %v2954 = vrot.slane %v2952, 4
        %v2955 = vrot.slane %v1792, 5
        %v2956 = vsel %vm1324, %v2954, %v2955
        %v2957 = vrot.slane %v1793, 5
        %v2958 = vrot.slane %v2957, 4
        %v2959 = vrot.slane %v1794, 5
        %v2960 = vsel %vm1324, %v2958, %v2959
        %v2961 = vrot.slane %v2959, 4
        %v2962 = vrot.slane %v1795, 5
        %v2963 = vsel %vm1324, %v2961, %v2962
        %v2964 = vrot.slane %v1796, 5
        %v2965 = vrot.slane %v2964, 4
        %v2966 = vrot.slane %v1797, 5
        %v2967 = vsel %vm1324, %v2965, %v2966
        %v2968 = vrot.slane %v2966, 4
        %v2969 = vrot.slane %v1798, 5
        %v2970 = vsel %vm1324, %v2968, %v2969
        %v2971 = vrot.slane %v1799, 5
        %v2972 = vrot.slane %v2971, 4
        %v2973 = vrot.slane %v1800, 5
        %v2974 = vsel %vm1324, %v2972, %v2973
        %v2975 = vrot.slane %v2973, 4
        %v2976 = vrot.slane %v1801, 5
        %v2977 = vsel %vm1324, %v2975, %v2976
        %v2978 = vrot.slane %v1802, 5
        %v2979 = vrot.slane %v2978, 4
        %v2980 = vrot.slane %v1803, 5
        %v2981 = vsel %vm1324, %v2979, %v2980
        %v2982 = vrot.slane %v2980, 4
        %v2983 = vrot.slane %v1804, 5
        %v2984 = vsel %vm1324, %v2982, %v2983
        %v2985 = vrot.slane %v1805, 5
        %v2986 = vrot.slane %v2985, 4
        %v2987 = vrot.slane %v1806, 5
        %v2988 = vsel %vm1324, %v2986, %v2987
        %v2989 = vrot.slane %v2987, 4
        %v2990 = vrot.slane %v1807, 5
        %v2991 = vsel %vm1324, %v2989, %v2990
        %v2992 = vrot.slane %v1808, 5
        %v2993 = vrot.slane %v2992, 4
        %v2994 = vrot.slane %v1809, 5
        %v2995 = vsel %vm1324, %v2993, %v2994
        %v2996 = vrot.slane %v2994, 4
        %v2997 = vrot.slane %v1810, 5
        %v2998 = vsel %vm1324, %v2996, %v2997
        %s2999 = scalar_lea.vmem %s1, 320
        %v3000 = vld [vmem:[%s2999] sm:$0xf]
        %v3001 = vld [vmem:[%s2999 + $0x4] sm:$0xf]
        %v3002 = vld [vmem:[%s2999 + $0x8] sm:$0xf]
        %v3003 = vld [vmem:[%s2999 + $0xc] sm:$0xf]
        %v3004 = vld [vmem:[%s2999 + $0x10] sm:$0xf]
        %v3005 = vld [vmem:[%s2999 + $0x14] sm:$0xf]
        %v3006 = vld [vmem:[%s2999 + $0x18] sm:$0xf]
        %v3007 = vld [vmem:[%s2999 + $0x1c] sm:$0xf]
        %v3008 = vld [vmem:[%s2999 + $0x20] sm:$0xf]
        %v3009 = vld [vmem:[%s2999 + $0x24] sm:$0xf]
        %v3010 = vld [vmem:[%s2999 + $0x28] sm:$0xf]
        %v3011 = vld [vmem:[%s2999 + $0x2c] sm:$0xf]
        %v3012 = vld [vmem:[%s2999 + $0x30] sm:$0xf]
        %v3013 = vld [vmem:[%s2999 + $0x34] sm:$0xf]
        %v3014 = vld [vmem:[%s2999 + $0x38] sm:$0xf]
        %v3015 = vld [vmem:[%s2999 + $0x3c] sm:$0xf]
        %v3016 = vunpack.c.l.b16 %v2890
        %v3017 = vunpack.c.l.b16 %v2893
        %v3018 = vunpack.c.l.b16 %v2897
        %v3019 = vunpack.c.l.b16 %v2900
        %v3020 = vunpack.c.l.b16 %v2904
        %v3021 = vunpack.c.l.b16 %v2907
        %v3022 = vunpack.c.l.b16 %v2911
        %v3023 = vunpack.c.l.b16 %v2914
        %v3024 = vunpack.c.l.b16 %v2918
        %v3025 = vunpack.c.l.b16 %v2921
        %v3026 = vunpack.c.l.b16 %v2925
        %v3027 = vunpack.c.l.b16 %v2928
        %v3028 = vunpack.c.l.b16 %v2932
        %v3029 = vunpack.c.l.b16 %v2935
        %v3030 = vunpack.c.l.b16 %v2939
        %v3031 = vunpack.c.l.b16 %v2942
        %v3032 = vunpack.c.l.b16 %v2946
        %v3033 = vunpack.c.l.b16 %v2949
        %v3034 = vunpack.c.l.b16 %v2953
        %v3035 = vunpack.c.l.b16 %v2956
        %v3036 = vunpack.c.l.b16 %v2960
        %v3037 = vunpack.c.l.b16 %v2963
        %v3038 = vunpack.c.l.b16 %v2967
        %v3039 = vunpack.c.l.b16 %v2970
        %v3040 = vunpack.c.l.b16 %v2974
        %v3041 = vunpack.c.l.b16 %v2977
        %v3042 = vunpack.c.l.b16 %v2981
        %v3043 = vunpack.c.l.b16 %v2984
        %v3044 = vunpack.c.l.b16 %v2988
        %v3045 = vunpack.c.l.b16 %v2991
        %v3046 = vunpack.c.l.b16 %v2995
        %v3047 = vunpack.c.l.b16 %v2998
        %v3048 = vpack.c.b16 %v3017, %v3016
        %v3049 = vpack.c.b16 %v3019, %v3018
        %v3050 = vpack.c.b16 %v3021, %v3020
        %v3051 = vpack.c.b16 %v3023, %v3022
        %v3052 = vpack.c.b16 %v3025, %v3024
        %v3053 = vpack.c.b16 %v3027, %v3026
        %v3054 = vpack.c.b16 %v3029, %v3028
        %v3055 = vpack.c.b16 %v3031, %v3030
        %v3056 = vpack.c.b16 %v3033, %v3032
        %v3057 = vpack.c.b16 %v3035, %v3034
        %v3058 = vpack.c.b16 %v3037, %v3036
        %v3059 = vpack.c.b16 %v3039, %v3038
        %v3060 = vpack.c.b16 %v3041, %v3040
        %v3061 = vpack.c.b16 %v3043, %v3042
        %v3062 = vpack.c.b16 %v3045, %v3044
        %v3063 = vpack.c.b16 %v3047, %v3046
        %v3096 = vunpack.c.l.b16 %v3000
        %v3097 = vunpack.c.l.b16 %v3001
        %v3098 = vunpack.c.l.b16 %v3002
        %v3099 = vunpack.c.l.b16 %v3003
        %v3100 = vunpack.c.l.b16 %v3004
        %v3101 = vunpack.c.l.b16 %v3005
        %v3102 = vunpack.c.l.b16 %v3006
        %v3103 = vunpack.c.l.b16 %v3007
        %v3104 = vunpack.c.l.b16 %v3008
        %v3105 = vunpack.c.l.b16 %v3009
        %v3106 = vunpack.c.l.b16 %v3010
        %v3107 = vunpack.c.l.b16 %v3011
        %v3108 = vunpack.c.l.b16 %v3012
        %v3109 = vunpack.c.l.b16 %v3013
        %v3110 = vunpack.c.l.b16 %v3014
        %v3111 = vunpack.c.l.b16 %v3015
        %v3112 = vpack.c.b16 %v3097, %v3096
        %v3113 = vpack.c.b16 %v3099, %v3098
        %v3114 = vpack.c.b16 %v3101, %v3100
        %v3115 = vpack.c.b16 %v3103, %v3102
        %v3116 = vpack.c.b16 %v3105, %v3104
        %v3117 = vpack.c.b16 %v3107, %v3106
        %v3118 = vpack.c.b16 %v3109, %v3108
        %v3119 = vpack.c.b16 %v3111, %v3110
        %3128 = vmatprep.subr.bf16.mxu0 0
        %3129 = vmatpush1.bf16.msra.mxu0 %v3119
        %3130 = vmatprep.subr.bf16.mxu0 0
        %3131 = vmatpush1.bf16.msra.mxu0 %v3118
        %3132 = vmatprep.subr.bf16.mxu0 0
        %3133 = vmatpush1.bf16.msra.mxu0 %v3117
        %3134 = vmatprep.subr.bf16.mxu0 0
        %3135 = vmatpush1.bf16.msra.mxu0 %v3116
        %3136 = vmatprep.subr.bf16.mxu0 0
        %3137 = vmatpush1.bf16.msra.mxu0 %v3115
        %3138 = vmatprep.subr.bf16.mxu0 0
        %3139 = vmatpush1.bf16.msra.mxu0 %v3114
        %3140 = vmatprep.subr.bf16.mxu0 0
        %3141 = vmatpush1.bf16.msra.mxu0 %v3113
        %3142 = vmatprep.subr.bf16.mxu0 0
        %3143 = vmatpush1.bf16.msra.mxu0 %v3112
        %3144 = vmatprep.subr.bf16.mxu0 0
        %3145 = vmatpush2.bf16.msra.mxu0 0
        %3146 = vmatprep.subr.bf16.mxu0 0
        %3147 = vmatpush2.bf16.msra.mxu0 0
        %3148 = vmatprep.subr.bf16.mxu0 0
        %3149 = vmatpush2.bf16.msra.mxu0 0
        %3150 = vmatprep.subr.bf16.mxu0 0
        %3151 = vmatpush2.bf16.msra.mxu0 0
        %3152 = vmatprep.subr.bf16.mxu0 0
        %3153 = vmatpush2.bf16.msra.mxu0 0
        %3154 = vmatprep.subr.bf16.mxu0 0
        %3155 = vmatpush2.bf16.msra.mxu0 0
        %3156 = vmatprep.subr.bf16.mxu0 0
        %3157 = vmatpush2.bf16.msra.mxu0 0
        %3158 = vmatprep.subr.bf16.mxu0 0
        %3159 = vmatpush2.bf16.msra.mxu0 0
        %3160 = vmatprep.mubr.bf16.mxu0 0
        %3161 = vmatmul.mubr.bf16.gmra.mxu0 %v3048
        %v3162 = vpop.f32.mrf.mxu0
        %v3163 = vadd.f32 0.0, %v3162
        %v3164 = vpop.f32.mrf.mxu0
        %v3165 = vpop.f32.mrf.mxu0
        %v3166 = vadd.f32 0.0, %v3165
        %v3167 = vpop.f32.mrf.mxu0
        %3168 = vmatprep.mubr.bf16.mxu0 0
        %3169 = vmatmul.mubr.bf16.gmra.mxu0 %v3049
        %v3170 = vpop.f32.mrf.mxu0
        %v3171 = vadd.f32 0.0, %v3170
        %v3172 = vpop.f32.mrf.mxu0
        %v3173 = vpop.f32.mrf.mxu0
        %v3174 = vadd.f32 0.0, %v3173
        %v3175 = vpop.f32.mrf.mxu0
        %3176 = vmatprep.mubr.bf16.mxu0 0
        %3177 = vmatmul.mubr.bf16.gmra.mxu0 %v3050
        %v3178 = vpop.f32.mrf.mxu0
        %v3179 = vadd.f32 0.0, %v3178
        %v3180 = vpop.f32.mrf.mxu0
        %v3181 = vpop.f32.mrf.mxu0
        %v3182 = vadd.f32 0.0, %v3181
        %v3183 = vpop.f32.mrf.mxu0
        %3184 = vmatprep.mubr.bf16.mxu0 0
        %3185 = vmatmul.mubr.bf16.gmra.mxu0 %v3051
        %v3186 = vpop.f32.mrf.mxu0
        %v3187 = vadd.f32 0.0, %v3186
        %v3188 = vpop.f32.mrf.mxu0
        %v3189 = vpop.f32.mrf.mxu0
        %v3190 = vadd.f32 0.0, %v3189
        %v3191 = vpop.f32.mrf.mxu0
        %3192 = vmatprep.mubr.bf16.mxu0 0
        %3193 = vmatmul.mubr.bf16.gmra.mxu0 %v3052
        %v3194 = vpop.f32.mrf.mxu0
        %v3195 = vadd.f32 0.0, %v3194
        %v3196 = vpop.f32.mrf.mxu0
        %v3197 = vpop.f32.mrf.mxu0
        %v3198 = vadd.f32 0.0, %v3197
        %v3199 = vpop.f32.mrf.mxu0
        %3200 = vmatprep.mubr.bf16.mxu0 0
        %3201 = vmatmul.mubr.bf16.gmra.mxu0 %v3053
        %v3202 = vpop.f32.mrf.mxu0
        %v3203 = vadd.f32 0.0, %v3202
        %v3204 = vpop.f32.mrf.mxu0
        %v3205 = vpop.f32.mrf.mxu0
        %v3206 = vadd.f32 0.0, %v3205
        %v3207 = vpop.f32.mrf.mxu0
        %3208 = vmatprep.mubr.bf16.mxu0 0
        %3209 = vmatmul.mubr.bf16.gmra.mxu0 %v3054
        %v3210 = vpop.f32.mrf.mxu0
        %v3211 = vadd.f32 0.0, %v3210
        %v3212 = vpop.f32.mrf.mxu0
        %v3213 = vpop.f32.mrf.mxu0
        %v3214 = vadd.f32 0.0, %v3213
        %v3215 = vpop.f32.mrf.mxu0
        %3216 = vmatprep.mubr.bf16.mxu0 0
        %3217 = vmatmul.mubr.bf16.gmra.mxu0 %v3055
        %v3218 = vpop.f32.mrf.mxu0
        %v3219 = vadd.f32 0.0, %v3218
        %v3220 = vpop.f32.mrf.mxu0
        %v3221 = vpop.f32.mrf.mxu0
        %v3222 = vadd.f32 0.0, %v3221
        %v3223 = vpop.f32.mrf.mxu0
        %3224 = vmatprep.mubr.bf16.mxu0 0
        %3225 = vmatmul.mubr.bf16.gmra.mxu0 %v3056
        %v3226 = vpop.f32.mrf.mxu0
        %v3227 = vadd.f32 0.0, %v3226
        %v3228 = vpop.f32.mrf.mxu0
        %v3229 = vpop.f32.mrf.mxu0
        %v3230 = vadd.f32 0.0, %v3229
        %v3231 = vpop.f32.mrf.mxu0
        %3232 = vmatprep.mubr.bf16.mxu0 0
        %3233 = vmatmul.mubr.bf16.gmra.mxu0 %v3057
        %v3234 = vpop.f32.mrf.mxu0
        %v3235 = vadd.f32 0.0, %v3234
        %v3236 = vpop.f32.mrf.mxu0
        %v3237 = vpop.f32.mrf.mxu0
        %v3238 = vadd.f32 0.0, %v3237
        %v3239 = vpop.f32.mrf.mxu0
        %3240 = vmatprep.mubr.bf16.mxu0 0
        %3241 = vmatmul.mubr.bf16.gmra.mxu0 %v3058
        %v3242 = vpop.f32.mrf.mxu0
        %v3243 = vadd.f32 0.0, %v3242
        %v3244 = vpop.f32.mrf.mxu0
        %v3245 = vpop.f32.mrf.mxu0
        %v3246 = vadd.f32 0.0, %v3245
        %v3247 = vpop.f32.mrf.mxu0
        %3248 = vmatprep.mubr.bf16.mxu0 0
        %3249 = vmatmul.mubr.bf16.gmra.mxu0 %v3059
        %v3250 = vpop.f32.mrf.mxu0
        %v3251 = vadd.f32 0.0, %v3250
        %v3252 = vpop.f32.mrf.mxu0
        %v3253 = vpop.f32.mrf.mxu0
        %v3254 = vadd.f32 0.0, %v3253
        %v3255 = vpop.f32.mrf.mxu0
        %3256 = vmatprep.mubr.bf16.mxu0 0
        %3257 = vmatmul.mubr.bf16.gmra.mxu0 %v3060
        %v3258 = vpop.f32.mrf.mxu0
        %v3259 = vadd.f32 0.0, %v3258
        %v3260 = vpop.f32.mrf.mxu0
        %v3261 = vpop.f32.mrf.mxu0
        %v3262 = vadd.f32 0.0, %v3261
        %v3263 = vpop.f32.mrf.mxu0
        %3264 = vmatprep.mubr.bf16.mxu0 0
        %3265 = vmatmul.mubr.bf16.gmra.mxu0 %v3061
        %v3266 = vpop.f32.mrf.mxu0
        %v3267 = vadd.f32 0.0, %v3266
        %v3268 = vpop.f32.mrf.mxu0
        %v3269 = vpop.f32.mrf.mxu0
        %v3270 = vadd.f32 0.0, %v3269
        %v3271 = vpop.f32.mrf.mxu0
        %3272 = vmatprep.mubr.bf16.mxu0 0
        %3273 = vmatmul.mubr.bf16.gmra.mxu0 %v3062
        %v3274 = vpop.f32.mrf.mxu0
        %v3275 = vadd.f32 0.0, %v3274
        %v3276 = vpop.f32.mrf.mxu0
        %v3277 = vpop.f32.mrf.mxu0
        %v3278 = vadd.f32 0.0, %v3277
        %v3279 = vpop.f32.mrf.mxu0
        %3280 = vmatprep.mubr.bf16.mxu0 0
        %3281 = vmatmul.mubr.bf16.gmra.mxu0 %v3063
        %v3282 = vpop.f32.mrf.mxu0
        %v3283 = vadd.f32 0.0, %v3282
        %v3284 = vpop.f32.mrf.mxu0
        %v3285 = vpop.f32.mrf.mxu0
        %v3286 = vadd.f32 0.0, %v3285
        %v3287 = vpop.f32.mrf.mxu0
        %3288 = vdwg.mxu0
        %v3289 = vadd.f32 %v2839, %v3163
        %v3290 = vadd.f32 %v2840, %v3166
        %v3291 = vadd.f32 %v2841, %v3171
        %v3292 = vadd.f32 %v2842, %v3174
        %v3293 = vadd.f32 %v2843, %v3179
        %v3294 = vadd.f32 %v2844, %v3182
        %v3295 = vadd.f32 %v2845, %v3187
        %v3296 = vadd.f32 %v2846, %v3190
        %v3297 = vadd.f32 %v2847, %v3195
        %v3298 = vadd.f32 %v2848, %v3198
        %v3299 = vadd.f32 %v2849, %v3203
        %v3300 = vadd.f32 %v2850, %v3206
        %v3301 = vadd.f32 %v2851, %v3211
        %v3302 = vadd.f32 %v2852, %v3214
        %v3303 = vadd.f32 %v2853, %v3219
        %v3304 = vadd.f32 %v2854, %v3222
        %v3305 = vadd.f32 %v2855, %v3227
        %v3306 = vadd.f32 %v2856, %v3230
        %v3307 = vadd.f32 %v2857, %v3235
        %v3308 = vadd.f32 %v2858, %v3238
        %v3309 = vadd.f32 %v2859, %v3243
        %v3310 = vadd.f32 %v2860, %v3246
        %v3311 = vadd.f32 %v2861, %v3251
        %v3312 = vadd.f32 %v2862, %v3254
        %v3313 = vadd.f32 %v2863, %v3259
        %v3314 = vadd.f32 %v2864, %v3262
        %v3315 = vadd.f32 %v2865, %v3267
        %v3316 = vadd.f32 %v2866, %v3270
        %v3317 = vadd.f32 %v2867, %v3275
        %v3318 = vadd.f32 %v2868, %v3278
        %v3319 = vadd.f32 %v2869, %v3283
        %v3320 = vadd.f32 %v2870, %v3286
        %s3321 = sadd.s32 %s185, 2
        %s3322 = smul.u32 %s3321, 3
        %s3323 = smul.addr %s3322, 4
        %s3324 = scalar_lea.vmem %s182, %s3323
        %v3325 = vld [vmem:[%s3324] sm:$0xf]
        %v3326 = vld [vmem:[%s3324 + $0x4] sm:$0xf]
        %v3327 = vld [vmem:[%s3324 + $0x8] sm:$0x1]
        %v3328 = vld [vmem:[%s3324 + $0xc] sm:$0xf]
        %v3329 = vld [vmem:[%s3324 + $0x10] sm:$0xf]
        %v3330 = vld [vmem:[%s3324 + $0x14] sm:$0x1]
        %v3331 = vld [vmem:[%s3324 + $0x18] sm:$0xf]
        %v3332 = vld [vmem:[%s3324 + $0x1c] sm:$0xf]
        %v3333 = vld [vmem:[%s3324 + $0x20] sm:$0x1]
        %v3334 = vld [vmem:[%s3324 + $0x24] sm:$0xf]
        %v3335 = vld [vmem:[%s3324 + $0x28] sm:$0xf]
        %v3336 = vld [vmem:[%s3324 + $0x2c] sm:$0x1]
        %v3337 = vld [vmem:[%s3324 + $0x30] sm:$0xf]
        %v3338 = vld [vmem:[%s3324 + $0x34] sm:$0xf]
        %v3339 = vld [vmem:[%s3324 + $0x38] sm:$0x1]
        %v3340 = vld [vmem:[%s3324 + $0x3c] sm:$0xf]
        %v3341 = vld [vmem:[%s3324 + $0x40] sm:$0xf]
        %v3342 = vld [vmem:[%s3324 + $0x44] sm:$0x1]
        %v3343 = vld [vmem:[%s3324 + $0x48] sm:$0xf]
        %v3344 = vld [vmem:[%s3324 + $0x4c] sm:$0xf]
        %v3345 = vld [vmem:[%s3324 + $0x50] sm:$0x1]
        %v3346 = vld [vmem:[%s3324 + $0x54] sm:$0xf]
        %v3347 = vld [vmem:[%s3324 + $0x58] sm:$0xf]
        %v3348 = vld [vmem:[%s3324 + $0x5c] sm:$0x1]
        %v3349 = vld [vmem:[%s3324 + $0x60] sm:$0xf]
        %v3350 = vld [vmem:[%s3324 + $0x64] sm:$0xf]
        %v3351 = vld [vmem:[%s3324 + $0x68] sm:$0x1]
        %v3352 = vld [vmem:[%s3324 + $0x6c] sm:$0xf]
        %v3353 = vld [vmem:[%s3324 + $0x70] sm:$0xf]
        %v3354 = vld [vmem:[%s3324 + $0x74] sm:$0x1]
        %v3355 = vld [vmem:[%s3324 + $0x78] sm:$0xf]
        %v3356 = vld [vmem:[%s3324 + $0x7c] sm:$0xf]
        %v3357 = vld [vmem:[%s3324 + $0x80] sm:$0x1]
        %v3358 = vld [vmem:[%s3324 + $0x84] sm:$0xf]
        %v3359 = vld [vmem:[%s3324 + $0x88] sm:$0xf]
        %v3360 = vld [vmem:[%s3324 + $0x8c] sm:$0x1]
        %v3361 = vld [vmem:[%s3324 + $0x90] sm:$0xf]
        %v3362 = vld [vmem:[%s3324 + $0x94] sm:$0xf]
        %v3363 = vld [vmem:[%s3324 + $0x98] sm:$0x1]
        %v3364 = vld [vmem:[%s3324 + $0x9c] sm:$0xf]
        %v3365 = vld [vmem:[%s3324 + $0xa0] sm:$0xf]
        %v3366 = vld [vmem:[%s3324 + $0xa4] sm:$0x1]
        %v3367 = vld [vmem:[%s3324 + $0xa8] sm:$0xf]
        %v3368 = vld [vmem:[%s3324 + $0xac] sm:$0xf]
        %v3369 = vld [vmem:[%s3324 + $0xb0] sm:$0x1]
        %v3370 = vld [vmem:[%s3324 + $0xb4] sm:$0xf]
        %v3371 = vld [vmem:[%s3324 + $0xb8] sm:$0xf]
        %v3372 = vld [vmem:[%s3324 + $0xbc] sm:$0x1]
        %s3373 = scalar_lea.vmem %s1, 384
        %v3374 = vld [vmem:[%s3373] sm:$0xf]
        %v3375 = vld [vmem:[%s3373 + $0x4] sm:$0xf]
        %v3376 = vld [vmem:[%s3373 + $0x8] sm:$0xf]
        %v3377 = vld [vmem:[%s3373 + $0xc] sm:$0xf]
        %v3378 = vld [vmem:[%s3373 + $0x10] sm:$0xf]
        %v3379 = vld [vmem:[%s3373 + $0x14] sm:$0xf]
        %v3380 = vld [vmem:[%s3373 + $0x18] sm:$0xf]
        %v3381 = vld [vmem:[%s3373 + $0x1c] sm:$0xf]
        %v3382 = vld [vmem:[%s3373 + $0x20] sm:$0xf]
        %v3383 = vld [vmem:[%s3373 + $0x24] sm:$0xf]
        %v3384 = vld [vmem:[%s3373 + $0x28] sm:$0xf]
        %v3385 = vld [vmem:[%s3373 + $0x2c] sm:$0xf]
        %v3386 = vld [vmem:[%s3373 + $0x30] sm:$0xf]
        %v3387 = vld [vmem:[%s3373 + $0x34] sm:$0xf]
        %v3388 = vld [vmem:[%s3373 + $0x38] sm:$0xf]
        %v3389 = vld [vmem:[%s3373 + $0x3c] sm:$0xf]
        %v3422 = vunpack.c.l.b16 %v3325
        %v3423 = vunpack.c.l.b16 %v3326
        %v3424 = vunpack.c.l.b16 %v3328
        %v3425 = vunpack.c.l.b16 %v3329
        %v3426 = vunpack.c.l.b16 %v3331
        %v3427 = vunpack.c.l.b16 %v3332
        %v3428 = vunpack.c.l.b16 %v3334
        %v3429 = vunpack.c.l.b16 %v3335
        %v3430 = vunpack.c.l.b16 %v3337
        %v3431 = vunpack.c.l.b16 %v3338
        %v3432 = vunpack.c.l.b16 %v3340
        %v3433 = vunpack.c.l.b16 %v3341
        %v3434 = vunpack.c.l.b16 %v3343
        %v3435 = vunpack.c.l.b16 %v3344
        %v3436 = vunpack.c.l.b16 %v3346
        %v3437 = vunpack.c.l.b16 %v3347
        %v3438 = vunpack.c.l.b16 %v3349
        %v3439 = vunpack.c.l.b16 %v3350
        %v3440 = vunpack.c.l.b16 %v3352
        %v3441 = vunpack.c.l.b16 %v3353
        %v3442 = vunpack.c.l.b16 %v3355
        %v3443 = vunpack.c.l.b16 %v3356
        %v3444 = vunpack.c.l.b16 %v3358
        %v3445 = vunpack.c.l.b16 %v3359
        %v3446 = vunpack.c.l.b16 %v3361
        %v3447 = vunpack.c.l.b16 %v3362
        %v3448 = vunpack.c.l.b16 %v3364
        %v3449 = vunpack.c.l.b16 %v3365
        %v3450 = vunpack.c.l.b16 %v3367
        %v3451 = vunpack.c.l.b16 %v3368
        %v3452 = vunpack.c.l.b16 %v3370
        %v3453 = vunpack.c.l.b16 %v3371
        %v3454 = vpack.c.b16 %v3423, %v3422
        %v3455 = vpack.c.b16 %v3425, %v3424
        %v3456 = vpack.c.b16 %v3427, %v3426
        %v3457 = vpack.c.b16 %v3429, %v3428
        %v3458 = vpack.c.b16 %v3431, %v3430
        %v3459 = vpack.c.b16 %v3433, %v3432
        %v3460 = vpack.c.b16 %v3435, %v3434
        %v3461 = vpack.c.b16 %v3437, %v3436
        %v3462 = vpack.c.b16 %v3439, %v3438
        %v3463 = vpack.c.b16 %v3441, %v3440
        %v3464 = vpack.c.b16 %v3443, %v3442
        %v3465 = vpack.c.b16 %v3445, %v3444
        %v3466 = vpack.c.b16 %v3447, %v3446
        %v3467 = vpack.c.b16 %v3449, %v3448
        %v3468 = vpack.c.b16 %v3451, %v3450
        %v3469 = vpack.c.b16 %v3453, %v3452
        %v3502 = vunpack.c.l.b16 %v3374
        %v3503 = vunpack.c.l.b16 %v3375
        %v3504 = vunpack.c.l.b16 %v3376
        %v3505 = vunpack.c.l.b16 %v3377
        %v3506 = vunpack.c.l.b16 %v3378
        %v3507 = vunpack.c.l.b16 %v3379
        %v3508 = vunpack.c.l.b16 %v3380
        %v3509 = vunpack.c.l.b16 %v3381
        %v3510 = vunpack.c.l.b16 %v3382
        %v3511 = vunpack.c.l.b16 %v3383
        %v3512 = vunpack.c.l.b16 %v3384
        %v3513 = vunpack.c.l.b16 %v3385
        %v3514 = vunpack.c.l.b16 %v3386
        %v3515 = vunpack.c.l.b16 %v3387
        %v3516 = vunpack.c.l.b16 %v3388
        %v3517 = vunpack.c.l.b16 %v3389
        %v3518 = vpack.c.b16 %v3503, %v3502
        %v3519 = vpack.c.b16 %v3505, %v3504
        %v3520 = vpack.c.b16 %v3507, %v3506
        %v3521 = vpack.c.b16 %v3509, %v3508
        %v3522 = vpack.c.b16 %v3511, %v3510
        %v3523 = vpack.c.b16 %v3513, %v3512
        %v3524 = vpack.c.b16 %v3515, %v3514
        %v3525 = vpack.c.b16 %v3517, %v3516
        %3534 = vmatprep.subr.bf16.mxu0 0
        %3535 = vmatpush1.bf16.msra.mxu0 %v3525
        %3536 = vmatprep.subr.bf16.mxu0 0
        %3537 = vmatpush1.bf16.msra.mxu0 %v3524
        %3538 = vmatprep.subr.bf16.mxu0 0
        %3539 = vmatpush1.bf16.msra.mxu0 %v3523
        %3540 = vmatprep.subr.bf16.mxu0 0
        %3541 = vmatpush1.bf16.msra.mxu0 %v3522
        %3542 = vmatprep.subr.bf16.mxu0 0
        %3543 = vmatpush1.bf16.msra.mxu0 %v3521
        %3544 = vmatprep.subr.bf16.mxu0 0
        %3545 = vmatpush1.bf16.msra.mxu0 %v3520
        %3546 = vmatprep.subr.bf16.mxu0 0
        %3547 = vmatpush1.bf16.msra.mxu0 %v3519
        %3548 = vmatprep.subr.bf16.mxu0 0
        %3549 = vmatpush1.bf16.msra.mxu0 %v3518
        %3550 = vmatprep.subr.bf16.mxu0 0
        %3551 = vmatpush2.bf16.msra.mxu0 0
        %3552 = vmatprep.subr.bf16.mxu0 0
        %3553 = vmatpush2.bf16.msra.mxu0 0
        %3554 = vmatprep.subr.bf16.mxu0 0
        %3555 = vmatpush2.bf16.msra.mxu0 0
        %3556 = vmatprep.subr.bf16.mxu0 0
        %3557 = vmatpush2.bf16.msra.mxu0 0
        %3558 = vmatprep.subr.bf16.mxu0 0
        %3559 = vmatpush2.bf16.msra.mxu0 0
        %3560 = vmatprep.subr.bf16.mxu0 0
        %3561 = vmatpush2.bf16.msra.mxu0 0
        %3562 = vmatprep.subr.bf16.mxu0 0
        %3563 = vmatpush2.bf16.msra.mxu0 0
        %3564 = vmatprep.subr.bf16.mxu0 0
        %3565 = vmatpush2.bf16.msra.mxu0 0
        %3566 = vmatprep.mubr.bf16.mxu0 0
        %3567 = vmatmul.mubr.bf16.gmra.mxu0 %v3454
        %v3568 = vpop.f32.mrf.mxu0
        %v3569 = vadd.f32 0.0, %v3568
        %v3570 = vpop.f32.mrf.mxu0
        %v3571 = vpop.f32.mrf.mxu0
        %v3572 = vadd.f32 0.0, %v3571
        %v3573 = vpop.f32.mrf.mxu0
        %3574 = vmatprep.mubr.bf16.mxu0 0
        %3575 = vmatmul.mubr.bf16.gmra.mxu0 %v3455
        %v3576 = vpop.f32.mrf.mxu0
        %v3577 = vadd.f32 0.0, %v3576
        %v3578 = vpop.f32.mrf.mxu0
        %v3579 = vpop.f32.mrf.mxu0
        %v3580 = vadd.f32 0.0, %v3579
        %v3581 = vpop.f32.mrf.mxu0
        %3582 = vmatprep.mubr.bf16.mxu0 0
        %3583 = vmatmul.mubr.bf16.gmra.mxu0 %v3456
        %v3584 = vpop.f32.mrf.mxu0
        %v3585 = vadd.f32 0.0, %v3584
        %v3586 = vpop.f32.mrf.mxu0
        %v3587 = vpop.f32.mrf.mxu0
        %v3588 = vadd.f32 0.0, %v3587
        %v3589 = vpop.f32.mrf.mxu0
        %3590 = vmatprep.mubr.bf16.mxu0 0
        %3591 = vmatmul.mubr.bf16.gmra.mxu0 %v3457
        %v3592 = vpop.f32.mrf.mxu0
        %v3593 = vadd.f32 0.0, %v3592
        %v3594 = vpop.f32.mrf.mxu0
        %v3595 = vpop.f32.mrf.mxu0
        %v3596 = vadd.f32 0.0, %v3595
        %v3597 = vpop.f32.mrf.mxu0
        %3598 = vmatprep.mubr.bf16.mxu0 0
        %3599 = vmatmul.mubr.bf16.gmra.mxu0 %v3458
        %v3600 = vpop.f32.mrf.mxu0
        %v3601 = vadd.f32 0.0, %v3600
        %v3602 = vpop.f32.mrf.mxu0
        %v3603 = vpop.f32.mrf.mxu0
        %v3604 = vadd.f32 0.0, %v3603
        %v3605 = vpop.f32.mrf.mxu0
        %3606 = vmatprep.mubr.bf16.mxu0 0
        %3607 = vmatmul.mubr.bf16.gmra.mxu0 %v3459
        %v3608 = vpop.f32.mrf.mxu0
        %v3609 = vadd.f32 0.0, %v3608
        %v3610 = vpop.f32.mrf.mxu0
        %v3611 = vpop.f32.mrf.mxu0
        %v3612 = vadd.f32 0.0, %v3611
        %v3613 = vpop.f32.mrf.mxu0
        %3614 = vmatprep.mubr.bf16.mxu0 0
        %3615 = vmatmul.mubr.bf16.gmra.mxu0 %v3460
        %v3616 = vpop.f32.mrf.mxu0
        %v3617 = vadd.f32 0.0, %v3616
        %v3618 = vpop.f32.mrf.mxu0
        %v3619 = vpop.f32.mrf.mxu0
        %v3620 = vadd.f32 0.0, %v3619
        %v3621 = vpop.f32.mrf.mxu0
        %3622 = vmatprep.mubr.bf16.mxu0 0
        %3623 = vmatmul.mubr.bf16.gmra.mxu0 %v3461
        %v3624 = vpop.f32.mrf.mxu0
        %v3625 = vadd.f32 0.0, %v3624
        %v3626 = vpop.f32.mrf.mxu0
        %v3627 = vpop.f32.mrf.mxu0
        %v3628 = vadd.f32 0.0, %v3627
        %v3629 = vpop.f32.mrf.mxu0
        %3630 = vmatprep.mubr.bf16.mxu0 0
        %3631 = vmatmul.mubr.bf16.gmra.mxu0 %v3462
        %v3632 = vpop.f32.mrf.mxu0
        %v3633 = vadd.f32 0.0, %v3632
        %v3634 = vpop.f32.mrf.mxu0
        %v3635 = vpop.f32.mrf.mxu0
        %v3636 = vadd.f32 0.0, %v3635
        %v3637 = vpop.f32.mrf.mxu0
        %3638 = vmatprep.mubr.bf16.mxu0 0
        %3639 = vmatmul.mubr.bf16.gmra.mxu0 %v3463
        %v3640 = vpop.f32.mrf.mxu0
        %v3641 = vadd.f32 0.0, %v3640
        %v3642 = vpop.f32.mrf.mxu0
        %v3643 = vpop.f32.mrf.mxu0
        %v3644 = vadd.f32 0.0, %v3643
        %v3645 = vpop.f32.mrf.mxu0
        %3646 = vmatprep.mubr.bf16.mxu0 0
        %3647 = vmatmul.mubr.bf16.gmra.mxu0 %v3464
        %v3648 = vpop.f32.mrf.mxu0
        %v3649 = vadd.f32 0.0, %v3648
        %v3650 = vpop.f32.mrf.mxu0
        %v3651 = vpop.f32.mrf.mxu0
        %v3652 = vadd.f32 0.0, %v3651
        %v3653 = vpop.f32.mrf.mxu0
        %3654 = vmatprep.mubr.bf16.mxu0 0
        %3655 = vmatmul.mubr.bf16.gmra.mxu0 %v3465
        %v3656 = vpop.f32.mrf.mxu0
        %v3657 = vadd.f32 0.0, %v3656
        %v3658 = vpop.f32.mrf.mxu0
        %v3659 = vpop.f32.mrf.mxu0
        %v3660 = vadd.f32 0.0, %v3659
        %v3661 = vpop.f32.mrf.mxu0
        %3662 = vmatprep.mubr.bf16.mxu0 0
        %3663 = vmatmul.mubr.bf16.gmra.mxu0 %v3466
        %v3664 = vpop.f32.mrf.mxu0
        %v3665 = vadd.f32 0.0, %v3664
        %v3666 = vpop.f32.mrf.mxu0
        %v3667 = vpop.f32.mrf.mxu0
        %v3668 = vadd.f32 0.0, %v3667
        %v3669 = vpop.f32.mrf.mxu0
        %3670 = vmatprep.mubr.bf16.mxu0 0
        %3671 = vmatmul.mubr.bf16.gmra.mxu0 %v3467
        %v3672 = vpop.f32.mrf.mxu0
        %v3673 = vadd.f32 0.0, %v3672
        %v3674 = vpop.f32.mrf.mxu0
        %v3675 = vpop.f32.mrf.mxu0
        %v3676 = vadd.f32 0.0, %v3675
        %v3677 = vpop.f32.mrf.mxu0
        %3678 = vmatprep.mubr.bf16.mxu0 0
        %3679 = vmatmul.mubr.bf16.gmra.mxu0 %v3468
        %v3680 = vpop.f32.mrf.mxu0
        %v3681 = vadd.f32 0.0, %v3680
        %v3682 = vpop.f32.mrf.mxu0
        %v3683 = vpop.f32.mrf.mxu0
        %v3684 = vadd.f32 0.0, %v3683
        %v3685 = vpop.f32.mrf.mxu0
        %3686 = vmatprep.mubr.bf16.mxu0 0
        %3687 = vmatmul.mubr.bf16.gmra.mxu0 %v3469
        %v3688 = vpop.f32.mrf.mxu0
        %v3689 = vadd.f32 0.0, %v3688
        %v3690 = vpop.f32.mrf.mxu0
        %v3691 = vpop.f32.mrf.mxu0
        %v3692 = vadd.f32 0.0, %v3691
        %v3693 = vpop.f32.mrf.mxu0
        %3694 = vdwg.mxu0
        %v3695 = vadd.f32 %v3289, %v3569
        %v3696 = vadd.f32 %v3290, %v3572
        %v3697 = vadd.f32 %v3291, %v3577
        %v3698 = vadd.f32 %v3292, %v3580
        %v3699 = vadd.f32 %v3293, %v3585
        %v3700 = vadd.f32 %v3294, %v3588
        %v3701 = vadd.f32 %v3295, %v3593
        %v3702 = vadd.f32 %v3296, %v3596
        %v3703 = vadd.f32 %v3297, %v3601
        %v3704 = vadd.f32 %v3298, %v3604
        %v3705 = vadd.f32 %v3299, %v3609
        %v3706 = vadd.f32 %v3300, %v3612
        %v3707 = vadd.f32 %v3301, %v3617
        %v3708 = vadd.f32 %v3302, %v3620
        %v3709 = vadd.f32 %v3303, %v3625
        %v3710 = vadd.f32 %v3304, %v3628
        %v3711 = vadd.f32 %v3305, %v3633
        %v3712 = vadd.f32 %v3306, %v3636
        %v3713 = vadd.f32 %v3307, %v3641
        %v3714 = vadd.f32 %v3308, %v3644
        %v3715 = vadd.f32 %v3309, %v3649
        %v3716 = vadd.f32 %v3310, %v3652
        %v3717 = vadd.f32 %v3311, %v3657
        %v3718 = vadd.f32 %v3312, %v3660
        %v3719 = vadd.f32 %v3313, %v3665
        %v3720 = vadd.f32 %v3314, %v3668
        %v3721 = vadd.f32 %v3315, %v3673
        %v3722 = vadd.f32 %v3316, %v3676
        %v3723 = vadd.f32 %v3317, %v3681
        %v3724 = vadd.f32 %v3318, %v3684
        %v3725 = vadd.f32 %v3319, %v3689
        %v3726 = vadd.f32 %v3320, %v3692
        %v3728 = vshrl.u32 %v3325, 16
        %v3730 = vrot.slane %v3728, 4
        %v3731 = vshll.u32 %v3325, 16
        %v3733 = vrot.slane %v3731, 5
        %v3734 = vor.u32 %v3730, %v3733
        %v3735 = vrot.slane %v3734, 4
        %v3737 = vshll.u32 %v3326, 16
        %v3739 = vrot.slane %v3737, 5
        %v3740 = vsel %vm599, %v3735, %v3739
        %v3741 = vshrl.u32 %v3326, 16
        %v3743 = vrot.slane %v3741, 4
        %v3744 = vor.u32 %v3743, %v3739
        %v3745 = vrot.slane %v3744, 4
        %v3747 = vshll.u32 %v3327, 16
        %v3749 = vrot.slane %v3747, 5
        %v3750 = vsel %vm599, %v3745, %v3749
        %v3752 = vshrl.u32 %v3328, 16
        %v3754 = vrot.slane %v3752, 4
        %v3755 = vshll.u32 %v3328, 16
        %v3757 = vrot.slane %v3755, 5
        %v3758 = vor.u32 %v3754, %v3757
        %v3759 = vrot.slane %v3758, 4
        %v3761 = vshll.u32 %v3329, 16
        %v3763 = vrot.slane %v3761, 5
        %v3764 = vsel %vm599, %v3759, %v3763
        %v3765 = vshrl.u32 %v3329, 16
        %v3767 = vrot.slane %v3765, 4
        %v3768 = vor.u32 %v3767, %v3763
        %v3769 = vrot.slane %v3768, 4
        %v3771 = vshll.u32 %v3330, 16
        %v3773 = vrot.slane %v3771, 5
        %v3774 = vsel %vm599, %v3769, %v3773
        %v3776 = vshrl.u32 %v3331, 16
        %v3778 = vrot.slane %v3776, 4
        %v3779 = vshll.u32 %v3331, 16
        %v3781 = vrot.slane %v3779, 5
        %v3782 = vor.u32 %v3778, %v3781
        %v3783 = vrot.slane %v3782, 4
        %v3785 = vshll.u32 %v3332, 16
        %v3787 = vrot.slane %v3785, 5
        %v3788 = vsel %vm599, %v3783, %v3787
        %v3789 = vshrl.u32 %v3332, 16
        %v3791 = vrot.slane %v3789, 4
        %v3792 = vor.u32 %v3791, %v3787
        %v3793 = vrot.slane %v3792, 4
        %v3795 = vshll.u32 %v3333, 16
        %v3797 = vrot.slane %v3795, 5
        %v3798 = vsel %vm599, %v3793, %v3797
        %v3800 = vshrl.u32 %v3334, 16
        %v3802 = vrot.slane %v3800, 4
        %v3803 = vshll.u32 %v3334, 16
        %v3805 = vrot.slane %v3803, 5
        %v3806 = vor.u32 %v3802, %v3805
        %v3807 = vrot.slane %v3806, 4
        %v3809 = vshll.u32 %v3335, 16
        %v3811 = vrot.slane %v3809, 5
        %v3812 = vsel %vm599, %v3807, %v3811
        %v3813 = vshrl.u32 %v3335, 16
        %v3815 = vrot.slane %v3813, 4
        %v3816 = vor.u32 %v3815, %v3811
        %v3817 = vrot.slane %v3816, 4
        %v3819 = vshll.u32 %v3336, 16
        %v3821 = vrot.slane %v3819, 5
        %v3822 = vsel %vm599, %v3817, %v3821
        %v3824 = vshrl.u32 %v3337, 16
        %v3826 = vrot.slane %v3824, 4
        %v3827 = vshll.u32 %v3337, 16
        %v3829 = vrot.slane %v3827, 5
        %v3830 = vor.u32 %v3826, %v3829
        %v3831 = vrot.slane %v3830, 4
        %v3833 = vshll.u32 %v3338, 16
        %v3835 = vrot.slane %v3833, 5
        %v3836 = vsel %vm599, %v3831, %v3835
        %v3837 = vshrl.u32 %v3338, 16
        %v3839 = vrot.slane %v3837, 4
        %v3840 = vor.u32 %v3839, %v3835
        %v3841 = vrot.slane %v3840, 4
        %v3843 = vshll.u32 %v3339, 16
        %v3845 = vrot.slane %v3843, 5
        %v3846 = vsel %vm599, %v3841, %v3845
        %v3848 = vshrl.u32 %v3340, 16
        %v3850 = vrot.slane %v3848, 4
        %v3851 = vshll.u32 %v3340, 16
        %v3853 = vrot.slane %v3851, 5
        %v3854 = vor.u32 %v3850, %v3853
        %v3855 = vrot.slane %v3854, 4
        %v3857 = vshll.u32 %v3341, 16
        %v3859 = vrot.slane %v3857, 5
        %v3860 = vsel %vm599, %v3855, %v3859
        %v3861 = vshrl.u32 %v3341, 16
        %v3863 = vrot.slane %v3861, 4
        %v3864 = vor.u32 %v3863, %v3859
        %v3865 = vrot.slane %v3864, 4
        %v3867 = vshll.u32 %v3342, 16
        %v3869 = vrot.slane %v3867, 5
        %v3870 = vsel %vm599, %v3865, %v3869
        %v3872 = vshrl.u32 %v3343, 16
        %v3874 = vrot.slane %v3872, 4
        %v3875 = vshll.u32 %v3343, 16
        %v3877 = vrot.slane %v3875, 5
        %v3878 = vor.u32 %v3874, %v3877
        %v3879 = vrot.slane %v3878, 4
        %v3881 = vshll.u32 %v3344, 16
        %v3883 = vrot.slane %v3881, 5
        %v3884 = vsel %vm599, %v3879, %v3883
        %v3885 = vshrl.u32 %v3344, 16
        %v3887 = vrot.slane %v3885, 4
        %v3888 = vor.u32 %v3887, %v3883
        %v3889 = vrot.slane %v3888, 4
        %v3891 = vshll.u32 %v3345, 16
        %v3893 = vrot.slane %v3891, 5
        %v3894 = vsel %vm599, %v3889, %v3893
        %v3896 = vshrl.u32 %v3346, 16
        %v3898 = vrot.slane %v3896, 4
        %v3899 = vshll.u32 %v3346, 16
        %v3901 = vrot.slane %v3899, 5
        %v3902 = vor.u32 %v3898, %v3901
        %v3903 = vrot.slane %v3902, 4
        %v3905 = vshll.u32 %v3347, 16
        %v3907 = vrot.slane %v3905, 5
        %v3908 = vsel %vm599, %v3903, %v3907
        %v3909 = vshrl.u32 %v3347, 16
        %v3911 = vrot.slane %v3909, 4
        %v3912 = vor.u32 %v3911, %v3907
        %v3913 = vrot.slane %v3912, 4
        %v3915 = vshll.u32 %v3348, 16
        %v3917 = vrot.slane %v3915, 5
        %v3918 = vsel %vm599, %v3913, %v3917
        %v3920 = vshrl.u32 %v3349, 16
        %v3922 = vrot.slane %v3920, 4
        %v3923 = vshll.u32 %v3349, 16
        %v3925 = vrot.slane %v3923, 5
        %v3926 = vor.u32 %v3922, %v3925
        %v3927 = vrot.slane %v3926, 4
        %v3929 = vshll.u32 %v3350, 16
        %v3931 = vrot.slane %v3929, 5
        %v3932 = vsel %vm599, %v3927, %v3931
        %v3933 = vshrl.u32 %v3350, 16
        %v3935 = vrot.slane %v3933, 4
        %v3936 = vor.u32 %v3935, %v3931
        %v3937 = vrot.slane %v3936, 4
        %v3939 = vshll.u32 %v3351, 16
        %v3941 = vrot.slane %v3939, 5
        %v3942 = vsel %vm599, %v3937, %v3941
        %v3944 = vshrl.u32 %v3352, 16
        %v3946 = vrot.slane %v3944, 4
        %v3947 = vshll.u32 %v3352, 16
        %v3949 = vrot.slane %v3947, 5
        %v3950 = vor.u32 %v3946, %v3949
        %v3951 = vrot.slane %v3950, 4
        %v3953 = vshll.u32 %v3353, 16
        %v3955 = vrot.slane %v3953, 5
        %v3956 = vsel %vm599, %v3951, %v3955
        %v3957 = vshrl.u32 %v3353, 16
        %v3959 = vrot.slane %v3957, 4
        %v3960 = vor.u32 %v3959, %v3955
        %v3961 = vrot.slane %v3960, 4
        %v3963 = vshll.u32 %v3354, 16
        %v3965 = vrot.slane %v3963, 5
        %v3966 = vsel %vm599, %v3961, %v3965
        %v3968 = vshrl.u32 %v3355, 16
        %v3970 = vrot.slane %v3968, 4
        %v3971 = vshll.u32 %v3355, 16
        %v3973 = vrot.slane %v3971, 5
        %v3974 = vor.u32 %v3970, %v3973
        %v3975 = vrot.slane %v3974, 4
        %v3977 = vshll.u32 %v3356, 16
        %v3979 = vrot.slane %v3977, 5
        %v3980 = vsel %vm599, %v3975, %v3979
        %v3981 = vshrl.u32 %v3356, 16
        %v3983 = vrot.slane %v3981, 4
        %v3984 = vor.u32 %v3983, %v3979
        %v3985 = vrot.slane %v3984, 4
        %v3987 = vshll.u32 %v3357, 16
        %v3989 = vrot.slane %v3987, 5
        %v3990 = vsel %vm599, %v3985, %v3989
        %v3992 = vshrl.u32 %v3358, 16
        %v3994 = vrot.slane %v3992, 4
        %v3995 = vshll.u32 %v3358, 16
        %v3997 = vrot.slane %v3995, 5
        %v3998 = vor.u32 %v3994, %v3997
        %v3999 = vrot.slane %v3998, 4
        %v4001 = vshll.u32 %v3359, 16
        %v4003 = vrot.slane %v4001, 5
        %v4004 = vsel %vm599, %v3999, %v4003
        %v4005 = vshrl.u32 %v3359, 16
        %v4007 = vrot.slane %v4005, 4
        %v4008 = vor.u32 %v4007, %v4003
        %v4009 = vrot.slane %v4008, 4
        %v4011 = vshll.u32 %v3360, 16
        %v4013 = vrot.slane %v4011, 5
        %v4014 = vsel %vm599, %v4009, %v4013
        %v4016 = vshrl.u32 %v3361, 16
        %v4018 = vrot.slane %v4016, 4
        %v4019 = vshll.u32 %v3361, 16
        %v4021 = vrot.slane %v4019, 5
        %v4022 = vor.u32 %v4018, %v4021
        %v4023 = vrot.slane %v4022, 4
        %v4025 = vshll.u32 %v3362, 16
        %v4027 = vrot.slane %v4025, 5
        %v4028 = vsel %vm599, %v4023, %v4027
        %v4029 = vshrl.u32 %v3362, 16
        %v4031 = vrot.slane %v4029, 4
        %v4032 = vor.u32 %v4031, %v4027
        %v4033 = vrot.slane %v4032, 4
        %v4035 = vshll.u32 %v3363, 16
        %v4037 = vrot.slane %v4035, 5
        %v4038 = vsel %vm599, %v4033, %v4037
        %v4040 = vshrl.u32 %v3364, 16
        %v4042 = vrot.slane %v4040, 4
        %v4043 = vshll.u32 %v3364, 16
        %v4045 = vrot.slane %v4043, 5
        %v4046 = vor.u32 %v4042, %v4045
        %v4047 = vrot.slane %v4046, 4
        %v4049 = vshll.u32 %v3365, 16
        %v4051 = vrot.slane %v4049, 5
        %v4052 = vsel %vm599, %v4047, %v4051
        %v4053 = vshrl.u32 %v3365, 16
        %v4055 = vrot.slane %v4053, 4
        %v4056 = vor.u32 %v4055, %v4051
        %v4057 = vrot.slane %v4056, 4
        %v4059 = vshll.u32 %v3366, 16
        %v4061 = vrot.slane %v4059, 5
        %v4062 = vsel %vm599, %v4057, %v4061
        %v4064 = vshrl.u32 %v3367, 16
        %v4066 = vrot.slane %v4064, 4
        %v4067 = vshll.u32 %v3367, 16
        %v4069 = vrot.slane %v4067, 5
        %v4070 = vor.u32 %v4066, %v4069
        %v4071 = vrot.slane %v4070, 4
        %v4073 = vshll.u32 %v3368, 16
        %v4075 = vrot.slane %v4073, 5
        %v4076 = vsel %vm599, %v4071, %v4075
        %v4077 = vshrl.u32 %v3368, 16
        %v4079 = vrot.slane %v4077, 4
        %v4080 = vor.u32 %v4079, %v4075
        %v4081 = vrot.slane %v4080, 4
        %v4083 = vshll.u32 %v3369, 16
        %v4085 = vrot.slane %v4083, 5
        %v4086 = vsel %vm599, %v4081, %v4085
        %v4088 = vshrl.u32 %v3370, 16
        %v4090 = vrot.slane %v4088, 4
        %v4091 = vshll.u32 %v3370, 16
        %v4093 = vrot.slane %v4091, 5
        %v4094 = vor.u32 %v4090, %v4093
        %v4095 = vrot.slane %v4094, 4
        %v4097 = vshll.u32 %v3371, 16
        %v4099 = vrot.slane %v4097, 5
        %v4100 = vsel %vm599, %v4095, %v4099
        %v4101 = vshrl.u32 %v3371, 16
        %v4103 = vrot.slane %v4101, 4
        %v4104 = vor.u32 %v4103, %v4099
        %v4105 = vrot.slane %v4104, 4
        %v4107 = vshll.u32 %v3372, 16
        %v4109 = vrot.slane %v4107, 5
        %v4110 = vsel %vm599, %v4105, %v4109
        %s4111 = scalar_lea.vmem %s1, 448
        %v4112 = vld [vmem:[%s4111] sm:$0xf]
        %v4113 = vld [vmem:[%s4111 + $0x4] sm:$0xf]
        %v4114 = vld [vmem:[%s4111 + $0x8] sm:$0xf]
        %v4115 = vld [vmem:[%s4111 + $0xc] sm:$0xf]
        %v4116 = vld [vmem:[%s4111 + $0x10] sm:$0xf]
        %v4117 = vld [vmem:[%s4111 + $0x14] sm:$0xf]
        %v4118 = vld [vmem:[%s4111 + $0x18] sm:$0xf]
        %v4119 = vld [vmem:[%s4111 + $0x1c] sm:$0xf]
        %v4120 = vld [vmem:[%s4111 + $0x20] sm:$0xf]
        %v4121 = vld [vmem:[%s4111 + $0x24] sm:$0xf]
        %v4122 = vld [vmem:[%s4111 + $0x28] sm:$0xf]
        %v4123 = vld [vmem:[%s4111 + $0x2c] sm:$0xf]
        %v4124 = vld [vmem:[%s4111 + $0x30] sm:$0xf]
        %v4125 = vld [vmem:[%s4111 + $0x34] sm:$0xf]
        %v4126 = vld [vmem:[%s4111 + $0x38] sm:$0xf]
        %v4127 = vld [vmem:[%s4111 + $0x3c] sm:$0xf]
        %v4128 = vunpack.c.l.b16 %v3740
        %v4129 = vunpack.c.l.b16 %v3750
        %v4130 = vunpack.c.l.b16 %v3764
        %v4131 = vunpack.c.l.b16 %v3774
        %v4132 = vunpack.c.l.b16 %v3788
        %v4133 = vunpack.c.l.b16 %v3798
        %v4134 = vunpack.c.l.b16 %v3812
        %v4135 = vunpack.c.l.b16 %v3822
        %v4136 = vunpack.c.l.b16 %v3836
        %v4137 = vunpack.c.l.b16 %v3846
        %v4138 = vunpack.c.l.b16 %v3860
        %v4139 = vunpack.c.l.b16 %v3870
        %v4140 = vunpack.c.l.b16 %v3884
        %v4141 = vunpack.c.l.b16 %v3894
        %v4142 = vunpack.c.l.b16 %v3908
        %v4143 = vunpack.c.l.b16 %v3918
        %v4144 = vunpack.c.l.b16 %v3932
        %v4145 = vunpack.c.l.b16 %v3942
        %v4146 = vunpack.c.l.b16 %v3956
        %v4147 = vunpack.c.l.b16 %v3966
        %v4148 = vunpack.c.l.b16 %v3980
        %v4149 = vunpack.c.l.b16 %v3990
        %v4150 = vunpack.c.l.b16 %v4004
        %v4151 = vunpack.c.l.b16 %v4014
        %v4152 = vunpack.c.l.b16 %v4028
        %v4153 = vunpack.c.l.b16 %v4038
        %v4154 = vunpack.c.l.b16 %v4052
        %v4155 = vunpack.c.l.b16 %v4062
        %v4156 = vunpack.c.l.b16 %v4076
        %v4157 = vunpack.c.l.b16 %v4086
        %v4158 = vunpack.c.l.b16 %v4100
        %v4159 = vunpack.c.l.b16 %v4110
        %v4160 = vpack.c.b16 %v4129, %v4128
        %v4161 = vpack.c.b16 %v4131, %v4130
        %v4162 = vpack.c.b16 %v4133, %v4132
        %v4163 = vpack.c.b16 %v4135, %v4134
        %v4164 = vpack.c.b16 %v4137, %v4136
        %v4165 = vpack.c.b16 %v4139, %v4138
        %v4166 = vpack.c.b16 %v4141, %v4140
        %v4167 = vpack.c.b16 %v4143, %v4142
        %v4168 = vpack.c.b16 %v4145, %v4144
        %v4169 = vpack.c.b16 %v4147, %v4146
        %v4170 = vpack.c.b16 %v4149, %v4148
        %v4171 = vpack.c.b16 %v4151, %v4150
        %v4172 = vpack.c.b16 %v4153, %v4152
        %v4173 = vpack.c.b16 %v4155, %v4154
        %v4174 = vpack.c.b16 %v4157, %v4156
        %v4175 = vpack.c.b16 %v4159, %v4158
        %v4208 = vunpack.c.l.b16 %v4112
        %v4209 = vunpack.c.l.b16 %v4113
        %v4210 = vunpack.c.l.b16 %v4114
        %v4211 = vunpack.c.l.b16 %v4115
        %v4212 = vunpack.c.l.b16 %v4116
        %v4213 = vunpack.c.l.b16 %v4117
        %v4214 = vunpack.c.l.b16 %v4118
        %v4215 = vunpack.c.l.b16 %v4119
        %v4216 = vunpack.c.l.b16 %v4120
        %v4217 = vunpack.c.l.b16 %v4121
        %v4218 = vunpack.c.l.b16 %v4122
        %v4219 = vunpack.c.l.b16 %v4123
        %v4220 = vunpack.c.l.b16 %v4124
        %v4221 = vunpack.c.l.b16 %v4125
        %v4222 = vunpack.c.l.b16 %v4126
        %v4223 = vunpack.c.l.b16 %v4127
        %v4224 = vpack.c.b16 %v4209, %v4208
        %v4225 = vpack.c.b16 %v4211, %v4210
        %v4226 = vpack.c.b16 %v4213, %v4212
        %v4227 = vpack.c.b16 %v4215, %v4214
        %v4228 = vpack.c.b16 %v4217, %v4216
        %v4229 = vpack.c.b16 %v4219, %v4218
        %v4230 = vpack.c.b16 %v4221, %v4220
        %v4231 = vpack.c.b16 %v4223, %v4222
        %4240 = vmatprep.subr.bf16.mxu0 0
        %4241 = vmatpush1.bf16.msra.mxu0 %v4231
        %4242 = vmatprep.subr.bf16.mxu0 0
        %4243 = vmatpush1.bf16.msra.mxu0 %v4230
        %4244 = vmatprep.subr.bf16.mxu0 0
        %4245 = vmatpush1.bf16.msra.mxu0 %v4229
        %4246 = vmatprep.subr.bf16.mxu0 0
        %4247 = vmatpush1.bf16.msra.mxu0 %v4228
        %4248 = vmatprep.subr.bf16.mxu0 0
        %4249 = vmatpush1.bf16.msra.mxu0 %v4227
        %4250 = vmatprep.subr.bf16.mxu0 0
        %4251 = vmatpush1.bf16.msra.mxu0 %v4226
        %4252 = vmatprep.subr.bf16.mxu0 0
        %4253 = vmatpush1.bf16.msra.mxu0 %v4225
        %4254 = vmatprep.subr.bf16.mxu0 0
        %4255 = vmatpush1.bf16.msra.mxu0 %v4224
        %4256 = vmatprep.subr.bf16.mxu0 0
        %4257 = vmatpush2.bf16.msra.mxu0 0
        %4258 = vmatprep.subr.bf16.mxu0 0
        %4259 = vmatpush2.bf16.msra.mxu0 0
        %4260 = vmatprep.subr.bf16.mxu0 0
        %4261 = vmatpush2.bf16.msra.mxu0 0
        %4262 = vmatprep.subr.bf16.mxu0 0
        %4263 = vmatpush2.bf16.msra.mxu0 0
        %4264 = vmatprep.subr.bf16.mxu0 0
        %4265 = vmatpush2.bf16.msra.mxu0 0
        %4266 = vmatprep.subr.bf16.mxu0 0
        %4267 = vmatpush2.bf16.msra.mxu0 0
        %4268 = vmatprep.subr.bf16.mxu0 0
        %4269 = vmatpush2.bf16.msra.mxu0 0
        %4270 = vmatprep.subr.bf16.mxu0 0
        %4271 = vmatpush2.bf16.msra.mxu0 0
        %4272 = vmatprep.mubr.bf16.mxu0 0
        %4273 = vmatmul.mubr.bf16.gmra.mxu0 %v4160
        %v4274 = vpop.f32.mrf.mxu0
        %v4275 = vadd.f32 0.0, %v4274
        %v4276 = vpop.f32.mrf.mxu0
        %v4277 = vpop.f32.mrf.mxu0
        %v4278 = vadd.f32 0.0, %v4277
        %v4279 = vpop.f32.mrf.mxu0
        %4280 = vmatprep.mubr.bf16.mxu0 0
        %4281 = vmatmul.mubr.bf16.gmra.mxu0 %v4161
        %v4282 = vpop.f32.mrf.mxu0
        %v4283 = vadd.f32 0.0, %v4282
        %v4284 = vpop.f32.mrf.mxu0
        %v4285 = vpop.f32.mrf.mxu0
        %v4286 = vadd.f32 0.0, %v4285
        %v4287 = vpop.f32.mrf.mxu0
        %4288 = vmatprep.mubr.bf16.mxu0 0
        %4289 = vmatmul.mubr.bf16.gmra.mxu0 %v4162
        %v4290 = vpop.f32.mrf.mxu0
        %v4291 = vadd.f32 0.0, %v4290
        %v4292 = vpop.f32.mrf.mxu0
        %v4293 = vpop.f32.mrf.mxu0
        %v4294 = vadd.f32 0.0, %v4293
        %v4295 = vpop.f32.mrf.mxu0
        %4296 = vmatprep.mubr.bf16.mxu0 0
        %4297 = vmatmul.mubr.bf16.gmra.mxu0 %v4163
        %v4298 = vpop.f32.mrf.mxu0
        %v4299 = vadd.f32 0.0, %v4298
        %v4300 = vpop.f32.mrf.mxu0
        %v4301 = vpop.f32.mrf.mxu0
        %v4302 = vadd.f32 0.0, %v4301
        %v4303 = vpop.f32.mrf.mxu0
        %4304 = vmatprep.mubr.bf16.mxu0 0
        %4305 = vmatmul.mubr.bf16.gmra.mxu0 %v4164
        %v4306 = vpop.f32.mrf.mxu0
        %v4307 = vadd.f32 0.0, %v4306
        %v4308 = vpop.f32.mrf.mxu0
        %v4309 = vpop.f32.mrf.mxu0
        %v4310 = vadd.f32 0.0, %v4309
        %v4311 = vpop.f32.mrf.mxu0
        %4312 = vmatprep.mubr.bf16.mxu0 0
        %4313 = vmatmul.mubr.bf16.gmra.mxu0 %v4165
        %v4314 = vpop.f32.mrf.mxu0
        %v4315 = vadd.f32 0.0, %v4314
        %v4316 = vpop.f32.mrf.mxu0
        %v4317 = vpop.f32.mrf.mxu0
        %v4318 = vadd.f32 0.0, %v4317
        %v4319 = vpop.f32.mrf.mxu0
        %4320 = vmatprep.mubr.bf16.mxu0 0
        %4321 = vmatmul.mubr.bf16.gmra.mxu0 %v4166
        %v4322 = vpop.f32.mrf.mxu0
        %v4323 = vadd.f32 0.0, %v4322
        %v4324 = vpop.f32.mrf.mxu0
        %v4325 = vpop.f32.mrf.mxu0
        %v4326 = vadd.f32 0.0, %v4325
        %v4327 = vpop.f32.mrf.mxu0
        %4328 = vmatprep.mubr.bf16.mxu0 0
        %4329 = vmatmul.mubr.bf16.gmra.mxu0 %v4167
        %v4330 = vpop.f32.mrf.mxu0
        %v4331 = vadd.f32 0.0, %v4330
        %v4332 = vpop.f32.mrf.mxu0
        %v4333 = vpop.f32.mrf.mxu0
        %v4334 = vadd.f32 0.0, %v4333
        %v4335 = vpop.f32.mrf.mxu0
        %4336 = vmatprep.mubr.bf16.mxu0 0
        %4337 = vmatmul.mubr.bf16.gmra.mxu0 %v4168
        %v4338 = vpop.f32.mrf.mxu0
        %v4339 = vadd.f32 0.0, %v4338
        %v4340 = vpop.f32.mrf.mxu0
        %v4341 = vpop.f32.mrf.mxu0
        %v4342 = vadd.f32 0.0, %v4341
        %v4343 = vpop.f32.mrf.mxu0
        %4344 = vmatprep.mubr.bf16.mxu0 0
        %4345 = vmatmul.mubr.bf16.gmra.mxu0 %v4169
        %v4346 = vpop.f32.mrf.mxu0
        %v4347 = vadd.f32 0.0, %v4346
        %v4348 = vpop.f32.mrf.mxu0
        %v4349 = vpop.f32.mrf.mxu0
        %v4350 = vadd.f32 0.0, %v4349
        %v4351 = vpop.f32.mrf.mxu0
        %4352 = vmatprep.mubr.bf16.mxu0 0
        %4353 = vmatmul.mubr.bf16.gmra.mxu0 %v4170
        %v4354 = vpop.f32.mrf.mxu0
        %v4355 = vadd.f32 0.0, %v4354
        %v4356 = vpop.f32.mrf.mxu0
        %v4357 = vpop.f32.mrf.mxu0
        %v4358 = vadd.f32 0.0, %v4357
        %v4359 = vpop.f32.mrf.mxu0
        %4360 = vmatprep.mubr.bf16.mxu0 0
        %4361 = vmatmul.mubr.bf16.gmra.mxu0 %v4171
        %v4362 = vpop.f32.mrf.mxu0
        %v4363 = vadd.f32 0.0, %v4362
        %v4364 = vpop.f32.mrf.mxu0
        %v4365 = vpop.f32.mrf.mxu0
        %v4366 = vadd.f32 0.0, %v4365
        %v4367 = vpop.f32.mrf.mxu0
        %4368 = vmatprep.mubr.bf16.mxu0 0
        %4369 = vmatmul.mubr.bf16.gmra.mxu0 %v4172
        %v4370 = vpop.f32.mrf.mxu0
        %v4371 = vadd.f32 0.0, %v4370
        %v4372 = vpop.f32.mrf.mxu0
        %v4373 = vpop.f32.mrf.mxu0
        %v4374 = vadd.f32 0.0, %v4373
        %v4375 = vpop.f32.mrf.mxu0
        %4376 = vmatprep.mubr.bf16.mxu0 0
        %4377 = vmatmul.mubr.bf16.gmra.mxu0 %v4173
        %v4378 = vpop.f32.mrf.mxu0
        %v4379 = vadd.f32 0.0, %v4378
        %v4380 = vpop.f32.mrf.mxu0
        %v4381 = vpop.f32.mrf.mxu0
        %v4382 = vadd.f32 0.0, %v4381
        %v4383 = vpop.f32.mrf.mxu0
        %4384 = vmatprep.mubr.bf16.mxu0 0
        %4385 = vmatmul.mubr.bf16.gmra.mxu0 %v4174
        %v4386 = vpop.f32.mrf.mxu0
        %v4387 = vadd.f32 0.0, %v4386
        %v4388 = vpop.f32.mrf.mxu0
        %v4389 = vpop.f32.mrf.mxu0
        %v4390 = vadd.f32 0.0, %v4389
        %v4391 = vpop.f32.mrf.mxu0
        %4392 = vmatprep.mubr.bf16.mxu0 0
        %4393 = vmatmul.mubr.bf16.gmra.mxu0 %v4175
        %v4394 = vpop.f32.mrf.mxu0
        %v4395 = vadd.f32 0.0, %v4394
        %v4396 = vpop.f32.mrf.mxu0
        %v4397 = vpop.f32.mrf.mxu0
        %v4398 = vadd.f32 0.0, %v4397
        %v4399 = vpop.f32.mrf.mxu0
        %4400 = vdwg.mxu0
        %v4401 = vadd.f32 %v3695, %v4275
        %v4402 = vadd.f32 %v3696, %v4278
        %v4403 = vadd.f32 %v3697, %v4283
        %v4404 = vadd.f32 %v3698, %v4286
        %v4405 = vadd.f32 %v3699, %v4291
        %v4406 = vadd.f32 %v3700, %v4294
        %v4407 = vadd.f32 %v3701, %v4299
        %v4408 = vadd.f32 %v3702, %v4302
        %v4409 = vadd.f32 %v3703, %v4307
        %v4410 = vadd.f32 %v3704, %v4310
        %v4411 = vadd.f32 %v3705, %v4315
        %v4412 = vadd.f32 %v3706, %v4318
        %v4413 = vadd.f32 %v3707, %v4323
        %v4414 = vadd.f32 %v3708, %v4326
        %v4415 = vadd.f32 %v3709, %v4331
        %v4416 = vadd.f32 %v3710, %v4334
        %v4417 = vadd.f32 %v3711, %v4339
        %v4418 = vadd.f32 %v3712, %v4342
        %v4419 = vadd.f32 %v3713, %v4347
        %v4420 = vadd.f32 %v3714, %v4350
        %v4421 = vadd.f32 %v3715, %v4355
        %v4422 = vadd.f32 %v3716, %v4358
        %v4423 = vadd.f32 %v3717, %v4363
        %v4424 = vadd.f32 %v3718, %v4366
        %v4425 = vadd.f32 %v3719, %v4371
        %v4426 = vadd.f32 %v3720, %v4374
        %v4427 = vadd.f32 %v3721, %v4379
        %v4428 = vadd.f32 %v3722, %v4382
        %v4429 = vadd.f32 %v3723, %v4387
        %v4430 = vadd.f32 %v3724, %v4390
        %v4431 = vadd.f32 %v3725, %v4395
        %v4432 = vadd.f32 %v3726, %v4398
        %v4449 = vrot.slane %v3325, 5
        %v4450 = vrot.slane %v4449, 4
        %v4451 = vrot.slane %v3326, 5
        %v4452 = vsel %vm1324, %v4450, %v4451
        %v4453 = vrot.slane %v4451, 4
        %v4454 = vrot.slane %v3327, 5
        %v4455 = vsel %vm1324, %v4453, %v4454
        %v4456 = vrot.slane %v3328, 5
        %v4457 = vrot.slane %v4456, 4
        %v4458 = vrot.slane %v3329, 5
        %v4459 = vsel %vm1324, %v4457, %v4458
        %v4460 = vrot.slane %v4458, 4
        %v4461 = vrot.slane %v3330, 5
        %v4462 = vsel %vm1324, %v4460, %v4461
        %v4463 = vrot.slane %v3331, 5
        %v4464 = vrot.slane %v4463, 4
        %v4465 = vrot.slane %v3332, 5
        %v4466 = vsel %vm1324, %v4464, %v4465
        %v4467 = vrot.slane %v4465, 4
        %v4468 = vrot.slane %v3333, 5
        %v4469 = vsel %vm1324, %v4467, %v4468
        %v4470 = vrot.slane %v3334, 5
        %v4471 = vrot.slane %v4470, 4
        %v4472 = vrot.slane %v3335, 5
        %v4473 = vsel %vm1324, %v4471, %v4472
        %v4474 = vrot.slane %v4472, 4
        %v4475 = vrot.slane %v3336, 5
        %v4476 = vsel %vm1324, %v4474, %v4475
        %v4477 = vrot.slane %v3337, 5
        %v4478 = vrot.slane %v4477, 4
        %v4479 = vrot.slane %v3338, 5
        %v4480 = vsel %vm1324, %v4478, %v4479
        %v4481 = vrot.slane %v4479, 4
        %v4482 = vrot.slane %v3339, 5
        %v4483 = vsel %vm1324, %v4481, %v4482
        %v4484 = vrot.slane %v3340, 5
        %v4485 = vrot.slane %v4484, 4
        %v4486 = vrot.slane %v3341, 5
        %v4487 = vsel %vm1324, %v4485, %v4486
        %v4488 = vrot.slane %v4486, 4
        %v4489 = vrot.slane %v3342, 5
        %v4490 = vsel %vm1324, %v4488, %v4489
        %v4491 = vrot.slane %v3343, 5
        %v4492 = vrot.slane %v4491, 4
        %v4493 = vrot.slane %v3344, 5
        %v4494 = vsel %vm1324, %v4492, %v4493
        %v4495 = vrot.slane %v4493, 4
        %v4496 = vrot.slane %v3345, 5
        %v4497 = vsel %vm1324, %v4495, %v4496
        %v4498 = vrot.slane %v3346, 5
        %v4499 = vrot.slane %v4498, 4
        %v4500 = vrot.slane %v3347, 5
        %v4501 = vsel %vm1324, %v4499, %v4500
        %v4502 = vrot.slane %v4500, 4
        %v4503 = vrot.slane %v3348, 5
        %v4504 = vsel %vm1324, %v4502, %v4503
        %v4505 = vrot.slane %v3349, 5
        %v4506 = vrot.slane %v4505, 4
        %v4507 = vrot.slane %v3350, 5
        %v4508 = vsel %vm1324, %v4506, %v4507
        %v4509 = vrot.slane %v4507, 4
        %v4510 = vrot.slane %v3351, 5
        %v4511 = vsel %vm1324, %v4509, %v4510
        %v4512 = vrot.slane %v3352, 5
        %v4513 = vrot.slane %v4512, 4
        %v4514 = vrot.slane %v3353, 5
        %v4515 = vsel %vm1324, %v4513, %v4514
        %v4516 = vrot.slane %v4514, 4
        %v4517 = vrot.slane %v3354, 5
        %v4518 = vsel %vm1324, %v4516, %v4517
        %v4519 = vrot.slane %v3355, 5
        %v4520 = vrot.slane %v4519, 4
        %v4521 = vrot.slane %v3356, 5
        %v4522 = vsel %vm1324, %v4520, %v4521
        %v4523 = vrot.slane %v4521, 4
        %v4524 = vrot.slane %v3357, 5
        %v4525 = vsel %vm1324, %v4523, %v4524
        %v4526 = vrot.slane %v3358, 5
        %v4527 = vrot.slane %v4526, 4
        %v4528 = vrot.slane %v3359, 5
        %v4529 = vsel %vm1324, %v4527, %v4528
        %v4530 = vrot.slane %v4528, 4
        %v4531 = vrot.slane %v3360, 5
        %v4532 = vsel %vm1324, %v4530, %v4531
        %v4533 = vrot.slane %v3361, 5
        %v4534 = vrot.slane %v4533, 4
        %v4535 = vrot.slane %v3362, 5
        %v4536 = vsel %vm1324, %v4534, %v4535
        %v4537 = vrot.slane %v4535, 4
        %v4538 = vrot.slane %v3363, 5
        %v4539 = vsel %vm1324, %v4537, %v4538
        %v4540 = vrot.slane %v3364, 5
        %v4541 = vrot.slane %v4540, 4
        %v4542 = vrot.slane %v3365, 5
        %v4543 = vsel %vm1324, %v4541, %v4542
        %v4544 = vrot.slane %v4542, 4
        %v4545 = vrot.slane %v3366, 5
        %v4546 = vsel %vm1324, %v4544, %v4545
        %v4547 = vrot.slane %v3367, 5
        %v4548 = vrot.slane %v4547, 4
        %v4549 = vrot.slane %v3368, 5
        %v4550 = vsel %vm1324, %v4548, %v4549
        %v4551 = vrot.slane %v4549, 4
        %v4552 = vrot.slane %v3369, 5
        %v4553 = vsel %vm1324, %v4551, %v4552
        %v4554 = vrot.slane %v3370, 5
        %v4555 = vrot.slane %v4554, 4
        %v4556 = vrot.slane %v3371, 5
        %v4557 = vsel %vm1324, %v4555, %v4556
        %v4558 = vrot.slane %v4556, 4
        %v4559 = vrot.slane %v3372, 5
        %v4560 = vsel %vm1324, %v4558, %v4559
        %s4561 = scalar_lea.vmem %s1, 512
        %v4562 = vld [vmem:[%s4561] sm:$0xf]
        %v4563 = vld [vmem:[%s4561 + $0x4] sm:$0xf]
        %v4564 = vld [vmem:[%s4561 + $0x8] sm:$0xf]
        %v4565 = vld [vmem:[%s4561 + $0xc] sm:$0xf]
        %v4566 = vld [vmem:[%s4561 + $0x10] sm:$0xf]
        %v4567 = vld [vmem:[%s4561 + $0x14] sm:$0xf]
        %v4568 = vld [vmem:[%s4561 + $0x18] sm:$0xf]
        %v4569 = vld [vmem:[%s4561 + $0x1c] sm:$0xf]
        %v4570 = vld [vmem:[%s4561 + $0x20] sm:$0xf]
        %v4571 = vld [vmem:[%s4561 + $0x24] sm:$0xf]
        %v4572 = vld [vmem:[%s4561 + $0x28] sm:$0xf]
        %v4573 = vld [vmem:[%s4561 + $0x2c] sm:$0xf]
        %v4574 = vld [vmem:[%s4561 + $0x30] sm:$0xf]
        %v4575 = vld [vmem:[%s4561 + $0x34] sm:$0xf]
        %v4576 = vld [vmem:[%s4561 + $0x38] sm:$0xf]
        %v4577 = vld [vmem:[%s4561 + $0x3c] sm:$0xf]
        %v4578 = vunpack.c.l.b16 %v4452
        %v4579 = vunpack.c.l.b16 %v4455
        %v4580 = vunpack.c.l.b16 %v4459
        %v4581 = vunpack.c.l.b16 %v4462
        %v4582 = vunpack.c.l.b16 %v4466
        %v4583 = vunpack.c.l.b16 %v4469
        %v4584 = vunpack.c.l.b16 %v4473
        %v4585 = vunpack.c.l.b16 %v4476
        %v4586 = vunpack.c.l.b16 %v4480
        %v4587 = vunpack.c.l.b16 %v4483
        %v4588 = vunpack.c.l.b16 %v4487
        %v4589 = vunpack.c.l.b16 %v4490
        %v4590 = vunpack.c.l.b16 %v4494
        %v4591 = vunpack.c.l.b16 %v4497
        %v4592 = vunpack.c.l.b16 %v4501
        %v4593 = vunpack.c.l.b16 %v4504
        %v4594 = vunpack.c.l.b16 %v4508
        %v4595 = vunpack.c.l.b16 %v4511
        %v4596 = vunpack.c.l.b16 %v4515
        %v4597 = vunpack.c.l.b16 %v4518
        %v4598 = vunpack.c.l.b16 %v4522
        %v4599 = vunpack.c.l.b16 %v4525
        %v4600 = vunpack.c.l.b16 %v4529
        %v4601 = vunpack.c.l.b16 %v4532
        %v4602 = vunpack.c.l.b16 %v4536
        %v4603 = vunpack.c.l.b16 %v4539
        %v4604 = vunpack.c.l.b16 %v4543
        %v4605 = vunpack.c.l.b16 %v4546
        %v4606 = vunpack.c.l.b16 %v4550
        %v4607 = vunpack.c.l.b16 %v4553
        %v4608 = vunpack.c.l.b16 %v4557
        %v4609 = vunpack.c.l.b16 %v4560
        %v4610 = vpack.c.b16 %v4579, %v4578
        %v4611 = vpack.c.b16 %v4581, %v4580
        %v4612 = vpack.c.b16 %v4583, %v4582
        %v4613 = vpack.c.b16 %v4585, %v4584
        %v4614 = vpack.c.b16 %v4587, %v4586
        %v4615 = vpack.c.b16 %v4589, %v4588
        %v4616 = vpack.c.b16 %v4591, %v4590
        %v4617 = vpack.c.b16 %v4593, %v4592
        %v4618 = vpack.c.b16 %v4595, %v4594
        %v4619 = vpack.c.b16 %v4597, %v4596
        %v4620 = vpack.c.b16 %v4599, %v4598
        %v4621 = vpack.c.b16 %v4601, %v4600
        %v4622 = vpack.c.b16 %v4603, %v4602
        %v4623 = vpack.c.b16 %v4605, %v4604
        %v4624 = vpack.c.b16 %v4607, %v4606
        %v4625 = vpack.c.b16 %v4609, %v4608
        %v4658 = vunpack.c.l.b16 %v4562
        %v4659 = vunpack.c.l.b16 %v4563
        %v4660 = vunpack.c.l.b16 %v4564
        %v4661 = vunpack.c.l.b16 %v4565
        %v4662 = vunpack.c.l.b16 %v4566
        %v4663 = vunpack.c.l.b16 %v4567
        %v4664 = vunpack.c.l.b16 %v4568
        %v4665 = vunpack.c.l.b16 %v4569
        %v4666 = vunpack.c.l.b16 %v4570
        %v4667 = vunpack.c.l.b16 %v4571
        %v4668 = vunpack.c.l.b16 %v4572
        %v4669 = vunpack.c.l.b16 %v4573
        %v4670 = vunpack.c.l.b16 %v4574
        %v4671 = vunpack.c.l.b16 %v4575
        %v4672 = vunpack.c.l.b16 %v4576
        %v4673 = vunpack.c.l.b16 %v4577
        %v4674 = vpack.c.b16 %v4659, %v4658
        %v4675 = vpack.c.b16 %v4661, %v4660
        %v4676 = vpack.c.b16 %v4663, %v4662
        %v4677 = vpack.c.b16 %v4665, %v4664
        %v4678 = vpack.c.b16 %v4667, %v4666
        %v4679 = vpack.c.b16 %v4669, %v4668
        %v4680 = vpack.c.b16 %v4671, %v4670
        %v4681 = vpack.c.b16 %v4673, %v4672
        %4690 = vmatprep.subr.bf16.mxu0 0
        %4691 = vmatpush1.bf16.msra.mxu0 %v4681
        %4692 = vmatprep.subr.bf16.mxu0 0
        %4693 = vmatpush1.bf16.msra.mxu0 %v4680
        %4694 = vmatprep.subr.bf16.mxu0 0
        %4695 = vmatpush1.bf16.msra.mxu0 %v4679
        %4696 = vmatprep.subr.bf16.mxu0 0
        %4697 = vmatpush1.bf16.msra.mxu0 %v4678
        %4698 = vmatprep.subr.bf16.mxu0 0
        %4699 = vmatpush1.bf16.msra.mxu0 %v4677
        %4700 = vmatprep.subr.bf16.mxu0 0
        %4701 = vmatpush1.bf16.msra.mxu0 %v4676
        %4702 = vmatprep.subr.bf16.mxu0 0
        %4703 = vmatpush1.bf16.msra.mxu0 %v4675
        %4704 = vmatprep.subr.bf16.mxu0 0
        %4705 = vmatpush1.bf16.msra.mxu0 %v4674
        %4706 = vmatprep.subr.bf16.mxu0 0
        %4707 = vmatpush2.bf16.msra.mxu0 0
        %4708 = vmatprep.subr.bf16.mxu0 0
        %4709 = vmatpush2.bf16.msra.mxu0 0
        %4710 = vmatprep.subr.bf16.mxu0 0
        %4711 = vmatpush2.bf16.msra.mxu0 0
        %4712 = vmatprep.subr.bf16.mxu0 0
        %4713 = vmatpush2.bf16.msra.mxu0 0
        %4714 = vmatprep.subr.bf16.mxu0 0
        %4715 = vmatpush2.bf16.msra.mxu0 0
        %4716 = vmatprep.subr.bf16.mxu0 0
        %4717 = vmatpush2.bf16.msra.mxu0 0
        %4718 = vmatprep.subr.bf16.mxu0 0
        %4719 = vmatpush2.bf16.msra.mxu0 0
        %4720 = vmatprep.subr.bf16.mxu0 0
        %4721 = vmatpush2.bf16.msra.mxu0 0
        %4722 = vmatprep.mubr.bf16.mxu0 0
        %4723 = vmatmul.mubr.bf16.gmra.mxu0 %v4610
        %v4724 = vpop.f32.mrf.mxu0
        %v4725 = vadd.f32 0.0, %v4724
        %v4726 = vpop.f32.mrf.mxu0
        %v4727 = vpop.f32.mrf.mxu0
        %v4728 = vadd.f32 0.0, %v4727
        %v4729 = vpop.f32.mrf.mxu0
        %4730 = vmatprep.mubr.bf16.mxu0 0
        %4731 = vmatmul.mubr.bf16.gmra.mxu0 %v4611
        %v4732 = vpop.f32.mrf.mxu0
        %v4733 = vadd.f32 0.0, %v4732
        %v4734 = vpop.f32.mrf.mxu0
        %v4735 = vpop.f32.mrf.mxu0
        %v4736 = vadd.f32 0.0, %v4735
        %v4737 = vpop.f32.mrf.mxu0
        %4738 = vmatprep.mubr.bf16.mxu0 0
        %4739 = vmatmul.mubr.bf16.gmra.mxu0 %v4612
        %v4740 = vpop.f32.mrf.mxu0
        %v4741 = vadd.f32 0.0, %v4740
        %v4742 = vpop.f32.mrf.mxu0
        %v4743 = vpop.f32.mrf.mxu0
        %v4744 = vadd.f32 0.0, %v4743
        %v4745 = vpop.f32.mrf.mxu0
        %4746 = vmatprep.mubr.bf16.mxu0 0
        %4747 = vmatmul.mubr.bf16.gmra.mxu0 %v4613
        %v4748 = vpop.f32.mrf.mxu0
        %v4749 = vadd.f32 0.0, %v4748
        %v4750 = vpop.f32.mrf.mxu0
        %v4751 = vpop.f32.mrf.mxu0
        %v4752 = vadd.f32 0.0, %v4751
        %v4753 = vpop.f32.mrf.mxu0
        %4754 = vmatprep.mubr.bf16.mxu0 0
        %4755 = vmatmul.mubr.bf16.gmra.mxu0 %v4614
        %v4756 = vpop.f32.mrf.mxu0
        %v4757 = vadd.f32 0.0, %v4756
        %v4758 = vpop.f32.mrf.mxu0
        %v4759 = vpop.f32.mrf.mxu0
        %v4760 = vadd.f32 0.0, %v4759
        %v4761 = vpop.f32.mrf.mxu0
        %4762 = vmatprep.mubr.bf16.mxu0 0
        %4763 = vmatmul.mubr.bf16.gmra.mxu0 %v4615
        %v4764 = vpop.f32.mrf.mxu0
        %v4765 = vadd.f32 0.0, %v4764
        %v4766 = vpop.f32.mrf.mxu0
        %v4767 = vpop.f32.mrf.mxu0
        %v4768 = vadd.f32 0.0, %v4767
        %v4769 = vpop.f32.mrf.mxu0
        %4770 = vmatprep.mubr.bf16.mxu0 0
        %4771 = vmatmul.mubr.bf16.gmra.mxu0 %v4616
        %v4772 = vpop.f32.mrf.mxu0
        %v4773 = vadd.f32 0.0, %v4772
        %v4774 = vpop.f32.mrf.mxu0
        %v4775 = vpop.f32.mrf.mxu0
        %v4776 = vadd.f32 0.0, %v4775
        %v4777 = vpop.f32.mrf.mxu0
        %4778 = vmatprep.mubr.bf16.mxu0 0
        %4779 = vmatmul.mubr.bf16.gmra.mxu0 %v4617
        %v4780 = vpop.f32.mrf.mxu0
        %v4781 = vadd.f32 0.0, %v4780
        %v4782 = vpop.f32.mrf.mxu0
        %v4783 = vpop.f32.mrf.mxu0
        %v4784 = vadd.f32 0.0, %v4783
        %v4785 = vpop.f32.mrf.mxu0
        %4786 = vmatprep.mubr.bf16.mxu0 0
        %4787 = vmatmul.mubr.bf16.gmra.mxu0 %v4618
        %v4788 = vpop.f32.mrf.mxu0
        %v4789 = vadd.f32 0.0, %v4788
        %v4790 = vpop.f32.mrf.mxu0
        %v4791 = vpop.f32.mrf.mxu0
        %v4792 = vadd.f32 0.0, %v4791
        %v4793 = vpop.f32.mrf.mxu0
        %4794 = vmatprep.mubr.bf16.mxu0 0
        %4795 = vmatmul.mubr.bf16.gmra.mxu0 %v4619
        %v4796 = vpop.f32.mrf.mxu0
        %v4797 = vadd.f32 0.0, %v4796
        %v4798 = vpop.f32.mrf.mxu0
        %v4799 = vpop.f32.mrf.mxu0
        %v4800 = vadd.f32 0.0, %v4799
        %v4801 = vpop.f32.mrf.mxu0
        %4802 = vmatprep.mubr.bf16.mxu0 0
        %4803 = vmatmul.mubr.bf16.gmra.mxu0 %v4620
        %v4804 = vpop.f32.mrf.mxu0
        %v4805 = vadd.f32 0.0, %v4804
        %v4806 = vpop.f32.mrf.mxu0
        %v4807 = vpop.f32.mrf.mxu0
        %v4808 = vadd.f32 0.0, %v4807
        %v4809 = vpop.f32.mrf.mxu0
        %4810 = vmatprep.mubr.bf16.mxu0 0
        %4811 = vmatmul.mubr.bf16.gmra.mxu0 %v4621
        %v4812 = vpop.f32.mrf.mxu0
        %v4813 = vadd.f32 0.0, %v4812
        %v4814 = vpop.f32.mrf.mxu0
        %v4815 = vpop.f32.mrf.mxu0
        %v4816 = vadd.f32 0.0, %v4815
        %v4817 = vpop.f32.mrf.mxu0
        %4818 = vmatprep.mubr.bf16.mxu0 0
        %4819 = vmatmul.mubr.bf16.gmra.mxu0 %v4622
        %v4820 = vpop.f32.mrf.mxu0
        %v4821 = vadd.f32 0.0, %v4820
        %v4822 = vpop.f32.mrf.mxu0
        %v4823 = vpop.f32.mrf.mxu0
        %v4824 = vadd.f32 0.0, %v4823
        %v4825 = vpop.f32.mrf.mxu0
        %4826 = vmatprep.mubr.bf16.mxu0 0
        %4827 = vmatmul.mubr.bf16.gmra.mxu0 %v4623
        %v4828 = vpop.f32.mrf.mxu0
        %v4829 = vadd.f32 0.0, %v4828
        %v4830 = vpop.f32.mrf.mxu0
        %v4831 = vpop.f32.mrf.mxu0
        %v4832 = vadd.f32 0.0, %v4831
        %v4833 = vpop.f32.mrf.mxu0
        %4834 = vmatprep.mubr.bf16.mxu0 0
        %4835 = vmatmul.mubr.bf16.gmra.mxu0 %v4624
        %v4836 = vpop.f32.mrf.mxu0
        %v4837 = vadd.f32 0.0, %v4836
        %v4838 = vpop.f32.mrf.mxu0
        %v4839 = vpop.f32.mrf.mxu0
        %v4840 = vadd.f32 0.0, %v4839
        %v4841 = vpop.f32.mrf.mxu0
        %4842 = vmatprep.mubr.bf16.mxu0 0
        %4843 = vmatmul.mubr.bf16.gmra.mxu0 %v4625
        %v4844 = vpop.f32.mrf.mxu0
        %v4845 = vadd.f32 0.0, %v4844
        %v4846 = vpop.f32.mrf.mxu0
        %v4847 = vpop.f32.mrf.mxu0
        %v4848 = vadd.f32 0.0, %v4847
        %v4849 = vpop.f32.mrf.mxu0
        %4850 = vdwg.mxu0
        %v4851 = vadd.f32 %v4401, %v4725
        %v4852 = vadd.f32 %v4402, %v4728
        %v4853 = vadd.f32 %v4403, %v4733
        %v4854 = vadd.f32 %v4404, %v4736
        %v4855 = vadd.f32 %v4405, %v4741
        %v4856 = vadd.f32 %v4406, %v4744
        %v4857 = vadd.f32 %v4407, %v4749
        %v4858 = vadd.f32 %v4408, %v4752
        %v4859 = vadd.f32 %v4409, %v4757
        %v4860 = vadd.f32 %v4410, %v4760
        %v4861 = vadd.f32 %v4411, %v4765
        %v4862 = vadd.f32 %v4412, %v4768
        %v4863 = vadd.f32 %v4413, %v4773
        %v4864 = vadd.f32 %v4414, %v4776
        %v4865 = vadd.f32 %v4415, %v4781
        %v4866 = vadd.f32 %v4416, %v4784
        %v4867 = vadd.f32 %v4417, %v4789
        %v4868 = vadd.f32 %v4418, %v4792
        %v4869 = vadd.f32 %v4419, %v4797
        %v4870 = vadd.f32 %v4420, %v4800
        %v4871 = vadd.f32 %v4421, %v4805
        %v4872 = vadd.f32 %v4422, %v4808
        %v4873 = vadd.f32 %v4423, %v4813
        %v4874 = vadd.f32 %v4424, %v4816
        %v4875 = vadd.f32 %v4425, %v4821
        %v4876 = vadd.f32 %v4426, %v4824
        %v4877 = vadd.f32 %v4427, %v4829
        %v4878 = vadd.f32 %v4428, %v4832
        %v4879 = vadd.f32 %v4429, %v4837
        %v4880 = vadd.f32 %v4430, %v4840
        %v4881 = vadd.f32 %v4431, %v4845
        %v4882 = vadd.f32 %v4432, %v4848
        %v4883 = vmax.f32 %v4851, 0.0
        %v4884 = vmax.f32 %v4852, 0.0
        %v4885 = vmax.f32 %v4853, 0.0
        %v4886 = vmax.f32 %v4854, 0.0
        %v4887 = vmax.f32 %v4855, 0.0
        %v4888 = vmax.f32 %v4856, 0.0
        %v4889 = vmax.f32 %v4857, 0.0
        %v4890 = vmax.f32 %v4858, 0.0
        %v4891 = vmax.f32 %v4859, 0.0
        %v4892 = vmax.f32 %v4860, 0.0
        %v4893 = vmax.f32 %v4861, 0.0
        %v4894 = vmax.f32 %v4862, 0.0
        %v4895 = vmax.f32 %v4863, 0.0
        %v4896 = vmax.f32 %v4864, 0.0
        %v4897 = vmax.f32 %v4865, 0.0
        %v4898 = vmax.f32 %v4866, 0.0
        %v4899 = vmax.f32 %v4867, 0.0
        %v4900 = vmax.f32 %v4868, 0.0
        %v4901 = vmax.f32 %v4869, 0.0
        %v4902 = vmax.f32 %v4870, 0.0
        %v4903 = vmax.f32 %v4871, 0.0
        %v4904 = vmax.f32 %v4872, 0.0
        %v4905 = vmax.f32 %v4873, 0.0
        %v4906 = vmax.f32 %v4874, 0.0
        %v4907 = vmax.f32 %v4875, 0.0
        %v4908 = vmax.f32 %v4876, 0.0
        %v4909 = vmax.f32 %v4877, 0.0
        %v4910 = vmax.f32 %v4878, 0.0
        %v4911 = vmax.f32 %v4879, 0.0
        %v4912 = vmax.f32 %v4880, 0.0
        %v4913 = vmax.f32 %v4881, 0.0
        %v4914 = vmax.f32 %v4882, 0.0
        %v4915 = vpack.c.bf16 %v4884, %v4883
        %v4916 = vpack.c.bf16 %v4886, %v4885
        %v4917 = vpack.c.bf16 %v4888, %v4887
        %v4918 = vpack.c.bf16 %v4890, %v4889
        %v4919 = vpack.c.bf16 %v4892, %v4891
        %v4920 = vpack.c.bf16 %v4894, %v4893
        %v4921 = vpack.c.bf16 %v4896, %v4895
        %v4922 = vpack.c.bf16 %v4898, %v4897
        %v4923 = vpack.c.bf16 %v4900, %v4899
        %v4924 = vpack.c.bf16 %v4902, %v4901
        %v4925 = vpack.c.bf16 %v4904, %v4903
        %v4926 = vpack.c.bf16 %v4906, %v4905
        %v4927 = vpack.c.bf16 %v4908, %v4907
        %v4928 = vpack.c.bf16 %v4910, %v4909
        %v4929 = vpack.c.bf16 %v4912, %v4911
        %v4930 = vpack.c.bf16 %v4914, %v4913
        %v4947 = vunpack.c.l.b16 %v4915
        %v4948 = vunpack.c.h.b16 %v4915
        %v4949 = vunpack.c.l.b16 %v4916
        %v4950 = vunpack.c.h.b16 %v4916
        %v4951 = vunpack.c.l.b16 %v4917
        %v4952 = vunpack.c.h.b16 %v4917
        %v4953 = vunpack.c.l.b16 %v4918
        %v4954 = vunpack.c.h.b16 %v4918
        %v4955 = vunpack.c.l.b16 %v4919
        %v4956 = vunpack.c.h.b16 %v4919
        %v4957 = vunpack.c.l.b16 %v4920
        %v4958 = vunpack.c.h.b16 %v4920
        %v4959 = vunpack.c.l.b16 %v4921
        %v4960 = vunpack.c.h.b16 %v4921
        %v4961 = vunpack.c.l.b16 %v4922
        %v4962 = vunpack.c.h.b16 %v4922
        %v4963 = vunpack.c.l.b16 %v4923
        %v4964 = vunpack.c.h.b16 %v4923
        %v4965 = vunpack.c.l.b16 %v4924
        %v4966 = vunpack.c.h.b16 %v4924
        %v4967 = vunpack.c.l.b16 %v4925
        %v4968 = vunpack.c.h.b16 %v4925
        %v4969 = vunpack.c.l.b16 %v4926
        %v4970 = vunpack.c.h.b16 %v4926
        %v4971 = vunpack.c.l.b16 %v4927
        %v4972 = vunpack.c.h.b16 %v4927
        %v4973 = vunpack.c.l.b16 %v4928
        %v4974 = vunpack.c.h.b16 %v4928
        %v4975 = vunpack.c.l.b16 %v4929
        %v4976 = vunpack.c.h.b16 %v4929
        %v4977 = vunpack.c.l.b16 %v4930
        %v4978 = vunpack.c.h.b16 %v4930
        %v4979 = vpack.c.b16 %v4947, %v4947
        %v4980 = vpack.c.b16 %v4948, %v4948
        %v4981 = vpack.c.b16 %v4949, %v4949
        %v4982 = vpack.c.b16 %v4950, %v4950
        %v4983 = vpack.c.b16 %v4951, %v4951
        %v4984 = vpack.c.b16 %v4952, %v4952
        %v4985 = vpack.c.b16 %v4953, %v4953
        %v4986 = vpack.c.b16 %v4954, %v4954
        %v4987 = vpack.c.b16 %v4955, %v4955
        %v4988 = vpack.c.b16 %v4956, %v4956
        %v4989 = vpack.c.b16 %v4957, %v4957
        %v4990 = vpack.c.b16 %v4958, %v4958
        %v4991 = vpack.c.b16 %v4959, %v4959
        %v4992 = vpack.c.b16 %v4960, %v4960
        %v4993 = vpack.c.b16 %v4961, %v4961
        %v4994 = vpack.c.b16 %v4962, %v4962
        %v4995 = vpack.c.b16 %v4963, %v4963
        %v4996 = vpack.c.b16 %v4964, %v4964
        %v4997 = vpack.c.b16 %v4965, %v4965
        %v4998 = vpack.c.b16 %v4966, %v4966
        %v4999 = vpack.c.b16 %v4967, %v4967
        %v5000 = vpack.c.b16 %v4968, %v4968
        %v5001 = vpack.c.b16 %v4969, %v4969
        %v5002 = vpack.c.b16 %v4970, %v4970
        %v5003 = vpack.c.b16 %v4971, %v4971
        %v5004 = vpack.c.b16 %v4972, %v4972
        %v5005 = vpack.c.b16 %v4973, %v4973
        %v5006 = vpack.c.b16 %v4974, %v4974
        %v5007 = vpack.c.b16 %v4975, %v4975
        %v5008 = vpack.c.b16 %v4976, %v4976
        %v5009 = vpack.c.b16 %v4977, %v4977
        %v5010 = vpack.c.b16 %v4978, %v4978
        %5043 = vst [vmem:[%s177] sm:$0xf] %v4979
        %5044 = vst [vmem:[%s177 + $0x4] sm:$0xf] %v4980
        %5045 = vst [vmem:[%s177 + $0x8] sm:$0xf] %v4981
        %5046 = vst [vmem:[%s177 + $0xc] sm:$0xf] %v4982
        %5047 = vst [vmem:[%s177 + $0x10] sm:$0xf] %v4983
        %5048 = vst [vmem:[%s177 + $0x14] sm:$0xf] %v4984
        %5049 = vst [vmem:[%s177 + $0x18] sm:$0xf] %v4985
        %5050 = vst [vmem:[%s177 + $0x1c] sm:$0xf] %v4986
        %5051 = vst [vmem:[%s177 + $0x20] sm:$0xf] %v4987
        %5052 = vst [vmem:[%s177 + $0x24] sm:$0xf] %v4988
        %5053 = vst [vmem:[%s177 + $0x28] sm:$0xf] %v4989
        %5054 = vst [vmem:[%s177 + $0x2c] sm:$0xf] %v4990
        %5055 = vst [vmem:[%s177 + $0x30] sm:$0xf] %v4991
        %5056 = vst [vmem:[%s177 + $0x34] sm:$0xf] %v4992
        %5057 = vst [vmem:[%s177 + $0x38] sm:$0xf] %v4993
        %5058 = vst [vmem:[%s177 + $0x3c] sm:$0xf] %v4994
        %5059 = vst [vmem:[%s177 + $0x40] sm:$0xf] %v4995
        %5060 = vst [vmem:[%s177 + $0x44] sm:$0xf] %v4996
        %5061 = vst [vmem:[%s177 + $0x48] sm:$0xf] %v4997
        %5062 = vst [vmem:[%s177 + $0x4c] sm:$0xf] %v4998
        %5063 = vst [vmem:[%s177 + $0x50] sm:$0xf] %v4999
        %5064 = vst [vmem:[%s177 + $0x54] sm:$0xf] %v5000
        %5065 = vst [vmem:[%s177 + $0x58] sm:$0xf] %v5001
        %5066 = vst [vmem:[%s177 + $0x5c] sm:$0xf] %v5002
        %5067 = vst [vmem:[%s177 + $0x60] sm:$0xf] %v5003
        %5068 = vst [vmem:[%s177 + $0x64] sm:$0xf] %v5004
        %5069 = vst [vmem:[%s177 + $0x68] sm:$0xf] %v5005
        %5070 = vst [vmem:[%s177 + $0x6c] sm:$0xf] %v5006
        %5071 = vst [vmem:[%s177 + $0x70] sm:$0xf] %v5007
        %5072 = vst [vmem:[%s177 + $0x74] sm:$0xf] %v5008
        %5073 = vst [vmem:[%s177 + $0x78] sm:$0xf] %v5009
        %5074 = vst [vmem:[%s177 + $0x7c] sm:$0xf] %v5010
        %s5075 = sand.u32 %s107, 1
        %s5076 = scalar_lea.sflag [#allocation3], %s5075
        %s5077 = sand.u32 %s107, 1
        %s5078 = smul.addr %s5077, 128
        %s5079 = scalar_lea.vmem [#allocation2], %s5078
        // Predicated region
        $region33: #{tpu_custom_call.1} parent=31 // pred_check
          %p5080 = pneg %p117
        $region34: #{tpu_custom_call.1} parent=31 // pred_check_branch
          %5082 = sbr.rel (%p5080) target = $region36
        $region35: #{tpu_custom_call.1} parent=31 // pred_region
          %s5083 = smul.u32 16, %s22
          %s5085 = ssub.s32 2048, 2048
          %5086 = vsyncadd %s5076, %s5085
          %s5087 = smul.addr %s5083, 2
          %s5088 = smul.addr %s21, 32
          %s5089 = sadd.s32 %s5087, %s5088
          %s5090 = smul.addr %s5089, 64
          %s5091 = scalar_lea.hbm %s3, %s5090
          %s5092 = sshll.u32 %s5079, 4
          %s5093 = int_to_ptr.vmem [resolvable:$true] %s5092
          %5098 = dma.vmem_to_hbm [thread:$0]  %s5093, 2048, %s5091, %s5076, 64, 64, 4
        $region36: #{tpu_custom_call.1} parent=31 // pred_fallthru
          _
      $region32: #{tpu_custom_call.1} parent=5 // pred_fallthru
        _
      %p5099 = scmp.le.s32.totalorder 2, %s12
      // Predicated region
      $region37: #{tpu_custom_call.1} parent=5 // pred_check
        %p5100 = pneg %p5099
      $region38: #{tpu_custom_call.1} parent=5 // pred_check_branch
        %5102 = sbr.rel (%p5100) target = $region40
      $region39: #{tpu_custom_call.1} parent=5 // pred_region
        %s5103 = ssub.s32 %s12, 2
        // Predicated region
        $region41: #{tpu_custom_call.1} parent=39 // pred_check
          %p5104 = pneg %p123
        $region42: #{tpu_custom_call.1} parent=39 // pred_check_branch
          %5106 = sbr.rel (%p5104) target = $region44
        $region43: #{tpu_custom_call.1} parent=39 // pred_region
          %s5107 = sand.u32 %s108, 1
          %s5108 = scalar_lea.sflag [#allocation3], %s5107
          %s5109 = sand.u32 %s108, 1
          %s5110 = smul.addr %s5109, 128
          %s5111 = scalar_lea.vmem [#allocation2], %s5110
          %5112 = dma.done %s5108, 2048
        $region44: #{tpu_custom_call.1} parent=39 // pred_fallthru
          _
      $region40: #{tpu_custom_call.1} parent=5 // pred_fallthru
        _
    $region6: #{tpu_custom_call.1} parent=1 // loop_footer
      %s16 = sadd.s32 1, %s12
    $region7: #{tpu_custom_call.1} parent=1 // loop_footer_branch
      %11 = sbr.rel target = $region3
    $region8: #{tpu_custom_call.1} parent=1 // loop_exit
      _
    %5113 = vsyncpa [#allocation3], 1
    %s5114 = scalar_lea.sflag [#allocation3], 1
    %5115 = vsyncpa %s5114, 1

</llo_original>
